<compile_context>
chip_gen: v7x
topology: tpu7x:2x2x1
jax: 0.10.0
libtpu: 0.0.40
codegen_flags: <defaults>
</compile_context>

<pallas_src>
import jax
import jax.numpy as jnp
import numpy as np
from jax.experimental import pallas as pl
from jax.experimental.pallas import tpu as pltpu

LANE = 128
SUBLANE = 8


def _round_up(x, m):
    return (x + m - 1) // m * m


def _vmem_capacity_bytes():
    try:
        return int(pltpu.get_tpu_info().vmem_capacity_bytes)
    except Exception:
        return 64 << 20           # conservative default: v7x per-TensorCore VMEM


# ------------------------------------------------------------------ kernel ---
def butd_kernel(txt_ref, obj_ref, mask_ref, padb_ref,
                wv_ref, bv_ref,        # Attention.v_proj   : [Vp,Hp] bf16, [1,Hp] f32
                wq_ref, bq_ref,        # Attention.q_proj   : [Qp,Hp] bf16, [1,Hp] f32
                wa_ref, ba_ref,        # Attention.linear   : [1,Hp] f32, scalar (SMEM)
                wqn_ref, bqn_ref,      # classifier.q_net   : [Qp,Hp] bf16, [1,Hp] f32
                wvn_ref, bvn_ref,      # classifier.v_net   : [Vp,Hp] bf16, [1,Hp] f32
                w1_ref, b1_ref,        # classifier.main[0] : [Hp,H2p] bf16, [1,H2p] f32
                w2_ref, b2_ref,        # classifier.main[3] : [H2p,ot] bf16, [1,ot] f32
                out_ref,               # [bt, ot] f32
                h_scratch):            # [bt, H2p] bf16 (lives across the j axis)
    j = pl.program_id(1)               # output-tile index (innermost grid axis)

    relu = lambda x: jnp.maximum(x, 0.0)
    bf16 = jnp.bfloat16

    # ---- trunk: attention + classifier up to the penultimate hidden layer ----
    # Depends only on the batch block (grid axis 0): compute once per batch
    # block (j == 0), cache in VMEM scratch while the epilogue streams w2.
    @pl.when(j == 0)
    def _trunk():
        txt = txt_ref[...].astype(bf16)          # [bt, Qp]   (tiny; f32 stream)
        obj = obj_ref[...]                       # [bt, Kp, Vp] bf16 (dominant)
        mask = mask_ref[...]                     # [bt, Kp]   f32
        bt, kp, vp = obj.shape

        # ---------------- Attention ----------------
        # Kp is a multiple of 16 (wrapper) so this reshape is a free relabel.
        obj_flat = obj.reshape(bt * kp, vp)
        v_proj = relu(jnp.dot(obj_flat, wv_ref[...],
                              preferred_element_type=jnp.float32) + bv_ref[...])
        q_proj = relu(jnp.dot(txt, wq_ref[...],
                              preferred_element_type=jnp.float32) + bq_ref[...])
        # Fold the glimpse Linear(hid -> 1) weight into q_proj.
        q_scaled = q_proj * wa_ref[...]                          # [bt, Hp] f32

        hp = v_proj.shape[-1]
        v_proj3 = v_proj.reshape(bt, kp, hp)                     # f32, aligned
        # logits: VPU multiply + lane reduce (an N=1 batched matvec wastes the
        # 128/256-wide MXU; the trunk is already MXU-bound on obj @ wv).
        logits = jnp.sum(v_proj3 * q_scaled[:, None, :],
                         axis=-1, keepdims=True)                 # [bt, Kp, 1]
        logits = logits + ba_ref[0, 0]
        logits = logits * mask[:, :, None]   # mask-by-multiply (as in reference)
        logits = logits + padb_ref[...]      # padded objects (k >= K) -> -1e30

        # softmax over the object axis (dim=1)
        m = jnp.max(logits, axis=1, keepdims=True)
        e = jnp.exp(logits - m)
        denom = jnp.sum(e, axis=1, keepdims=True)
        att = e * pl.reciprocal(denom, approx=True)              # [bt, Kp, 1]

        # attended object feature: sum_k att[b,k] * obj[b,k,:]   (batched MXU)
        v_att = jnp.einsum('bkj,bkv->bjv', att.astype(bf16), obj,
                           preferred_element_type=jnp.float32)   # [bt, 1, Vp]
        v_att = v_att.reshape(bt, vp)

        # ---------------- SimpleClassifier (trunk) ----------------
        q_rep = relu(jnp.dot(txt, wqn_ref[...],
                             preferred_element_type=jnp.float32) + bqn_ref[...])
        v_rep = relu(jnp.dot(v_att.astype(bf16), wvn_ref[...],
                             preferred_element_type=jnp.float32) + bvn_ref[...])
        jrep = (q_rep * v_rep).astype(bf16)                      # [bt, Hp]
        h = relu(jnp.dot(jrep, w1_ref[...],
                         preferred_element_type=jnp.float32) + b1_ref[...])
        h_scratch[...] = h.astype(h_scratch.dtype)               # [bt, H2p]

    # ---- epilogue: final Linear (w2 is VMEM-resident when it fits, else
    # streamed along the output axis with deep buffering) ----------------------
    out_ref[...] = (jnp.dot(h_scratch[...], w2_ref[...],
                            preferred_element_type=jnp.float32)
                    + b2_ref[...]).astype(out_ref.dtype)


# ----------------------------------------------------------------- wrapper ---
def butd_qa_head(txt, obj, mask, params, *, batch_block=128, out_block=2048,
                 weight_dtype=jnp.bfloat16, stream_w2=None):
    """Fused BUTD QA head. Returns [B, out_dim] float32 logits.

    stream_w2: None = auto (resident w2 if it fits the VMEM budget),
               True/False = force streaming / residency.
    """
    B, K, V = obj.shape
    Q = txt.shape[1]
    H = params["wv"].shape[1]
    H2 = params["w1"].shape[1]
    O = params["w2"].shape[1]
    f32, bf16 = jnp.float32, jnp.bfloat16
    wd = weight_dtype
    witm = jnp.dtype(wd).itemsize

    # lane/sublane padded sizes (zeros are exact: relu(0)=0, padded att -> 0)
    Qp, Vp, Hp, H2p, Op = (_round_up(d, LANE) for d in (Q, V, H, H2, O))
    Kp = _round_up(K, 16)   # 16 -> free (bt,Kp,Vp)->(bt*Kp,Vp) reshape for bf16

    # ---- per-generation VMEM budget (~48 MiB on v7x, ~96 MiB on v5e/v6e) -----
    budget = (3 * _vmem_capacity_bytes()) // 4

    def vmem_estimate(bt_c, ot_c, w2_res):
        # const-index weights are requested single-buffered (pl.Buffered(1))
        wconst = (2 * Vp * Hp + 2 * Qp * Hp + Hp * H2p) * witm \
                 + (5 * Hp + H2p + Kp) * 4 + 8
        vmem = wconst
        w2_bytes = H2p * ot_c * witm + ot_c * 4
        vmem += w2_bytes if w2_res else max(2, min(4, Op // ot_c)) * w2_bytes
        # double-buffered per-batch streams: txt f32, obj bf16, mask f32, out f32
        vmem += 2 * bt_c * (Qp * 4 + Kp * Vp * 2 + Kp * 4 + ot_c * 4)
        # trunk temporaries (f32): v_proj and its product with q_scaled dominate
        vmem += bt_c * (2 * Kp * Hp + 6 * Hp + Vp + 2 * H2p) * 4
        vmem += bt_c * H2p * 2                                 # h_scratch (bf16)
        return vmem

    # ---- output tile: largest 128-multiple divisor of Op that is <= out_block
    nl = Op // LANE
    ot_stream = LANE * max(d for d in range(1, nl + 1)
                           if nl % d == 0 and d * LANE <= max(LANE, out_block))

    # ---- batch-block candidates (keep nb >= 2 when possible: v7x megacore) ---
    bt_hi = max(SUBLANE, _round_up(min(batch_block, B), SUBLANE))
    if B > SUBLANE:
        bt_hi = min(bt_hi, _round_up((B + 1) // 2, SUBLANE))
    bt_candidates = []
    b = bt_hi
    while True:
        bt_candidates.append(b)
        if b <= SUBLANE:
            break
        b = max(SUBLANE, _round_up(b // 2, SUBLANE))

    # ---- choose (bt, ot, w2 residency): prefer resident w2 and the largest bt
    if stream_w2 is True:
        options = [(False, ot_stream)]
    elif stream_w2 is False:
        options = [(True, Op)]
    else:
        options = [(True, Op), (False, ot_stream)]
    chosen = None
    for w2_res, ot_c in options:
        for bt_c in bt_candidates:
            if vmem_estimate(bt_c, ot_c, w2_res) <= budget:
                chosen = (bt_c, ot_c, w2_res)
                break
        if chosen is not None:
            break
    if chosen is None:           # pathological sizes: smallest block, streamed w2
        chosen = (SUBLANE, options[-1][1], options[-1][0])
    bt, ot, w2_resident = chosen

    no = Op // ot
    Bp = _round_up(B, bt)
    nb = Bp // bt

    # ---- pad / cast inputs ----------------------------------------------------
    txt_p = jnp.pad(txt.astype(f32), ((0, Bp - B), (0, Qp - Q)))
    obj_p = jnp.pad(obj.astype(bf16), ((0, Bp - B), (0, Kp - K), (0, Vp - V)))
    mask_p = jnp.pad(mask.astype(f32), ((0, Bp - B), (0, Kp - K)))
    # additive pad bias: forces logits of padded (nonexistent) objects to -1e30
    # AFTER the reference mask-multiply, so the softmax denominator matches the
    # unpadded module exactly.
    padb = jnp.pad(jnp.zeros((K, 1), f32), ((0, Kp - K), (0, 0)),
                   constant_values=-1e30)

    def padw(w, r, c):
        return jnp.pad(w, ((0, r - w.shape[0]), (0, c - w.shape[1])))

    wv = padw(params["wv"], Vp, Hp).astype(wd)
    wq = padw(params["wq"], Qp, Hp).astype(wd)
    wqn = padw(params["wqn"], Qp, Hp).astype(wd)
    wvn = padw(params["wvn"], Vp, Hp).astype(wd)
    w1 = padw(params["w1"], Hp, H2p).astype(wd)
    w2 = padw(params["w2"], H2p, Op).astype(wd)
    bv = padw(params["bv"], 1, Hp).astype(f32)
    bq = padw(params["bq"], 1, Hp).astype(f32)
    bqn = padw(params["bqn"], 1, Hp).astype(f32)
    bvn = padw(params["bvn"], 1, Hp).astype(f32)
    b1 = padw(params["b1"], 1, H2p).astype(f32)
    b2 = padw(params["b2"], 1, Op).astype(f32)
    wa = padw(params["wa"], 1, Hp).astype(f32)   # consumed on the VPU; keep f32
    ba = params["ba"].astype(f32)                # scalar bias -> SMEM

    operands = (txt_p, obj_p, mask_p, padb, wv, bv, wq, bq, wa, ba,
                wqn, bqn, wvn, bvn, w1, b1, w2, b2)

    # ---- advisory cost estimate ----------------------------------------------
    flops = 2 * Bp * (Kp * Vp * Hp + Qp * Hp + Kp * Hp + Kp * Vp
                      + Qp * Hp + Vp * Hp + Hp * H2p + H2p * Op)
    cost = pl.CostEstimate(
        flops=int(flops),
        transcendentals=int(Bp * Kp),
        bytes_accessed=int(sum(int(a.size) * a.dtype.itemsize for a in operands)
                           + Bp * Op * 4))

    def build(use_pipeline_mode):
        def const(shape):
            kw = {}
            if use_pipeline_mode:
                # constant block index -> fetched once; a single pipeline buffer
                # halves the resident-weight VMEM footprint (matters on v7x).
                kw["pipeline_mode"] = pl.Buffered(1)
            return pl.BlockSpec(shape, lambda i, j, _nd=len(shape): (0,) * _nd, **kw)

        if w2_resident:
            w2_spec, b2_spec = const((H2p, ot)), const((1, ot))
        else:
            kw = {}
            if use_pipeline_mode:
                # issue several output-tile weight DMAs during the long j == 0
                # trunk step so the epilogue is never DMA-exposed.
                kw["pipeline_mode"] = pl.Buffered(max(2, min(4, no)))
            w2_spec = pl.BlockSpec((H2p, ot), lambda i, j: (0, j), **kw)
            b2_spec = pl.BlockSpec((1, ot), lambda i, j: (0, j), **kw)

        in_specs = [
            pl.BlockSpec((bt, Qp), lambda i, j: (i, 0)),         # txt (f32)
            pl.BlockSpec((bt, Kp, Vp), lambda i, j: (i, 0, 0)),  # obj (bf16)
            pl.BlockSpec((bt, Kp), lambda i, j: (i, 0)),         # mask
            const((Kp, 1)),                                      # pad bias
            const((Vp, Hp)), const((1, Hp)),                     # wv, bv
            const((Qp, Hp)), const((1, Hp)),                     # wq, bq
            const((1, Hp)),                                      # wa
            pl.BlockSpec(memory_space=pltpu.MemorySpace.SMEM),   # ba (scalar)
            const((Qp, Hp)), const((1, Hp)),                     # wqn, bqn
            const((Vp, Hp)), const((1, Hp)),                     # wvn, bvn
            const((Hp, H2p)), const((1, H2p)),                   # w1, b1
            w2_spec, b2_spec,                                    # w2, b2
        ]
        return pl.pallas_call(
            butd_kernel,
            out_shape=jax.ShapeDtypeStruct((Bp, Op), jnp.float32),
            grid=(nb, no),
            in_specs=in_specs,
            out_specs=pl.BlockSpec((bt, ot), lambda i, j: (i, j)),
            scratch_shapes=[pltpu.VMEM((bt, H2p), jnp.bfloat16)],
            compiler_params=pltpu.CompilerParams(
                dimension_semantics=("parallel", "arbitrary"),
                vmem_limit_bytes=int(budget)),
            cost_estimate=cost,
        )

    try:
        out_p = build(True)(*operands)
    except Exception:
        # pipeline_mode / pl.Buffered is a newer knob; fall back to default
        # double-buffering (identical semantics, slightly larger VMEM footprint).
        out_p = build(False)(*operands)

    return out_p[:B, :O]


# -------------------------------------------------------------- parameters ---
def _wn_fold(v, g):
    """weight_norm(dim=None): W = g * V / ||V||_F  (g scalar)."""
    return g * v / jnp.sqrt(jnp.sum(v * v))


def init_params(key, v_dim, q_dim, hid_dim, out_dim):
    ks = jax.random.split(key, 16)

    def lin(k, fan_in, fan_out):
        s = 1.0 / np.sqrt(fan_in)
        kw, kb = jax.random.split(k)
        w = jax.random.uniform(kw, (fan_in, fan_out), jnp.float32, -s, s)
        b = jax.random.uniform(kb, (1, fan_out), jnp.float32, -s, s)
        return w, b

    p = {}
    # Attention (weight-normed layers)
    wv, p["bv"] = lin(ks[0], v_dim, hid_dim)
    p["wv"] = _wn_fold(wv, jnp.float32(1.1))
    wq, p["bq"] = lin(ks[1], q_dim, hid_dim)
    p["wq"] = _wn_fold(wq, jnp.float32(0.9))
    wa, ba = lin(ks[2], hid_dim, 1)                      # Linear(hid -> glimpses=1)
    p["wa"] = _wn_fold(wa, jnp.float32(1.3)).reshape(1, hid_dim)
    p["ba"] = ba.reshape(1, 1)
    # Classifier
    wqn, p["bqn"] = lin(ks[3], q_dim, hid_dim)
    p["wqn"] = _wn_fold(wqn, jnp.float32(1.2))
    wvn, p["bvn"] = lin(ks[4], v_dim, hid_dim)
    p["wvn"] = _wn_fold(wvn, jnp.float32(0.8))
    p["w1"], p["b1"] = lin(ks[5], hid_dim, 2 * hid_dim)  # plain Linear (no weight norm)
    p["w2"], p["b2"] = lin(ks[6], 2 * hid_dim, out_dim)
    return p


# ------------------------------------------------------------ pure-JAX ref ---
def reference(txt, obj, mask, p):
    relu = lambda x: jnp.maximum(x, 0.0)
    v_proj = relu(obj @ p["wv"] + p["bv"][0])
    q_proj = relu(txt @ p["wq"] + p["bq"][0])
    logits = jnp.sum(v_proj * q_proj[:, None, :] * p["wa"], axis=-1) + p["ba"][0, 0]
    logits = logits * mask
    att = jax.nn.softmax(logits, axis=1)
    v_att = jnp.sum(att[:, :, None] * obj, axis=1)
    q_rep = relu(txt @ p["wqn"] + p["bqn"][0])
    v_rep = relu(v_att @ p["wvn"] + p["bvn"][0])
    h = relu((q_rep * v_rep) @ p["w1"] + p["b1"][0])
    return h @ p["w2"] + p["b2"][0]


# -------------------------------------------------------------------- main ---
if __name__ == "__main__":
    B, K = 12, 8            # batch (not a block multiple), num_objs (not a 16-multiple)
    V_DIM, Q_DIM = 32, 24   # obj_dim, txt_dim
    HID, OUT = 32, 200      # OUT > 128 so the streamed-w2 path has >1 output tile

    key = jax.random.PRNGKey(0)
    k_txt, k_obj, k_msk, k_par = jax.random.split(key, 4)

    txt_embed = jax.random.normal(k_txt, (B, Q_DIM), jnp.float32)
    obj_embed = jax.random.normal(k_obj, (B, K, V_DIM), jnp.float32)
    obj_mask = (jax.random.uniform(k_msk, (B, K)) > 0.3).astype(jnp.float32)

    params = init_params(k_par, V_DIM, Q_DIM, HID, OUT)
    ref = reference(txt_embed, obj_embed, obj_mask, params)

    # Path 1: VMEM-resident w2 (single output tile), multi-step "parallel" batch grid.
    out = butd_qa_head(txt_embed, obj_embed, obj_mask, params, batch_block=8)
    out = jax.block_until_ready(out)
    # bf16 weights / bf16 MXU operands with f32 accumulation vs. pure-f32 reference
    np.testing.assert_allclose(np.asarray(out), np.asarray(ref), rtol=2e-2, atol=2e-2)

    # Path 2: streamed w2 (multiple output tiles reusing the VMEM-cached trunk).
    out2 = butd_qa_head(txt_embed, obj_embed, obj_mask, params, batch_block=8,
                        out_block=128, stream_w2=True)
    out2 = jax.block_until_ready(out2)
    np.testing.assert_allclose(np.asarray(out2), np.asarray(ref), rtol=2e-2, atol=2e-2)

    print("KERNEL_OK")
</pallas_src>

<mosaic_0001>
module attributes {stable_mosaic.version = 11 : i64} {
  func.func @butd_kernel(%arg0: i32, %arg1: i32, %arg2: memref<8x128xf32, #tpu.memory_space<vmem>>, %arg3: memref<8x16x128xbf16, #tpu.memory_space<vmem>>, %arg4: memref<8x16xf32, #tpu.memory_space<vmem>>, %arg5: memref<16x1xf32, #tpu.memory_space<vmem>>, %arg6: memref<128x128xbf16, #tpu.memory_space<vmem>>, %arg7: memref<1x128xf32, #tpu.memory_space<vmem>>, %arg8: memref<128x128xbf16, #tpu.memory_space<vmem>>, %arg9: memref<1x128xf32, #tpu.memory_space<vmem>>, %arg10: memref<1x128xf32, #tpu.memory_space<vmem>>, %arg11: memref<1x1xf32, #tpu.memory_space<smem>>, %arg12: memref<128x128xbf16, #tpu.memory_space<vmem>>, %arg13: memref<1x128xf32, #tpu.memory_space<vmem>>, %arg14: memref<128x128xbf16, #tpu.memory_space<vmem>>, %arg15: memref<1x128xf32, #tpu.memory_space<vmem>>, %arg16: memref<128x128xbf16, #tpu.memory_space<vmem>>, %arg17: memref<1x128xf32, #tpu.memory_space<vmem>>, %arg18: memref<128x256xbf16, #tpu.memory_space<vmem>>, %arg19: memref<1x256xf32, #tpu.memory_space<vmem>>, %arg20: memref<8x256xf32, #tpu.memory_space<vmem>>, %arg21: memref<8x128xbf16, #tpu.memory_space<vmem>>) attributes {dimension_semantics = [#tpu.dimension_semantics<parallel>, #tpu.dimension_semantics<arbitrary>], iteration_bounds = array<i64: 2, 1>, scalar_prefetch = 0 : i64, scratch_operands = 1 : i64, tpu.core_type = #tpu.core_type<tc>, window_params = [{transform_indices = @transform_0, window_bounds = array<i64: 8, 128>}, {transform_indices = @transform_1, window_bounds = array<i64: 8, 16, 128>}, {transform_indices = @transform_2, window_bounds = array<i64: 8, 16>}, {pipeline_mode = #tpu.pipeline_mode<synchronous>, transform_indices = @transform_3, window_bounds = array<i64: 16, 1>}, {pipeline_mode = #tpu.pipeline_mode<synchronous>, transform_indices = @transform_4, window_bounds = array<i64: 128, 128>}, {pipeline_mode = #tpu.pipeline_mode<synchronous>, transform_indices = @transform_5, window_bounds = array<i64: 1, 128>}, {pipeline_mode = #tpu.pipeline_mode<synchronous>, transform_indices = @transform_6, window_bounds = array<i64: 128, 128>}, {pipeline_mode = #tpu.pipeline_mode<synchronous>, transform_indices = @transform_7, window_bounds = array<i64: 1, 128>}, {pipeline_mode = #tpu.pipeline_mode<synchronous>, transform_indices = @transform_8, window_bounds = array<i64: 1, 128>}, {transform_indices = @transform_9, window_bounds = array<i64: 1, 1>}, {pipeline_mode = #tpu.pipeline_mode<synchronous>, transform_indices = @transform_10, window_bounds = array<i64: 128, 128>}, {pipeline_mode = #tpu.pipeline_mode<synchronous>, transform_indices = @transform_11, window_bounds = array<i64: 1, 128>}, {pipeline_mode = #tpu.pipeline_mode<synchronous>, transform_indices = @transform_12, window_bounds = array<i64: 128, 128>}, {pipeline_mode = #tpu.pipeline_mode<synchronous>, transform_indices = @transform_13, window_bounds = array<i64: 1, 128>}, {pipeline_mode = #tpu.pipeline_mode<synchronous>, transform_indices = @transform_14, window_bounds = array<i64: 128, 128>}, {pipeline_mode = #tpu.pipeline_mode<synchronous>, transform_indices = @transform_15, window_bounds = array<i64: 1, 128>}, {pipeline_mode = #tpu.pipeline_mode<synchronous>, transform_indices = @transform_16, window_bounds = array<i64: 128, 256>}, {pipeline_mode = #tpu.pipeline_mode<synchronous>, transform_indices = @transform_17, window_bounds = array<i64: 1, 256>}, {transform_indices = @transform_18, window_bounds = array<i64: 8, 256>}]} {
    %c0_i32 = arith.constant 0 : i32
    %0 = arith.cmpi eq, %arg1, %c0_i32 : i32
    %1 = arith.extui %0 : i1 to i32
    %c0_i32_0 = arith.constant 0 : i32
    %2 = arith.cmpi ne, %1, %c0_i32_0 : i32
    scf.if %2 {
      %c0_8 = arith.constant 0 : index
      %c0_9 = arith.constant 0 : index
      %10 = vector.load %arg2[%c0_8, %c0_9] : memref<8x128xf32, #tpu.memory_space<vmem>>, vector<8x128xf32>
      %11 = arith.truncf %10 : vector<8x128xf32> to vector<8x128xbf16>
      %c0_10 = arith.constant 0 : index
      %c0_11 = arith.constant 0 : index
      %c0_12 = arith.constant 0 : index
      %12 = vector.load %arg3[%c0_10, %c0_11, %c0_12] : memref<8x16x128xbf16, #tpu.memory_space<vmem>>, vector<8x16x128xbf16>
      %c0_13 = arith.constant 0 : index
      %c0_14 = arith.constant 0 : index
      %13 = vector.load %arg4[%c0_13, %c0_14] : memref<8x16xf32, #tpu.memory_space<vmem>>, vector<8x16xf32>
      %14 = vector.shape_cast %12 : vector<8x16x128xbf16> to vector<128x128xbf16>
      %c0_15 = arith.constant 0 : index
      %c0_16 = arith.constant 0 : index
      %15 = vector.load %arg6[%c0_15, %c0_16] : memref<128x128xbf16, #tpu.memory_space<vmem>>, vector<128x128xbf16>
      %cst_17 = arith.constant dense<0.000000e+00> : vector<128x128xf32>
      %16 = tpu.matmul %14, %15, %cst_17 {dimension_numbers = #tpu.dot_dimension_numbers<[1], [0], [0], [1], [0, 0, 1, 1], [], []>} : vector<128x128xbf16>, vector<128x128xbf16>, vector<128x128xf32> -> vector<128x128xf32>
      %c0_18 = arith.constant 0 : index
      %c0_19 = arith.constant 0 : index
      %17 = vector.load %arg7[%c0_18, %c0_19] : memref<1x128xf32, #tpu.memory_space<vmem>>, vector<1x128xf32>
      %18 = vector.broadcast %17 : vector<1x128xf32> to vector<128x128xf32>
      %19 = arith.addf %16, %18 : vector<128x128xf32>
      %cst_20 = arith.constant 0.000000e+00 : f32
      %20 = vector.broadcast %cst_20 : f32 to vector<128x128xf32>
      %21 = arith.maximumf %19, %20 : vector<128x128xf32>
      %c0_21 = arith.constant 0 : index
      %c0_22 = arith.constant 0 : index
      %22 = vector.load %arg8[%c0_21, %c0_22] : memref<128x128xbf16, #tpu.memory_space<vmem>>, vector<128x128xbf16>
      %cst_23 = arith.constant dense<0.000000e+00> : vector<8x128xf32>
      %23 = tpu.matmul %11, %22, %cst_23 {dimension_numbers = #tpu.dot_dimension_numbers<[1], [0], [0], [1], [0, 0, 1, 1], [], []>} : vector<8x128xbf16>, vector<128x128xbf16>, vector<8x128xf32> -> vector<8x128xf32>
      %c0_24 = arith.constant 0 : index
      %c0_25 = arith.constant 0 : index
      %24 = vector.load %arg9[%c0_24, %c0_25] : memref<1x128xf32, #tpu.memory_space<vmem>>, vector<1x128xf32>
      %25 = vector.broadcast %24 : vector<1x128xf32> to vector<8x128xf32>
      %26 = arith.addf %23, %25 : vector<8x128xf32>
      %cst_26 = arith.constant 0.000000e+00 : f32
      %27 = vector.broadcast %cst_26 : f32 to vector<8x128xf32>
      %28 = arith.maximumf %26, %27 : vector<8x128xf32>
      %c0_27 = arith.constant 0 : index
      %c0_28 = arith.constant 0 : index
      %29 = vector.load %arg10[%c0_27, %c0_28] : memref<1x128xf32, #tpu.memory_space<vmem>>, vector<1x128xf32>
      %30 = vector.broadcast %29 : vector<1x128xf32> to vector<8x128xf32>
      %31 = arith.mulf %28, %30 : vector<8x128xf32>
      %32 = vector.shape_cast %21 : vector<128x128xf32> to vector<8x16x128xf32>
      %33 = vector.shape_cast %31 : vector<8x128xf32> to vector<8x1x128xf32>
      %34 = vector.broadcast %33 : vector<8x1x128xf32> to vector<8x16x128xf32>
      %35 = arith.mulf %32, %34 : vector<8x16x128xf32>
      %cst_29 = arith.constant dense<0.000000e+00> : vector<8x16xf32>
      %36 = vector.multi_reduction <add>, %35, %cst_29 [2] : vector<8x16x128xf32> to vector<8x16xf32>
      %37 = vector.shape_cast %36 : vector<8x16xf32> to vector<8x16x1xf32>
      %c0_30 = arith.constant 0 : index
      %c0_31 = arith.constant 0 : index
      %38 = memref.load %arg11[%c0_30, %c0_31] : memref<1x1xf32, #tpu.memory_space<smem>>
      %39 = vector.broadcast %38 : f32 to vector<8x16x1xf32>
      %40 = arith.addf %37, %39 : vector<8x16x1xf32>
      %41 = vector.shape_cast %13 : vector<8x16xf32> to vector<8x16x1xf32>
      %42 = arith.mulf %40, %41 : vector<8x16x1xf32>
      %c0_32 = arith.constant 0 : index
      %c0_33 = arith.constant 0 : index
      %43 = vector.load %arg5[%c0_32, %c0_33] : memref<16x1xf32, #tpu.memory_space<vmem>>, vector<16x1xf32>
      %44 = vector.shape_cast %43 : vector<16x1xf32> to vector<1x16x1xf32>
      %45 = vector.broadcast %44 : vector<1x16x1xf32> to vector<8x16x1xf32>
      %46 = arith.addf %42, %45 : vector<8x16x1xf32>
      %cst_34 = arith.constant dense<0xFF800000> : vector<8x1xf32>
      %47 = vector.multi_reduction <maximumf>, %46, %cst_34 [1] : vector<8x16x1xf32> to vector<8x1xf32>
      %48 = vector.shape_cast %47 : vector<8x1xf32> to vector<8x1x1xf32>
      %49 = vector.broadcast %48 : vector<8x1x1xf32> to vector<8x16x1xf32>
      %50 = arith.subf %46, %49 : vector<8x16x1xf32>
      %51 = math.exp %50 : vector<8x16x1xf32>
      %cst_35 = arith.constant dense<0.000000e+00> : vector<8x1xf32>
      %52 = vector.multi_reduction <add>, %51, %cst_35 [1] : vector<8x16x1xf32> to vector<8x1xf32>
      %53 = vector.shape_cast %52 : vector<8x1xf32> to vector<8x1x1xf32>
      %54 = tpu.reciprocal %53 {approx = true} : vector<8x1x1xf32> -> vector<8x1x1xf32>
      %55 = vector.broadcast %54 : vector<8x1x1xf32> to vector<8x16x1xf32>
      %56 = arith.mulf %51, %55 : vector<8x16x1xf32>
      %57 = arith.truncf %56 : vector<8x16x1xf32> to vector<8x16x1xbf16>
      "tpu.trace_start"() <{level = 10 : i32, message = "bkj,bkv->bjv"}> : () -> ()
      %cst_36 = arith.constant dense<0.000000e+00> : vector<8x1x128xf32>
      %58 = tpu.matmul %57, %12, %cst_36 {dimension_numbers = #tpu.dot_dimension_numbers<[1], [1], [2], [2], [0, 0, 0, 2, 1, 2], [0], [0]>} : vector<8x16x1xbf16>, vector<8x16x128xbf16>, vector<8x1x128xf32> -> vector<8x1x128xf32>
      "tpu.trace_stop"() : () -> ()
      %59 = vector.shape_cast %58 : vector<8x1x128xf32> to vector<8x128xf32>
      %c0_37 = arith.constant 0 : index
      %c0_38 = arith.constant 0 : index
      %60 = vector.load %arg12[%c0_37, %c0_38] : memref<128x128xbf16, #tpu.memory_space<vmem>>, vector<128x128xbf16>
      %cst_39 = arith.constant dense<0.000000e+00> : vector<8x128xf32>
      %61 = tpu.matmul %11, %60, %cst_39 {dimension_numbers = #tpu.dot_dimension_numbers<[1], [0], [0], [1], [0, 0, 1, 1], [], []>} : vector<8x128xbf16>, vector<128x128xbf16>, vector<8x128xf32> -> vector<8x128xf32>
      %c0_40 = arith.constant 0 : index
      %c0_41 = arith.constant 0 : index
      %62 = vector.load %arg13[%c0_40, %c0_41] : memref<1x128xf32, #tpu.memory_space<vmem>>, vector<1x128xf32>
      %63 = vector.broadcast %62 : vector<1x128xf32> to vector<8x128xf32>
      %64 = arith.addf %61, %63 : vector<8x128xf32>
      %cst_42 = arith.constant 0.000000e+00 : f32
      %65 = vector.broadcast %cst_42 : f32 to vector<8x128xf32>
      %66 = arith.maximumf %64, %65 : vector<8x128xf32>
      %67 = arith.truncf %59 : vector<8x128xf32> to vector<8x128xbf16>
      %c0_43 = arith.constant 0 : index
      %c0_44 = arith.constant 0 : index
      %68 = vector.load %arg14[%c0_43, %c0_44] : memref<128x128xbf16, #tpu.memory_space<vmem>>, vector<128x128xbf16>
      %cst_45 = arith.constant dense<0.000000e+00> : vector<8x128xf32>
      %69 = tpu.matmul %67, %68, %cst_45 {dimension_numbers = #tpu.dot_dimension_numbers<[1], [0], [0], [1], [0, 0, 1, 1], [], []>} : vector<8x128xbf16>, vector<128x128xbf16>, vector<8x128xf32> -> vector<8x128xf32>
      %c0_46 = arith.constant 0 : index
      %c0_47 = arith.constant 0 : index
      %70 = vector.load %arg15[%c0_46, %c0_47] : memref<1x128xf32, #tpu.memory_space<vmem>>, vector<1x128xf32>
      %71 = vector.broadcast %70 : vector<1x128xf32> to vector<8x128xf32>
      %72 = arith.addf %69, %71 : vector<8x128xf32>
      %cst_48 = arith.constant 0.000000e+00 : f32
      %73 = vector.broadcast %cst_48 : f32 to vector<8x128xf32>
      %74 = arith.maximumf %72, %73 : vector<8x128xf32>
      %75 = arith.mulf %66, %74 : vector<8x128xf32>
      %76 = arith.truncf %75 : vector<8x128xf32> to vector<8x128xbf16>
      %c0_49 = arith.constant 0 : index
      %c0_50 = arith.constant 0 : index
      %77 = vector.load %arg16[%c0_49, %c0_50] : memref<128x128xbf16, #tpu.memory_space<vmem>>, vector<128x128xbf16>
      %cst_51 = arith.constant dense<0.000000e+00> : vector<8x128xf32>
      %78 = tpu.matmul %76, %77, %cst_51 {dimension_numbers = #tpu.dot_dimension_numbers<[1], [0], [0], [1], [0, 0, 1, 1], [], []>} : vector<8x128xbf16>, vector<128x128xbf16>, vector<8x128xf32> -> vector<8x128xf32>
      %c0_52 = arith.constant 0 : index
      %c0_53 = arith.constant 0 : index
      %79 = vector.load %arg17[%c0_52, %c0_53] : memref<1x128xf32, #tpu.memory_space<vmem>>, vector<1x128xf32>
      %80 = vector.broadcast %79 : vector<1x128xf32> to vector<8x128xf32>
      %81 = arith.addf %78, %80 : vector<8x128xf32>
      %cst_54 = arith.constant 0.000000e+00 : f32
      %82 = vector.broadcast %cst_54 : f32 to vector<8x128xf32>
      %83 = arith.maximumf %81, %82 : vector<8x128xf32>
      %84 = arith.truncf %83 : vector<8x128xf32> to vector<8x128xbf16>
      %c0_55 = arith.constant 0 : index
      %c0_56 = arith.constant 0 : index
      %85 = vector.load %arg21[%c0_55, %c0_56] : memref<8x128xbf16, #tpu.memory_space<vmem>>, vector<8x128xbf16>
      tpu.vector_store %arg21[%c0_55, %c0_56], %84 {strides = array<i32>} : memref<8x128xbf16, #tpu.memory_space<vmem>>, vector<8x128xbf16>,
    } else {
    }
    %c0 = arith.constant 0 : index
    %c0_1 = arith.constant 0 : index
    %3 = vector.load %arg21[%c0, %c0_1] : memref<8x128xbf16, #tpu.memory_space<vmem>>, vector<8x128xbf16>
    %c0_2 = arith.constant 0 : index
    %c0_3 = arith.constant 0 : index
    %4 = vector.load %arg18[%c0_2, %c0_3] : memref<128x256xbf16, #tpu.memory_space<vmem>>, vector<128x256xbf16>
    %cst = arith.constant dense<0.000000e+00> : vector<8x256xf32>
    %5 = tpu.matmul %3, %4, %cst {dimension_numbers = #tpu.dot_dimension_numbers<[1], [0], [0], [1], [0, 0, 1, 1], [], []>} : vector<8x128xbf16>, vector<128x256xbf16>, vector<8x256xf32> -> vector<8x256xf32>
    %c0_4 = arith.constant 0 : index
    %c0_5 = arith.constant 0 : index
    %6 = vector.load %arg19[%c0_4, %c0_5] : memref<1x256xf32, #tpu.memory_space<vmem>>, vector<1x256xf32>
    %7 = vector.broadcast %6 : vector<1x256xf32> to vector<8x256xf32>
    %8 = arith.addf %5, %7 : vector<8x256xf32>
    %c0_6 = arith.constant 0 : index
    %c0_7 = arith.constant 0 : index
    %9 = vector.load %arg20[%c0_6, %c0_7] : memref<8x256xf32, #tpu.memory_space<vmem>>, vector<8x256xf32>
    tpu.vector_store %arg20[%c0_6, %c0_7], %8 {strides = array<i32>} : memref<8x256xf32, #tpu.memory_space<vmem>>, vector<8x256xf32>,
    return
  }
  func.func @transform_0(%arg0: i32, %arg1: i32) -> (i32, i32) {
    %c0_i32 = arith.constant 0 : i32
    %c0_i32_0 = arith.constant 0 : i32
    return %arg0, %c0_i32 : i32, i32
  }
  func.func @transform_1(%arg0: i32, %arg1: i32) -> (i32, i32, i32) {
    %c0_i32 = arith.constant 0 : i32
    %c0_i32_0 = arith.constant 0 : i32
    %c0_i32_1 = arith.constant 0 : i32
    return %arg0, %c0_i32, %c0_i32_0 : i32, i32, i32
  }
  func.func @transform_2(%arg0: i32, %arg1: i32) -> (i32, i32) {
    %c0_i32 = arith.constant 0 : i32
    %c0_i32_0 = arith.constant 0 : i32
    return %arg0, %c0_i32 : i32, i32
  }
  func.func @transform_3(%arg0: i32, %arg1: i32) -> (i32, i32) {
    %c0_i32 = arith.constant 0 : i32
    %c0_i32_0 = arith.constant 0 : i32
    %c0_i32_1 = arith.constant 0 : i32
    return %c0_i32, %c0_i32_0 : i32, i32
  }
  func.func @transform_4(%arg0: i32, %arg1: i32) -> (i32, i32) {
    %c0_i32 = arith.constant 0 : i32
    %c0_i32_0 = arith.constant 0 : i32
    %c0_i32_1 = arith.constant 0 : i32
    return %c0_i32, %c0_i32_0 : i32, i32
  }
  func.func @transform_5(%arg0: i32, %arg1: i32) -> (i32, i32) {
    %c0_i32 = arith.constant 0 : i32
    %c0_i32_0 = arith.constant 0 : i32
    %c0_i32_1 = arith.constant 0 : i32
    return %c0_i32, %c0_i32_0 : i32, i32
  }
  func.func @transform_6(%arg0: i32, %arg1: i32) -> (i32, i32) {
    %c0_i32 = arith.constant 0 : i32
    %c0_i32_0 = arith.constant 0 : i32
    %c0_i32_1 = arith.constant 0 : i32
    return %c0_i32, %c0_i32_0 : i32, i32
  }
  func.func @transform_7(%arg0: i32, %arg1: i32) -> (i32, i32) {
    %c0_i32 = arith.constant 0 : i32
    %c0_i32_0 = arith.constant 0 : i32
    %c0_i32_1 = arith.constant 0 : i32
    return %c0_i32, %c0_i32_0 : i32, i32
  }
  func.func @transform_8(%arg0: i32, %arg1: i32) -> (i32, i32) {
    %c0_i32 = arith.constant 0 : i32
    %c0_i32_0 = arith.constant 0 : i32
    %c0_i32_1 = arith.constant 0 : i32
    return %c0_i32, %c0_i32_0 : i32, i32
  }
  func.func @transform_9(%arg0: i32, %arg1: i32) -> (i32, i32) {
    %c0_i32 = arith.constant 0 : i32
    %c0_i32_0 = arith.constant 0 : i32
    %c0_i32_1 = arith.constant 0 : i32
    return %c0_i32, %c0_i32_0 : i32, i32
  }
  func.func @transform_10(%arg0: i32, %arg1: i32) -> (i32, i32) {
    %c0_i32 = arith.constant 0 : i32
    %c0_i32_0 = arith.constant 0 : i32
    %c0_i32_1 = arith.constant 0 : i32
    return %c0_i32, %c0_i32_0 : i32, i32
  }
  func.func @transform_11(%arg0: i32, %arg1: i32) -> (i32, i32) {
    %c0_i32 = arith.constant 0 : i32
    %c0_i32_0 = arith.constant 0 : i32
    %c0_i32_1 = arith.constant 0 : i32
    return %c0_i32, %c0_i32_0 : i32, i32
  }
  func.func @transform_12(%arg0: i32, %arg1: i32) -> (i32, i32) {
    %c0_i32 = arith.constant 0 : i32
    %c0_i32_0 = arith.constant 0 : i32
    %c0_i32_1 = arith.constant 0 : i32
    return %c0_i32, %c0_i32_0 : i32, i32
  }
  func.func @transform_13(%arg0: i32, %arg1: i32) -> (i32, i32) {
    %c0_i32 = arith.constant 0 : i32
    %c0_i32_0 = arith.constant 0 : i32
    %c0_i32_1 = arith.constant 0 : i32
    return %c0_i32, %c0_i32_0 : i32, i32
  }
  func.func @transform_14(%arg0: i32, %arg1: i32) -> (i32, i32) {
    %c0_i32 = arith.constant 0 : i32
    %c0_i32_0 = arith.constant 0 : i32
    %c0_i32_1 = arith.constant 0 : i32
    return %c0_i32, %c0_i32_0 : i32, i32
  }
  func.func @transform_15(%arg0: i32, %arg1: i32) -> (i32, i32) {
    %c0_i32 = arith.constant 0 : i32
    %c0_i32_0 = arith.constant 0 : i32
    %c0_i32_1 = arith.constant 0 : i32
    return %c0_i32, %c0_i32_0 : i32, i32
  }
  func.func @transform_16(%arg0: i32, %arg1: i32) -> (i32, i32) {
    %c0_i32 = arith.constant 0 : i32
    %c0_i32_0 = arith.constant 0 : i32
    %c0_i32_1 = arith.constant 0 : i32
    return %c0_i32, %c0_i32_0 : i32, i32
  }
  func.func @transform_17(%arg0: i32, %arg1: i32) -> (i32, i32) {
    %c0_i32 = arith.constant 0 : i32
    %c0_i32_0 = arith.constant 0 : i32
    %c0_i32_1 = arith.constant 0 : i32
    return %c0_i32, %c0_i32_0 : i32, i32
  }
  func.func @transform_18(%arg0: i32, %arg1: i32) -> (i32, i32) {
    %c0_i32 = arith.constant 0 : i32
    return %arg0, %arg1 : i32, i32
  }
}

module attributes {stable_mosaic.version = 11 : i64} {
  func.func @butd_kernel(%arg0: i32, %arg1: i32, %arg2: memref<8x128xf32, #tpu.memory_space<vmem>>, %arg3: memref<8x16x128xbf16, #tpu.memory_space<vmem>>, %arg4: memref<8x16xf32, #tpu.memory_space<vmem>>, %arg5: memref<16x1xf32, #tpu.memory_space<vmem>>, %arg6: memref<128x128xbf16, #tpu.memory_space<vmem>>, %arg7: memref<1x128xf32, #tpu.memory_space<vmem>>, %arg8: memref<128x128xbf16, #tpu.memory_space<vmem>>, %arg9: memref<1x128xf32, #tpu.memory_space<vmem>>, %arg10: memref<1x128xf32, #tpu.memory_space<vmem>>, %arg11: memref<1x1xf32, #tpu.memory_space<smem>>, %arg12: memref<128x128xbf16, #tpu.memory_space<vmem>>, %arg13: memref<1x128xf32, #tpu.memory_space<vmem>>, %arg14: memref<128x128xbf16, #tpu.memory_space<vmem>>, %arg15: memref<1x128xf32, #tpu.memory_space<vmem>>, %arg16: memref<128x128xbf16, #tpu.memory_space<vmem>>, %arg17: memref<1x128xf32, #tpu.memory_space<vmem>>, %arg18: memref<128x256xbf16, #tpu.memory_space<vmem>>, %arg19: memref<1x256xf32, #tpu.memory_space<vmem>>, %arg20: memref<8x256xf32, #tpu.memory_space<vmem>>, %arg21: memref<8x128xbf16, #tpu.memory_space<vmem>>) attributes {dimension_semantics = [#tpu.dimension_semantics<parallel>, #tpu.dimension_semantics<arbitrary>], iteration_bounds = array<i64: 2, 1>, scalar_prefetch = 0 : i64, scratch_operands = 1 : i64, tpu.core_type = #tpu.core_type<tc>, window_params = [{transform_indices = @transform_0, window_bounds = array<i64: 8, 128>}, {transform_indices = @transform_1, window_bounds = array<i64: 8, 16, 128>}, {transform_indices = @transform_2, window_bounds = array<i64: 8, 16>}, {pipeline_mode = #tpu.pipeline_mode<synchronous>, transform_indices = @transform_3, window_bounds = array<i64: 16, 1>}, {pipeline_mode = #tpu.pipeline_mode<synchronous>, transform_indices = @transform_4, window_bounds = array<i64: 128, 128>}, {pipeline_mode = #tpu.pipeline_mode<synchronous>, transform_indices = @transform_5, window_bounds = array<i64: 1, 128>}, {pipeline_mode = #tpu.pipeline_mode<synchronous>, transform_indices = @transform_6, window_bounds = array<i64: 128, 128>}, {pipeline_mode = #tpu.pipeline_mode<synchronous>, transform_indices = @transform_7, window_bounds = array<i64: 1, 128>}, {pipeline_mode = #tpu.pipeline_mode<synchronous>, transform_indices = @transform_8, window_bounds = array<i64: 1, 128>}, {transform_indices = @transform_9, window_bounds = array<i64: 1, 1>}, {pipeline_mode = #tpu.pipeline_mode<synchronous>, transform_indices = @transform_10, window_bounds = array<i64: 128, 128>}, {pipeline_mode = #tpu.pipeline_mode<synchronous>, transform_indices = @transform_11, window_bounds = array<i64: 1, 128>}, {pipeline_mode = #tpu.pipeline_mode<synchronous>, transform_indices = @transform_12, window_bounds = array<i64: 128, 128>}, {pipeline_mode = #tpu.pipeline_mode<synchronous>, transform_indices = @transform_13, window_bounds = array<i64: 1, 128>}, {pipeline_mode = #tpu.pipeline_mode<synchronous>, transform_indices = @transform_14, window_bounds = array<i64: 128, 128>}, {pipeline_mode = #tpu.pipeline_mode<synchronous>, transform_indices = @transform_15, window_bounds = array<i64: 1, 128>}, {pipeline_mode = #tpu.pipeline_mode<synchronous>, transform_indices = @transform_16, window_bounds = array<i64: 128, 256>}, {pipeline_mode = #tpu.pipeline_mode<synchronous>, transform_indices = @transform_17, window_bounds = array<i64: 1, 256>}, {transform_indices = @transform_18, window_bounds = array<i64: 8, 256>}]} {
    %c0_i32 = arith.constant 0 : i32
    %0 = arith.cmpi eq, %arg1, %c0_i32 : i32
    %1 = arith.extui %0 : i1 to i32
    %c0_i32_0 = arith.constant 0 : i32
    %2 = arith.cmpi ne, %1, %c0_i32_0 : i32
    scf.if %2 {
      %c0_8 = arith.constant 0 : index
      %c0_9 = arith.constant 0 : index
      %10 = vector.load %arg2[%c0_8, %c0_9] : memref<8x128xf32, #tpu.memory_space<vmem>>, vector<8x128xf32>
      %11 = arith.truncf %10 : vector<8x128xf32> to vector<8x128xbf16>
      %c0_10 = arith.constant 0 : index
      %c0_11 = arith.constant 0 : index
      %c0_12 = arith.constant 0 : index
      %12 = vector.load %arg3[%c0_10, %c0_11, %c0_12] : memref<8x16x128xbf16, #tpu.memory_space<vmem>>, vector<8x16x128xbf16>
      %c0_13 = arith.constant 0 : index
      %c0_14 = arith.constant 0 : index
      %13 = vector.load %arg4[%c0_13, %c0_14] : memref<8x16xf32, #tpu.memory_space<vmem>>, vector<8x16xf32>
      %14 = vector.shape_cast %12 : vector<8x16x128xbf16> to vector<128x128xbf16>
      %c0_15 = arith.constant 0 : index
      %c0_16 = arith.constant 0 : index
      %15 = vector.load %arg6[%c0_15, %c0_16] : memref<128x128xbf16, #tpu.memory_space<vmem>>, vector<128x128xbf16>
      %cst_17 = arith.constant dense<0.000000e+00> : vector<128x128xf32>
      %16 = tpu.matmul %14, %15, %cst_17 {dimension_numbers = #tpu.dot_dimension_numbers<[1], [0], [0], [1], [0, 0, 1, 1], [], []>} : vector<128x128xbf16>, vector<128x128xbf16>, vector<128x128xf32> -> vector<128x128xf32>
      %c0_18 = arith.constant 0 : index
      %c0_19 = arith.constant 0 : index
      %17 = vector.load %arg7[%c0_18, %c0_19] : memref<1x128xf32, #tpu.memory_space<vmem>>, vector<1x128xf32>
      %18 = vector.broadcast %17 : vector<1x128xf32> to vector<128x128xf32>
      %19 = arith.addf %16, %18 : vector<128x128xf32>
      %cst_20 = arith.constant 0.000000e+00 : f32
      %20 = vector.broadcast %cst_20 : f32 to vector<128x128xf32>
      %21 = arith.maximumf %19, %20 : vector<128x128xf32>
      %c0_21 = arith.constant 0 : index
      %c0_22 = arith.constant 0 : index
      %22 = vector.load %arg8[%c0_21, %c0_22] : memref<128x128xbf16, #tpu.memory_space<vmem>>, vector<128x128xbf16>
      %cst_23 = arith.constant dense<0.000000e+00> : vector<8x128xf32>
      %23 = tpu.matmul %11, %22, %cst_23 {dimension_numbers = #tpu.dot_dimension_numbers<[1], [0], [0], [1], [0, 0, 1, 1], [], []>} : vector<8x128xbf16>, vector<128x128xbf16>, vector<8x128xf32> -> vector<8x128xf32>
      %c0_24 = arith.constant 0 : index
      %c0_25 = arith.constant 0 : index
      %24 = vector.load %arg9[%c0_24, %c0_25] : memref<1x128xf32, #tpu.memory_space<vmem>>, vector<1x128xf32>
      %25 = vector.broadcast %24 : vector<1x128xf32> to vector<8x128xf32>
      %26 = arith.addf %23, %25 : vector<8x128xf32>
      %cst_26 = arith.constant 0.000000e+00 : f32
      %27 = vector.broadcast %cst_26 : f32 to vector<8x128xf32>
      %28 = arith.maximumf %26, %27 : vector<8x128xf32>
      %c0_27 = arith.constant 0 : index
      %c0_28 = arith.constant 0 : index
      %29 = vector.load %arg10[%c0_27, %c0_28] : memref<1x128xf32, #tpu.memory_space<vmem>>, vector<1x128xf32>
      %30 = vector.broadcast %29 : vector<1x128xf32> to vector<8x128xf32>
      %31 = arith.mulf %28, %30 : vector<8x128xf32>
      %32 = vector.shape_cast %21 : vector<128x128xf32> to vector<8x16x128xf32>
      %33 = vector.shape_cast %31 : vector<8x128xf32> to vector<8x1x128xf32>
      %34 = vector.broadcast %33 : vector<8x1x128xf32> to vector<8x16x128xf32>
      %35 = arith.mulf %32, %34 : vector<8x16x128xf32>
      %cst_29 = arith.constant dense<0.000000e+00> : vector<8x16xf32>
      %36 = vector.multi_reduction <add>, %35, %cst_29 [2] : vector<8x16x128xf32> to vector<8x16xf32>
      %37 = vector.shape_cast %36 : vector<8x16xf32> to vector<8x16x1xf32>
      %c0_30 = arith.constant 0 : index
      %c0_31 = arith.constant 0 : index
      %38 = memref.load %arg11[%c0_30, %c0_31] : memref<1x1xf32, #tpu.memory_space<smem>>
      %39 = vector.broadcast %38 : f32 to vector<8x16x1xf32>
      %40 = arith.addf %37, %39 : vector<8x16x1xf32>
      %41 = vector.shape_cast %13 : vector<8x16xf32> to vector<8x16x1xf32>
      %42 = arith.mulf %40, %41 : vector<8x16x1xf32>
      %c0_32 = arith.constant 0 : index
      %c0_33 = arith.constant 0 : index
      %43 = vector.load %arg5[%c0_32, %c0_33] : memref<16x1xf32, #tpu.memory_space<vmem>>, vector<16x1xf32>
      %44 = vector.shape_cast %43 : vector<16x1xf32> to vector<1x16x1xf32>
      %45 = vector.broadcast %44 : vector<1x16x1xf32> to vector<8x16x1xf32>
      %46 = arith.addf %42, %45 : vector<8x16x1xf32>
      %cst_34 = arith.constant dense<0xFF800000> : vector<8x1xf32>
      %47 = vector.multi_reduction <maximumf>, %46, %cst_34 [1] : vector<8x16x1xf32> to vector<8x1xf32>
      %48 = vector.shape_cast %47 : vector<8x1xf32> to vector<8x1x1xf32>
      %49 = vector.broadcast %48 : vector<8x1x1xf32> to vector<8x16x1xf32>
      %50 = arith.subf %46, %49 : vector<8x16x1xf32>
      %51 = math.exp %50 : vector<8x16x1xf32>
      %cst_35 = arith.constant dense<0.000000e+00> : vector<8x1xf32>
      %52 = vector.multi_reduction <add>, %51, %cst_35 [1] : vector<8x16x1xf32> to vector<8x1xf32>
      %53 = vector.shape_cast %52 : vector<8x1xf32> to vector<8x1x1xf32>
      %54 = tpu.reciprocal %53 {approx = true} : vector<8x1x1xf32> -> vector<8x1x1xf32>
      %55 = vector.broadcast %54 : vector<8x1x1xf32> to vector<8x16x1xf32>
      %56 = arith.mulf %51, %55 : vector<8x16x1xf32>
      %57 = arith.truncf %56 : vector<8x16x1xf32> to vector<8x16x1xbf16>
      "tpu.trace_start"() <{level = 10 : i32, message = "bkj,bkv->bjv"}> : () -> ()
      %cst_36 = arith.constant dense<0.000000e+00> : vector<8x1x128xf32>
      %58 = tpu.matmul %57, %12, %cst_36 {dimension_numbers = #tpu.dot_dimension_numbers<[1], [1], [2], [2], [0, 0, 0, 2, 1, 2], [0], [0]>} : vector<8x16x1xbf16>, vector<8x16x128xbf16>, vector<8x1x128xf32> -> vector<8x1x128xf32>
      "tpu.trace_stop"() : () -> ()
      %59 = vector.shape_cast %58 : vector<8x1x128xf32> to vector<8x128xf32>
      %c0_37 = arith.constant 0 : index
      %c0_38 = arith.constant 0 : index
      %60 = vector.load %arg12[%c0_37, %c0_38] : memref<128x128xbf16, #tpu.memory_space<vmem>>, vector<128x128xbf16>
      %cst_39 = arith.constant dense<0.000000e+00> : vector<8x128xf32>
      %61 = tpu.matmul %11, %60, %cst_39 {dimension_numbers = #tpu.dot_dimension_numbers<[1], [0], [0], [1], [0, 0, 1, 1], [], []>} : vector<8x128xbf16>, vector<128x128xbf16>, vector<8x128xf32> -> vector<8x128xf32>
      %c0_40 = arith.constant 0 : index
      %c0_41 = arith.constant 0 : index
      %62 = vector.load %arg13[%c0_40, %c0_41] : memref<1x128xf32, #tpu.memory_space<vmem>>, vector<1x128xf32>
      %63 = vector.broadcast %62 : vector<1x128xf32> to vector<8x128xf32>
      %64 = arith.addf %61, %63 : vector<8x128xf32>
      %cst_42 = arith.constant 0.000000e+00 : f32
      %65 = vector.broadcast %cst_42 : f32 to vector<8x128xf32>
      %66 = arith.maximumf %64, %65 : vector<8x128xf32>
      %67 = arith.truncf %59 : vector<8x128xf32> to vector<8x128xbf16>
      %c0_43 = arith.constant 0 : index
      %c0_44 = arith.constant 0 : index
      %68 = vector.load %arg14[%c0_43, %c0_44] : memref<128x128xbf16, #tpu.memory_space<vmem>>, vector<128x128xbf16>
      %cst_45 = arith.constant dense<0.000000e+00> : vector<8x128xf32>
      %69 = tpu.matmul %67, %68, %cst_45 {dimension_numbers = #tpu.dot_dimension_numbers<[1], [0], [0], [1], [0, 0, 1, 1], [], []>} : vector<8x128xbf16>, vector<128x128xbf16>, vector<8x128xf32> -> vector<8x128xf32>
      %c0_46 = arith.constant 0 : index
      %c0_47 = arith.constant 0 : index
      %70 = vector.load %arg15[%c0_46, %c0_47] : memref<1x128xf32, #tpu.memory_space<vmem>>, vector<1x128xf32>
      %71 = vector.broadcast %70 : vector<1x128xf32> to vector<8x128xf32>
      %72 = arith.addf %69, %71 : vector<8x128xf32>
      %cst_48 = arith.constant 0.000000e+00 : f32
      %73 = vector.broadcast %cst_48 : f32 to vector<8x128xf32>
      %74 = arith.maximumf %72, %73 : vector<8x128xf32>
      %75 = arith.mulf %66, %74 : vector<8x128xf32>
      %76 = arith.truncf %75 : vector<8x128xf32> to vector<8x128xbf16>
      %c0_49 = arith.constant 0 : index
      %c0_50 = arith.constant 0 : index
      %77 = vector.load %arg16[%c0_49, %c0_50] : memref<128x128xbf16, #tpu.memory_space<vmem>>, vector<128x128xbf16>
      %cst_51 = arith.constant dense<0.000000e+00> : vector<8x128xf32>
      %78 = tpu.matmul %76, %77, %cst_51 {dimension_numbers = #tpu.dot_dimension_numbers<[1], [0], [0], [1], [0, 0, 1, 1], [], []>} : vector<8x128xbf16>, vector<128x128xbf16>, vector<8x128xf32> -> vector<8x128xf32>
      %c0_52 = arith.constant 0 : index
      %c0_53 = arith.constant 0 : index
      %79 = vector.load %arg17[%c0_52, %c0_53] : memref<1x128xf32, #tpu.memory_space<vmem>>, vector<1x128xf32>
      %80 = vector.broadcast %79 : vector<1x128xf32> to vector<8x128xf32>
      %81 = arith.addf %78, %80 : vector<8x128xf32>
      %cst_54 = arith.constant 0.000000e+00 : f32
      %82 = vector.broadcast %cst_54 : f32 to vector<8x128xf32>
      %83 = arith.maximumf %81, %82 : vector<8x128xf32>
      %84 = arith.truncf %83 : vector<8x128xf32> to vector<8x128xbf16>
      %c0_55 = arith.constant 0 : index
      %c0_56 = arith.constant 0 : index
      %85 = vector.load %arg21[%c0_55, %c0_56] : memref<8x128xbf16, #tpu.memory_space<vmem>>, vector<8x128xbf16>
      tpu.vector_store %arg21[%c0_55, %c0_56], %84 {strides = array<i32>} : memref<8x128xbf16, #tpu.memory_space<vmem>>, vector<8x128xbf16>,
    } else {
    }
    %c0 = arith.constant 0 : index
    %c0_1 = arith.constant 0 : index
    %3 = vector.load %arg21[%c0, %c0_1] : memref<8x128xbf16, #tpu.memory_space<vmem>>, vector<8x128xbf16>
    %c0_2 = arith.constant 0 : index
    %c0_3 = arith.constant 0 : index
    %4 = vector.load %arg18[%c0_2, %c0_3] : memref<128x256xbf16, #tpu.memory_space<vmem>>, vector<128x256xbf16>
    %cst = arith.constant dense<0.000000e+00> : vector<8x256xf32>
    %5 = tpu.matmul %3, %4, %cst {dimension_numbers = #tpu.dot_dimension_numbers<[1], [0], [0], [1], [0, 0, 1, 1], [], []>} : vector<8x128xbf16>, vector<128x256xbf16>, vector<8x256xf32> -> vector<8x256xf32>
    %c0_4 = arith.constant 0 : index
    %c0_5 = arith.constant 0 : index
    %6 = vector.load %arg19[%c0_4, %c0_5] : memref<1x256xf32, #tpu.memory_space<vmem>>, vector<1x256xf32>
    %7 = vector.broadcast %6 : vector<1x256xf32> to vector<8x256xf32>
    %8 = arith.addf %5, %7 : vector<8x256xf32>
    %c0_6 = arith.constant 0 : index
    %c0_7 = arith.constant 0 : index
    %9 = vector.load %arg20[%c0_6, %c0_7] : memref<8x256xf32, #tpu.memory_space<vmem>>, vector<8x256xf32>
    tpu.vector_store %arg20[%c0_6, %c0_7], %8 {strides = array<i32>} : memref<8x256xf32, #tpu.memory_space<vmem>>, vector<8x256xf32>,
    return
  }
  func.func @transform_0(%arg0: i32, %arg1: i32) -> (i32, i32) {
    %c0_i32 = arith.constant 0 : i32
    %c0_i32_0 = arith.constant 0 : i32
    return %arg0, %c0_i32 : i32, i32
  }
  func.func @transform_1(%arg0: i32, %arg1: i32) -> (i32, i32, i32) {
    %c0_i32 = arith.constant 0 : i32
    %c0_i32_0 = arith.constant 0 : i32
    %c0_i32_1 = arith.constant 0 : i32
    return %arg0, %c0_i32, %c0_i32_0 : i32, i32, i32
  }
  func.func @transform_2(%arg0: i32, %arg1: i32) -> (i32, i32) {
    %c0_i32 = arith.constant 0 : i32
    %c0_i32_0 = arith.constant 0 : i32
    return %arg0, %c0_i32 : i32, i32
  }
  func.func @transform_3(%arg0: i32, %arg1: i32) -> (i32, i32) {
    %c0_i32 = arith.constant 0 : i32
    %c0_i32_0 = arith.constant 0 : i32
    %c0_i32_1 = arith.constant 0 : i32
    return %c0_i32, %c0_i32_0 : i32, i32
  }
  func.func @transform_4(%arg0: i32, %arg1: i32) -> (i32, i32) {
    %c0_i32 = arith.constant 0 : i32
    %c0_i32_0 = arith.constant 0 : i32
    %c0_i32_1 = arith.constant 0 : i32
    return %c0_i32, %c0_i32_0 : i32, i32
  }
  func.func @transform_5(%arg0: i32, %arg1: i32) -> (i32, i32) {
    %c0_i32 = arith.constant 0 : i32
    %c0_i32_0 = arith.constant 0 : i32
    %c0_i32_1 = arith.constant 0 : i32
    return %c0_i32, %c0_i32_0 : i32, i32
  }
  func.func @transform_6(%arg0: i32, %arg1: i32) -> (i32, i32) {
    %c0_i32 = arith.constant 0 : i32
    %c0_i32_0 = arith.constant 0 : i32
    %c0_i32_1 = arith.constant 0 : i32
    return %c0_i32, %c0_i32_0 : i32, i32
  }
  func.func @transform_7(%arg0: i32, %arg1: i32) -> (i32, i32) {
    %c0_i32 = arith.constant 0 : i32
    %c0_i32_0 = arith.constant 0 : i32
    %c0_i32_1 = arith.constant 0 : i32
    return %c0_i32, %c0_i32_0 : i32, i32
  }
  func.func @transform_8(%arg0: i32, %arg1: i32) -> (i32, i32) {
    %c0_i32 = arith.constant 0 : i32
    %c0_i32_0 = arith.constant 0 : i32
    %c0_i32_1 = arith.constant 0 : i32
    return %c0_i32, %c0_i32_0 : i32, i32
  }
  func.func @transform_9(%arg0: i32, %arg1: i32) -> (i32, i32) {
    %c0_i32 = arith.constant 0 : i32
    %c0_i32_0 = arith.constant 0 : i32
    %c0_i32_1 = arith.constant 0 : i32
    return %c0_i32, %c0_i32_0 : i32, i32
  }
  func.func @transform_10(%arg0: i32, %arg1: i32) -> (i32, i32) {
    %c0_i32 = arith.constant 0 : i32
    %c0_i32_0 = arith.constant 0 : i32
    %c0_i32_1 = arith.constant 0 : i32
    return %c0_i32, %c0_i32_0 : i32, i32
  }
  func.func @transform_11(%arg0: i32, %arg1: i32) -> (i32, i32) {
    %c0_i32 = arith.constant 0 : i32
    %c0_i32_0 = arith.constant 0 : i32
    %c0_i32_1 = arith.constant 0 : i32
    return %c0_i32, %c0_i32_0 : i32, i32
  }
  func.func @transform_12(%arg0: i32, %arg1: i32) -> (i32, i32) {
    %c0_i32 = arith.constant 0 : i32
    %c0_i32_0 = arith.constant 0 : i32
    %c0_i32_1 = arith.constant 0 : i32
    return %c0_i32, %c0_i32_0 : i32, i32
  }
  func.func @transform_13(%arg0: i32, %arg1: i32) -> (i32, i32) {
    %c0_i32 = arith.constant 0 : i32
    %c0_i32_0 = arith.constant 0 : i32
    %c0_i32_1 = arith.constant 0 : i32
    return %c0_i32, %c0_i32_0 : i32, i32
  }
  func.func @transform_14(%arg0: i32, %arg1: i32) -> (i32, i32) {
    %c0_i32 = arith.constant 0 : i32
    %c0_i32_0 = arith.constant 0 : i32
    %c0_i32_1 = arith.constant 0 : i32
    return %c0_i32, %c0_i32_0 : i32, i32
  }
  func.func @transform_15(%arg0: i32, %arg1: i32) -> (i32, i32) {
    %c0_i32 = arith.constant 0 : i32
    %c0_i32_0 = arith.constant 0 : i32
    %c0_i32_1 = arith.constant 0 : i32
    return %c0_i32, %c0_i32_0 : i32, i32
  }
  func.func @transform_16(%arg0: i32, %arg1: i32) -> (i32, i32) {
    %c0_i32 = arith.constant 0 : i32
    %c0_i32_0 = arith.constant 0 : i32
    %c0_i32_1 = arith.constant 0 : i32
    return %c0_i32, %c0_i32_0 : i32, i32
  }
  func.func @transform_17(%arg0: i32, %arg1: i32) -> (i32, i32) {
    %c0_i32 = arith.constant 0 : i32
    %c0_i32_0 = arith.constant 0 : i32
    %c0_i32_1 = arith.constant 0 : i32
    return %c0_i32, %c0_i32_0 : i32, i32
  }
  func.func @transform_18(%arg0: i32, %arg1: i32) -> (i32, i32) {
    %c0_i32 = arith.constant 0 : i32
    return %arg0, %arg1 : i32, i32
  }
}

</mosaic_0001>

<llo_original>
// kernel: tpu_custom_call.1
$region0: #{tpu_custom_call.1}
  #allocation0 [shape = 'u32[]', space=smem, size = 0x4, offset = 0x4, fixed_abs, tag = 'smem constant byte address 0x4 - core index']
  #allocation1 [shape = 'u32[144,128]{1,0:T(1,128)}', space=vmem, size = 0x12000, scoped, tag = 'internal scratch']
  #allocation2 [shape = 'bf16[8,128]{1,0:T(8,128)(2,1)}', space=vmem, size = 0x800, scoped, tag = 'scratch operand']
  #allocation3 [shape = 'f32[1,1]{1,0:T(1,128)S(6)}', space=smem, size = 0x200, scoped, tag = 'scoped memory for tpu_custom_call.1']
  %s0 = inlined_call_operand.hbm [shape: f32[16,128], index: 0, kind: input, shape index: {}]
  %s1 = inlined_call_operand.hbm [shape: bf16[16,16,128], index: 1, kind: input, shape index: {}]
  %s2 = inlined_call_operand.hbm [shape: f32[16,16], index: 2, kind: input, shape index: {}]
  %s3 = inlined_call_operand.vmem [shape: f32[16,1], index: 3, kind: input, shape index: {}]
  %s4 = inlined_call_operand.hbm [shape: bf16[128,128], index: 4, kind: input, shape index: {}]
  %s5 = inlined_call_operand.vmem [shape: f32[1,128], index: 5, kind: input, shape index: {}]
  %s6 = inlined_call_operand.hbm [shape: bf16[128,128], index: 6, kind: input, shape index: {}]
  %s7 = inlined_call_operand.vmem [shape: f32[1,128], index: 7, kind: input, shape index: {}]
  %s8 = inlined_call_operand.vmem [shape: f32[1,128], index: 8, kind: input, shape index: {}]
  %s9 = inlined_call_operand.<no memory space> [shape: f32[1,1], index: 9, kind: input, shape index: {}]
  %s10 = inlined_call_operand.hbm [shape: bf16[128,128], index: 10, kind: input, shape index: {}]
  %s11 = inlined_call_operand.vmem [shape: f32[1,128], index: 11, kind: input, shape index: {}]
  %s12 = inlined_call_operand.hbm [shape: bf16[128,128], index: 12, kind: input, shape index: {}]
  %s13 = inlined_call_operand.hbm [shape: f32[1,128], index: 13, kind: input, shape index: {}]
  %s14 = inlined_call_operand.vmem [shape: bf16[128,128], index: 14, kind: input, shape index: {}]
  %s15 = inlined_call_operand.vmem [shape: f32[1,128], index: 15, kind: input, shape index: {}]
  %s16 = inlined_call_operand.hbm [shape: bf16[128,256], index: 16, kind: input, shape index: {}]
  %s17 = inlined_call_operand.vmem [shape: f32[1,256], index: 17, kind: input, shape index: {}]
  %s18 = inlined_call_operand.hbm [shape: f32[16,256], index: 18, kind: output, shape index: {}]
  %s19 = sld [smem:[#allocation0]]
  $region145: #{tpu_custom_call.1} parent=0
    _
  %s21 = ssub.s32 1, %s19
  %s22 = scalar_select 0, %s21, %s19
  %23 = sst [smem:[#allocation3]] %s9
  $region1: #{tpu_custom_call.1} parent=0
    #allocation4 [shape = 'u8[8192]{0}', space=vmem, size = 0x2000, scoped, tag = 'input window, operand 0']
    #allocation5 [shape = 's32[2]{0}', space=sflag, size = 0x8, scoped, tag = 'scoped memory for tpu_custom_call.1']
    #allocation6 [shape = 's32[2]{0}', space=sflag, size = 0x8, scoped, tag = 'scoped memory for tpu_custom_call.1']
    #allocation7 [shape = 'u8[65536]{0}', space=vmem, size = 0x10000, scoped, tag = 'input window, operand 1']
    #allocation8 [shape = 's32[2]{0}', space=sflag, size = 0x8, scoped, tag = 'scoped memory for tpu_custom_call.1']
    #allocation9 [shape = 'u8[8192]{0}', space=vmem, size = 0x2000, scoped, tag = 'input window, operand 2']
    #allocation10 [shape = 'u8[32768]{0}', space=vmem, size = 0x8000, scoped, tag = 'input window, operand 4, single buffered']
    #allocation11 [shape = 's32[1]{0}', space=sflag, size = 0x4, scoped, tag = 'scoped memory for tpu_custom_call.1']
    #allocation12 [shape = 'u8[32768]{0}', space=vmem, size = 0x8000, scoped, tag = 'input window, operand 6, single buffered']
    #allocation13 [shape = 'u8[32768]{0}', space=vmem, size = 0x8000, scoped, tag = 'input window, operand 10, single buffered']
    #allocation14 [shape = 's32[1]{0}', space=sflag, size = 0x4, scoped, tag = 'scoped memory for tpu_custom_call.1']
    #allocation15 [shape = 'u8[32768]{0}', space=vmem, size = 0x8000, scoped, tag = 'input window, operand 12, single buffered']
    #allocation16 [shape = 'u8[512]{0}', space=vmem, size = 0x400, scoped, tag = 'input window, operand 13, single buffered']
    #allocation17 [shape = 's32[1]{0}', space=sflag, size = 0x4, scoped, tag = 'scoped memory for tpu_custom_call.1']
    #allocation18 [shape = 'u8[65536]{0}', space=vmem, size = 0x10000, scoped, tag = 'input window, operand 16, single buffered']
    #allocation19 [shape = 'u8[16384]{0}', space=vmem, size = 0x4000, scoped, tag = 'output window, operand 0']
    %24 = vsyncpa [#allocation5], 0
    %s25 = scalar_lea.sflag [#allocation5], 1
    %26 = vsyncpa %s25, 0
    %27 = vsyncpa [#allocation8], 0
    %s28 = scalar_lea.sflag [#allocation8], 1
    %29 = vsyncpa %s28, 0
    %30 = vsyncpa [#allocation11], 0
    %31 = vsyncpa [#allocation14], 0
    %32 = vsyncpa [#allocation17], 0
    %33 = vsyncpa [#allocation6], 0
    %s34 = scalar_lea.sflag [#allocation6], 1
    %35 = vsyncpa %s34, 0
    loop: start=0, step=1, limit=4
    $region2: #{tpu_custom_call.1} parent=1 // loop_pre_header
      _
    $region3: #{tpu_custom_call.1} parent=1 // loop_header
      %s37 = sphi 0, %s41
      %p38 = scmp.ge.s32.totalorder %s37, 4
      %s44 = sphi 0, %s56
      %s45 = sphi 0, %s52
      %s46 = sphi 0, %s44
      %s47 = sphi 0, %s45
      %s48 = sphi 0, %s46
      %s49 = sphi 0, %s47
      %s59 = sphi 0, %s61
      %s62 = sphi 0, %s59
      %s63 = sphi 0, %s62
      %s79 = sphi 0, %s63
      %s85 = sphi 0, %s87
      %s88 = sphi 0, %s85
      %s89 = sphi 0, %s88
      %s105 = sphi 0, %s89
      %s111 = sphi 0, %s113
      %s114 = sphi 0, %s111
      %s115 = sphi 0, %s114
      %s131 = sphi 0, %s115
      %s135 = sphi 0, %s135
      %s137 = sphi 0, %s135
      %s138 = sphi 0, %s137
      %s152 = sphi 0, %s138
      %s156 = sphi 0, %s156
      %s158 = sphi 0, %s156
      %s159 = sphi 0, %s158
      %s173 = sphi 0, %s159
      %s177 = sphi 0, %s177
      %s179 = sphi 0, %s177
      %s180 = sphi 0, %s179
      %s194 = sphi 0, %s180
      %s198 = sphi 0, %s198
      %s200 = sphi 0, %s198
      %s201 = sphi 0, %s200
      %s215 = sphi 0, %s201
      %s219 = sphi 0, %s219
      %s221 = sphi 0, %s219
      %s222 = sphi 0, %s221
      %s236 = sphi 0, %s222
      %s240 = sphi 0, %s240
      %s242 = sphi 0, %s240
      %s243 = sphi 0, %s242
      %s257 = sphi 0, %s243
      %s261 = sphi 0, %s261
      %s263 = sphi 0, %s261
      %s264 = sphi 0, %s263
      %s278 = sphi 0, %s264
      %s282 = sphi 0, %s282
      %s284 = sphi 0, %s282
      %s285 = sphi 0, %s284
      %s299 = sphi 0, %s285
      %s303 = sphi 0, %s303
      %s305 = sphi 0, %s303
      %s306 = sphi 0, %s305
      %s320 = sphi 0, %s306
      %s324 = sphi 0, %s324
      %s326 = sphi 0, %s324
      %s327 = sphi 0, %s326
      %s341 = sphi 0, %s327
      %s345 = sphi 0, %s345
      %s347 = sphi 0, %s345
      %s348 = sphi 0, %s347
      %s362 = sphi 0, %s348
      %s366 = sphi 0, %s366
      %s368 = sphi 0, %s366
      %s369 = sphi 0, %s368
      %s383 = sphi 0, %s369
      %s387 = sphi 0, %s387
      %s389 = sphi 0, %s387
      %s390 = sphi 0, %s389
      %s404 = sphi 0, %s390
      %s408 = sphi 0, %s408
      %s410 = sphi 0, %s408
      %s411 = sphi 0, %s410
      %s425 = sphi 0, %s411
      %s429 = sphi 0, %s429
      %s431 = sphi 0, %s429
      %s432 = sphi 0, %s431
      %s446 = sphi 0, %s432
      %s454 = sphi 0, %s456
      %s457 = sphi 0, %s454
      %s458 = sphi 0, %s457
      %s474 = sphi 0, %s458
    $region4: #{tpu_custom_call.1} parent=1 // loop_header_branch
      %40 = sbr.rel (%p38) target = $region8
    $region5: #{tpu_custom_call.1} parent=1 // loop_body
      %s42 = ssub.s32 %s37, 1
      %s43 = ssub.s32 %s37, 2
      %s50 = sadd.s32 1, %s45
      %p51 = scmp.ge.s32.totalorder %s50, 1
      %s52 = scalar_select %p51, 0, %s50
      %s53 = sadd.s32 1, %s44
      %s54 = scalar_select %p51, %s53, %s44
      %p55 = scmp.ge.s32.totalorder %s54, 2
      %s56 = scalar_select %p55, 0, %s54
      %s57 = ssub.s32 %s44, %s56
      %p58 = scmp.eq.s32.totalorder %s57, 0
      %s60 = sadd.s32 %s59, 1
      %s61 = scalar_select %p58, %s59, %s60
      %p64 = pneg %p58
      %p65 = scmp.eq.s32.totalorder %s37, 1
      %p66 = por %p64, %p65
      %p67 = scmp.ne.s32.totalorder %s59, %s62
      %p68 = scmp.eq.s32.totalorder %s37, 0
      %p69 = por %p67, %p68
      %p70 = scmp.ne.s32.totalorder %s59, %s62
      %p71 = scmp.eq.s32.totalorder %s42, 1
      %p72 = por %p70, %p71
      %p73 = scmp.ne.s32.totalorder %s62, %s63
      %p74 = scmp.eq.s32.totalorder %s42, 0
      %p75 = por %p73, %p74
      %p76 = scmp.ne.s32.totalorder %s62, %s63
      %p77 = scmp.eq.s32.totalorder %s43, 1
      %p78 = por %p76, %p77
      %p80 = scmp.ne.s32.totalorder %s63, %s79
      %p81 = scmp.eq.s32.totalorder %s43, 0
      %p82 = por %p80, %p81
      %s83 = ssub.s32 %s44, %s56
      %p84 = scmp.eq.s32.totalorder %s83, 0
      %s86 = sadd.s32 %s85, 1
      %s87 = scalar_select %p84, %s85, %s86
      %p90 = pneg %p84
      %p91 = scmp.eq.s32.totalorder %s37, 1
      %p92 = por %p90, %p91
      %p93 = scmp.ne.s32.totalorder %s85, %s88
      %p94 = scmp.eq.s32.totalorder %s37, 0
      %p95 = por %p93, %p94
      %p96 = scmp.ne.s32.totalorder %s85, %s88
      %p97 = scmp.eq.s32.totalorder %s42, 1
      %p98 = por %p96, %p97
      %p99 = scmp.ne.s32.totalorder %s88, %s89
      %p100 = scmp.eq.s32.totalorder %s42, 0
      %p101 = por %p99, %p100
      %p102 = scmp.ne.s32.totalorder %s88, %s89
      %p103 = scmp.eq.s32.totalorder %s43, 1
      %p104 = por %p102, %p103
      %p106 = scmp.ne.s32.totalorder %s89, %s105
      %p107 = scmp.eq.s32.totalorder %s43, 0
      %p108 = por %p106, %p107
      %s109 = ssub.s32 %s44, %s56
      %p110 = scmp.eq.s32.totalorder %s109, 0
      %s112 = sadd.s32 %s111, 1
      %s113 = scalar_select %p110, %s111, %s112
      %p116 = pneg %p110
      %p117 = scmp.eq.s32.totalorder %s37, 1
      %p118 = por %p116, %p117
      %p119 = scmp.ne.s32.totalorder %s111, %s114
      %p120 = scmp.eq.s32.totalorder %s37, 0
      %p121 = por %p119, %p120
      %p122 = scmp.ne.s32.totalorder %s111, %s114
      %p123 = scmp.eq.s32.totalorder %s42, 1
      %p124 = por %p122, %p123
      %p125 = scmp.ne.s32.totalorder %s114, %s115
      %p126 = scmp.eq.s32.totalorder %s42, 0
      %p127 = por %p125, %p126
      %p128 = scmp.ne.s32.totalorder %s114, %s115
      %p129 = scmp.eq.s32.totalorder %s43, 1
      %p130 = por %p128, %p129
      %p132 = scmp.ne.s32.totalorder %s115, %s131
      %p133 = scmp.eq.s32.totalorder %s43, 0
      %p134 = por %p132, %p133
      %s136 = sadd.s32 %s135, 1
      %p139 = scmp.eq.s32.totalorder %s37, 1
      %p140 = scmp.ne.s32.totalorder %s135, %s137
      %p141 = scmp.eq.s32.totalorder %s37, 0
      %p142 = por %p140, %p141
      %p143 = scmp.ne.s32.totalorder %s135, %s137
      %p144 = scmp.eq.s32.totalorder %s42, 1
      %p145 = por %p143, %p144
      %p146 = scmp.ne.s32.totalorder %s137, %s138
      %p147 = scmp.eq.s32.totalorder %s42, 0
      %p148 = por %p146, %p147
      %p149 = scmp.ne.s32.totalorder %s137, %s138
      %p150 = scmp.eq.s32.totalorder %s43, 1
      %p151 = por %p149, %p150
      %p153 = scmp.ne.s32.totalorder %s138, %s152
      %p154 = scmp.eq.s32.totalorder %s43, 0
      %p155 = por %p153, %p154
      %s157 = sadd.s32 %s156, 1
      %p160 = scmp.eq.s32.totalorder %s37, 1
      %p161 = scmp.ne.s32.totalorder %s156, %s158
      %p162 = scmp.eq.s32.totalorder %s37, 0
      %p163 = por %p161, %p162
      %p164 = scmp.ne.s32.totalorder %s156, %s158
      %p165 = scmp.eq.s32.totalorder %s42, 1
      %p166 = por %p164, %p165
      %p167 = scmp.ne.s32.totalorder %s158, %s159
      %p168 = scmp.eq.s32.totalorder %s42, 0
      %p169 = por %p167, %p168
      %p170 = scmp.ne.s32.totalorder %s158, %s159
      %p171 = scmp.eq.s32.totalorder %s43, 1
      %p172 = por %p170, %p171
      %p174 = scmp.ne.s32.totalorder %s159, %s173
      %p175 = scmp.eq.s32.totalorder %s43, 0
      %p176 = por %p174, %p175
      %s178 = sadd.s32 %s177, 1
      %p181 = scmp.eq.s32.totalorder %s37, 1
      %p182 = scmp.ne.s32.totalorder %s177, %s179
      %p183 = scmp.eq.s32.totalorder %s37, 0
      %p184 = por %p182, %p183
      %p185 = scmp.ne.s32.totalorder %s177, %s179
      %p186 = scmp.eq.s32.totalorder %s42, 1
      %p187 = por %p185, %p186
      %p188 = scmp.ne.s32.totalorder %s179, %s180
      %p189 = scmp.eq.s32.totalorder %s42, 0
      %p190 = por %p188, %p189
      %p191 = scmp.ne.s32.totalorder %s179, %s180
      %p192 = scmp.eq.s32.totalorder %s43, 1
      %p193 = por %p191, %p192
      %p195 = scmp.ne.s32.totalorder %s180, %s194
      %p196 = scmp.eq.s32.totalorder %s43, 0
      %p197 = por %p195, %p196
      %s199 = sadd.s32 %s198, 1
      %p202 = scmp.eq.s32.totalorder %s37, 1
      %p203 = scmp.ne.s32.totalorder %s198, %s200
      %p204 = scmp.eq.s32.totalorder %s37, 0
      %p205 = por %p203, %p204
      %p206 = scmp.ne.s32.totalorder %s198, %s200
      %p207 = scmp.eq.s32.totalorder %s42, 1
      %p208 = por %p206, %p207
      %p209 = scmp.ne.s32.totalorder %s200, %s201
      %p210 = scmp.eq.s32.totalorder %s42, 0
      %p211 = por %p209, %p210
      %p212 = scmp.ne.s32.totalorder %s200, %s201
      %p213 = scmp.eq.s32.totalorder %s43, 1
      %p214 = por %p212, %p213
      %p216 = scmp.ne.s32.totalorder %s201, %s215
      %p217 = scmp.eq.s32.totalorder %s43, 0
      %p218 = por %p216, %p217
      %s220 = sadd.s32 %s219, 1
      %p223 = scmp.eq.s32.totalorder %s37, 1
      %p224 = scmp.ne.s32.totalorder %s219, %s221
      %p225 = scmp.eq.s32.totalorder %s37, 0
      %p226 = por %p224, %p225
      %p227 = scmp.ne.s32.totalorder %s219, %s221
      %p228 = scmp.eq.s32.totalorder %s42, 1
      %p229 = por %p227, %p228
      %p230 = scmp.ne.s32.totalorder %s221, %s222
      %p231 = scmp.eq.s32.totalorder %s42, 0
      %p232 = por %p230, %p231
      %p233 = scmp.ne.s32.totalorder %s221, %s222
      %p234 = scmp.eq.s32.totalorder %s43, 1
      %p235 = por %p233, %p234
      %p237 = scmp.ne.s32.totalorder %s222, %s236
      %p238 = scmp.eq.s32.totalorder %s43, 0
      %p239 = por %p237, %p238
      %s241 = sadd.s32 %s240, 1
      %p244 = scmp.eq.s32.totalorder %s37, 1
      %p245 = scmp.ne.s32.totalorder %s240, %s242
      %p246 = scmp.eq.s32.totalorder %s37, 0
      %p247 = por %p245, %p246
      %p248 = scmp.ne.s32.totalorder %s240, %s242
      %p249 = scmp.eq.s32.totalorder %s42, 1
      %p250 = por %p248, %p249
      %p251 = scmp.ne.s32.totalorder %s242, %s243
      %p252 = scmp.eq.s32.totalorder %s42, 0
      %p253 = por %p251, %p252
      %p254 = scmp.ne.s32.totalorder %s242, %s243
      %p255 = scmp.eq.s32.totalorder %s43, 1
      %p256 = por %p254, %p255
      %p258 = scmp.ne.s32.totalorder %s243, %s257
      %p259 = scmp.eq.s32.totalorder %s43, 0
      %p260 = por %p258, %p259
      %s262 = sadd.s32 %s261, 1
      %p265 = scmp.eq.s32.totalorder %s37, 1
      %p266 = scmp.ne.s32.totalorder %s261, %s263
      %p267 = scmp.eq.s32.totalorder %s37, 0
      %p268 = por %p266, %p267
      %p269 = scmp.ne.s32.totalorder %s261, %s263
      %p270 = scmp.eq.s32.totalorder %s42, 1
      %p271 = por %p269, %p270
      %p272 = scmp.ne.s32.totalorder %s263, %s264
      %p273 = scmp.eq.s32.totalorder %s42, 0
      %p274 = por %p272, %p273
      %p275 = scmp.ne.s32.totalorder %s263, %s264
      %p276 = scmp.eq.s32.totalorder %s43, 1
      %p277 = por %p275, %p276
      %p279 = scmp.ne.s32.totalorder %s264, %s278
      %p280 = scmp.eq.s32.totalorder %s43, 0
      %p281 = por %p279, %p280
      %s283 = sadd.s32 %s282, 1
      %p286 = scmp.eq.s32.totalorder %s37, 1
      %p287 = scmp.ne.s32.totalorder %s282, %s284
      %p288 = scmp.eq.s32.totalorder %s37, 0
      %p289 = por %p287, %p288
      %p290 = scmp.ne.s32.totalorder %s282, %s284
      %p291 = scmp.eq.s32.totalorder %s42, 1
      %p292 = por %p290, %p291
      %p293 = scmp.ne.s32.totalorder %s284, %s285
      %p294 = scmp.eq.s32.totalorder %s42, 0
      %p295 = por %p293, %p294
      %p296 = scmp.ne.s32.totalorder %s284, %s285
      %p297 = scmp.eq.s32.totalorder %s43, 1
      %p298 = por %p296, %p297
      %p300 = scmp.ne.s32.totalorder %s285, %s299
      %p301 = scmp.eq.s32.totalorder %s43, 0
      %p302 = por %p300, %p301
      %s304 = sadd.s32 %s303, 1
      %p307 = scmp.eq.s32.totalorder %s37, 1
      %p308 = scmp.ne.s32.totalorder %s303, %s305
      %p309 = scmp.eq.s32.totalorder %s37, 0
      %p310 = por %p308, %p309
      %p311 = scmp.ne.s32.totalorder %s303, %s305
      %p312 = scmp.eq.s32.totalorder %s42, 1
      %p313 = por %p311, %p312
      %p314 = scmp.ne.s32.totalorder %s305, %s306
      %p315 = scmp.eq.s32.totalorder %s42, 0
      %p316 = por %p314, %p315
      %p317 = scmp.ne.s32.totalorder %s305, %s306
      %p318 = scmp.eq.s32.totalorder %s43, 1
      %p319 = por %p317, %p318
      %p321 = scmp.ne.s32.totalorder %s306, %s320
      %p322 = scmp.eq.s32.totalorder %s43, 0
      %p323 = por %p321, %p322
      %s325 = sadd.s32 %s324, 1
      %p328 = scmp.eq.s32.totalorder %s37, 1
      %p329 = scmp.ne.s32.totalorder %s324, %s326
      %p330 = scmp.eq.s32.totalorder %s37, 0
      %p331 = por %p329, %p330
      %p332 = scmp.ne.s32.totalorder %s324, %s326
      %p333 = scmp.eq.s32.totalorder %s42, 1
      %p334 = por %p332, %p333
      %p335 = scmp.ne.s32.totalorder %s326, %s327
      %p336 = scmp.eq.s32.totalorder %s42, 0
      %p337 = por %p335, %p336
      %p338 = scmp.ne.s32.totalorder %s326, %s327
      %p339 = scmp.eq.s32.totalorder %s43, 1
      %p340 = por %p338, %p339
      %p342 = scmp.ne.s32.totalorder %s327, %s341
      %p343 = scmp.eq.s32.totalorder %s43, 0
      %p344 = por %p342, %p343
      %s346 = sadd.s32 %s345, 1
      %p349 = scmp.eq.s32.totalorder %s37, 1
      %p350 = scmp.ne.s32.totalorder %s345, %s347
      %p351 = scmp.eq.s32.totalorder %s37, 0
      %p352 = por %p350, %p351
      %p353 = scmp.ne.s32.totalorder %s345, %s347
      %p354 = scmp.eq.s32.totalorder %s42, 1
      %p355 = por %p353, %p354
      %p356 = scmp.ne.s32.totalorder %s347, %s348
      %p357 = scmp.eq.s32.totalorder %s42, 0
      %p358 = por %p356, %p357
      %p359 = scmp.ne.s32.totalorder %s347, %s348
      %p360 = scmp.eq.s32.totalorder %s43, 1
      %p361 = por %p359, %p360
      %p363 = scmp.ne.s32.totalorder %s348, %s362
      %p364 = scmp.eq.s32.totalorder %s43, 0
      %p365 = por %p363, %p364
      %s367 = sadd.s32 %s366, 1
      %p370 = scmp.eq.s32.totalorder %s37, 1
      %p371 = scmp.ne.s32.totalorder %s366, %s368
      %p372 = scmp.eq.s32.totalorder %s37, 0
      %p373 = por %p371, %p372
      %p374 = scmp.ne.s32.totalorder %s366, %s368
      %p375 = scmp.eq.s32.totalorder %s42, 1
      %p376 = por %p374, %p375
      %p377 = scmp.ne.s32.totalorder %s368, %s369
      %p378 = scmp.eq.s32.totalorder %s42, 0
      %p379 = por %p377, %p378
      %p380 = scmp.ne.s32.totalorder %s368, %s369
      %p381 = scmp.eq.s32.totalorder %s43, 1
      %p382 = por %p380, %p381
      %p384 = scmp.ne.s32.totalorder %s369, %s383
      %p385 = scmp.eq.s32.totalorder %s43, 0
      %p386 = por %p384, %p385
      %s388 = sadd.s32 %s387, 1
      %p391 = scmp.eq.s32.totalorder %s37, 1
      %p392 = scmp.ne.s32.totalorder %s387, %s389
      %p393 = scmp.eq.s32.totalorder %s37, 0
      %p394 = por %p392, %p393
      %p395 = scmp.ne.s32.totalorder %s387, %s389
      %p396 = scmp.eq.s32.totalorder %s42, 1
      %p397 = por %p395, %p396
      %p398 = scmp.ne.s32.totalorder %s389, %s390
      %p399 = scmp.eq.s32.totalorder %s42, 0
      %p400 = por %p398, %p399
      %p401 = scmp.ne.s32.totalorder %s389, %s390
      %p402 = scmp.eq.s32.totalorder %s43, 1
      %p403 = por %p401, %p402
      %p405 = scmp.ne.s32.totalorder %s390, %s404
      %p406 = scmp.eq.s32.totalorder %s43, 0
      %p407 = por %p405, %p406
      %s409 = sadd.s32 %s408, 1
      %p412 = scmp.eq.s32.totalorder %s37, 1
      %p413 = scmp.ne.s32.totalorder %s408, %s410
      %p414 = scmp.eq.s32.totalorder %s37, 0
      %p415 = por %p413, %p414
      %p416 = scmp.ne.s32.totalorder %s408, %s410
      %p417 = scmp.eq.s32.totalorder %s42, 1
      %p418 = por %p416, %p417
      %p419 = scmp.ne.s32.totalorder %s410, %s411
      %p420 = scmp.eq.s32.totalorder %s42, 0
      %p421 = por %p419, %p420
      %p422 = scmp.ne.s32.totalorder %s410, %s411
      %p423 = scmp.eq.s32.totalorder %s43, 1
      %p424 = por %p422, %p423
      %p426 = scmp.ne.s32.totalorder %s411, %s425
      %p427 = scmp.eq.s32.totalorder %s43, 0
      %p428 = por %p426, %p427
      %s430 = sadd.s32 %s429, 1
      %p433 = scmp.eq.s32.totalorder %s37, 1
      %p434 = scmp.ne.s32.totalorder %s429, %s431
      %p435 = scmp.eq.s32.totalorder %s37, 0
      %p436 = por %p434, %p435
      %p437 = scmp.ne.s32.totalorder %s429, %s431
      %p438 = scmp.eq.s32.totalorder %s42, 1
      %p439 = por %p437, %p438
      %p440 = scmp.ne.s32.totalorder %s431, %s432
      %p441 = scmp.eq.s32.totalorder %s42, 0
      %p442 = por %p440, %p441
      %p443 = scmp.ne.s32.totalorder %s431, %s432
      %p444 = scmp.eq.s32.totalorder %s43, 1
      %p445 = por %p443, %p444
      %p447 = scmp.ne.s32.totalorder %s432, %s446
      %p448 = scmp.eq.s32.totalorder %s43, 0
      %p449 = por %p447, %p448
      %s450 = ssub.s32 %s44, %s56
      %s451 = ssub.s32 %s45, %s52
      %s452 = sor.u32 %s450, %s451
      %p453 = scmp.eq.s32.totalorder %s452, 0
      %s455 = sadd.s32 %s454, 1
      %s456 = scalar_select %p453, %s454, %s455
      %p459 = pneg %p453
      %p460 = scmp.eq.s32.totalorder %s37, 1
      %p461 = por %p459, %p460
      %p462 = scmp.ne.s32.totalorder %s454, %s457
      %p463 = scmp.eq.s32.totalorder %s37, 0
      %p464 = por %p462, %p463
      %p465 = scmp.ne.s32.totalorder %s454, %s457
      %p466 = scmp.eq.s32.totalorder %s42, 1
      %p467 = por %p465, %p466
      %p468 = scmp.ne.s32.totalorder %s457, %s458
      %p469 = scmp.eq.s32.totalorder %s42, 0
      %p470 = por %p468, %p469
      %p471 = scmp.ne.s32.totalorder %s457, %s458
      %p472 = scmp.eq.s32.totalorder %s43, 1
      %p473 = por %p471, %p472
      %p475 = scmp.ne.s32.totalorder %s458, %s474
      %p476 = scmp.eq.s32.totalorder %s43, 0
      %p477 = por %p475, %p476
      %p478 = scmp.le.s32.totalorder 1, %s37
      %p479 = scmp.lt.s32.totalorder %s37, 3
      %p480 = pnand %p478, %p479
      %p481 = pneg %p480
      // Predicated region
      $region9: #{tpu_custom_call.1} parent=5 // pred_check
        _
      $region10: #{tpu_custom_call.1} parent=5 // pred_check_branch
        %483 = sbr.rel (%p480) target = $region12
      $region11: #{tpu_custom_call.1} parent=5 // pred_region
        %s484 = ssub.s32 %s37, 1
        // Predicated region
        $region13: #{tpu_custom_call.1} parent=11 // pred_check
          %p485 = pneg %p148
        $region14: #{tpu_custom_call.1} parent=11 // pred_check_branch
          %487 = sbr.rel (%p485) target = $region16
        $region15: #{tpu_custom_call.1} parent=11 // pred_region
          _
        $region16: #{tpu_custom_call.1} parent=11 // pred_fallthru
          _
        // Predicated region
        $region17: #{tpu_custom_call.1} parent=11 // pred_check
          %p488 = pneg %p169
        $region18: #{tpu_custom_call.1} parent=11 // pred_check_branch
          %490 = sbr.rel (%p488) target = $region20
        $region19: #{tpu_custom_call.1} parent=11 // pred_region
          %s492 = ssub.s32 1024, 1024
          %493 = vsyncadd [#allocation11], %s492
          %s494 = sshll.u32 [#allocation10], 4
          %s495 = int_to_ptr.vmem [resolvable:$true] %s494
          %500 = dma.hbm_to_vmem [thread:$0]  %s4, 1024, %s495, [#allocation11], 64, 64, 4
        $region20: #{tpu_custom_call.1} parent=11 // pred_fallthru
          _
        // Predicated region
        $region21: #{tpu_custom_call.1} parent=11 // pred_check
          %p501 = pneg %p190
        $region22: #{tpu_custom_call.1} parent=11 // pred_check_branch
          %503 = sbr.rel (%p501) target = $region24
        $region23: #{tpu_custom_call.1} parent=11 // pred_region
          _
        $region24: #{tpu_custom_call.1} parent=11 // pred_fallthru
          _
        // Predicated region
        $region25: #{tpu_custom_call.1} parent=11 // pred_check
          %p504 = pneg %p211
        $region26: #{tpu_custom_call.1} parent=11 // pred_check_branch
          %506 = sbr.rel (%p504) target = $region28
        $region27: #{tpu_custom_call.1} parent=11 // pred_region
          %s508 = ssub.s32 1024, 1024
          %509 = vsyncadd [#allocation11], %s508
          %s510 = sshll.u32 [#allocation12], 4
          %s511 = int_to_ptr.vmem [resolvable:$true] %s510
          %516 = dma.hbm_to_vmem [thread:$0]  %s6, 1024, %s511, [#allocation11], 64, 64, 4
        $region28: #{tpu_custom_call.1} parent=11 // pred_fallthru
          _
        // Predicated region
        $region29: #{tpu_custom_call.1} parent=11 // pred_check
          %p517 = pneg %p232
        $region30: #{tpu_custom_call.1} parent=11 // pred_check_branch
          %519 = sbr.rel (%p517) target = $region32
        $region31: #{tpu_custom_call.1} parent=11 // pred_region
          _
        $region32: #{tpu_custom_call.1} parent=11 // pred_fallthru
          _
        // Predicated region
        $region33: #{tpu_custom_call.1} parent=11 // pred_check
          %p520 = pneg %p253
        $region34: #{tpu_custom_call.1} parent=11 // pred_check_branch
          %522 = sbr.rel (%p520) target = $region36
        $region35: #{tpu_custom_call.1} parent=11 // pred_region
          _
        $region36: #{tpu_custom_call.1} parent=11 // pred_fallthru
          _
        // Predicated region
        $region37: #{tpu_custom_call.1} parent=11 // pred_check
          %p523 = pneg %p274
        $region38: #{tpu_custom_call.1} parent=11 // pred_check_branch
          %525 = sbr.rel (%p523) target = $region40
        $region39: #{tpu_custom_call.1} parent=11 // pred_region
          _
        $region40: #{tpu_custom_call.1} parent=11 // pred_fallthru
          _
        // Predicated region
        $region41: #{tpu_custom_call.1} parent=11 // pred_check
          %p526 = pneg %p295
        $region42: #{tpu_custom_call.1} parent=11 // pred_check_branch
          %528 = sbr.rel (%p526) target = $region44
        $region43: #{tpu_custom_call.1} parent=11 // pred_region
          %s530 = ssub.s32 1024, 1024
          %531 = vsyncadd [#allocation14], %s530
          %s532 = sshll.u32 [#allocation13], 4
          %s533 = int_to_ptr.vmem [resolvable:$true] %s532
          %538 = dma.hbm_to_vmem [thread:$0]  %s10, 1024, %s533, [#allocation14], 64, 64, 4
        $region44: #{tpu_custom_call.1} parent=11 // pred_fallthru
          _
        // Predicated region
        $region45: #{tpu_custom_call.1} parent=11 // pred_check
          %p539 = pneg %p316
        $region46: #{tpu_custom_call.1} parent=11 // pred_check_branch
          %541 = sbr.rel (%p539) target = $region48
        $region47: #{tpu_custom_call.1} parent=11 // pred_region
          _
        $region48: #{tpu_custom_call.1} parent=11 // pred_fallthru
          _
        // Predicated region
        $region49: #{tpu_custom_call.1} parent=11 // pred_check
          %p542 = pneg %p337
        $region50: #{tpu_custom_call.1} parent=11 // pred_check_branch
          %544 = sbr.rel (%p542) target = $region52
        $region51: #{tpu_custom_call.1} parent=11 // pred_region
          %s546 = ssub.s32 1024, 1024
          %547 = vsyncadd [#allocation14], %s546
          %s548 = sshll.u32 [#allocation15], 4
          %s549 = int_to_ptr.vmem [resolvable:$true] %s548
          %554 = dma.hbm_to_vmem [thread:$0]  %s12, 1024, %s549, [#allocation14], 64, 64, 4
        $region52: #{tpu_custom_call.1} parent=11 // pred_fallthru
          _
        // Predicated region
        $region53: #{tpu_custom_call.1} parent=11 // pred_check
          %p555 = pneg %p358
        $region54: #{tpu_custom_call.1} parent=11 // pred_check_branch
          %557 = sbr.rel (%p555) target = $region56
        $region55: #{tpu_custom_call.1} parent=11 // pred_region
          %s559 = ssub.s32 16, 16
          %560 = vsyncadd [#allocation17], %s559
          %s562 = sshll.u32 [#allocation16], 4
          %s563 = int_to_ptr.vmem [resolvable:$true] %s562
          %565 = dma.hbm_to_vmem [thread:$0]  %s13, 16, %s563, [#allocation17]
        $region56: #{tpu_custom_call.1} parent=11 // pred_fallthru
          _
        // Predicated region
        $region57: #{tpu_custom_call.1} parent=11 // pred_check
          %p566 = pneg %p379
        $region58: #{tpu_custom_call.1} parent=11 // pred_check_branch
          %568 = sbr.rel (%p566) target = $region60
        $region59: #{tpu_custom_call.1} parent=11 // pred_region
          _
        $region60: #{tpu_custom_call.1} parent=11 // pred_fallthru
          _
        // Predicated region
        $region61: #{tpu_custom_call.1} parent=11 // pred_check
          %p569 = pneg %p400
        $region62: #{tpu_custom_call.1} parent=11 // pred_check_branch
          %571 = sbr.rel (%p569) target = $region64
        $region63: #{tpu_custom_call.1} parent=11 // pred_region
          _
        $region64: #{tpu_custom_call.1} parent=11 // pred_fallthru
          _
        // Predicated region
        $region65: #{tpu_custom_call.1} parent=11 // pred_check
          %p572 = pneg %p421
        $region66: #{tpu_custom_call.1} parent=11 // pred_check_branch
          %574 = sbr.rel (%p572) target = $region68
        $region67: #{tpu_custom_call.1} parent=11 // pred_region
          %s576 = ssub.s32 2048, 2048
          %577 = vsyncadd [#allocation17], %s576
          %s578 = sshll.u32 [#allocation18], 4
          %s579 = int_to_ptr.vmem [resolvable:$true] %s578
          %584 = dma.hbm_to_vmem [thread:$0]  %s16, 2048, %s579, [#allocation17], 128, 128, 8
        $region68: #{tpu_custom_call.1} parent=11 // pred_fallthru
          _
        // Predicated region
        $region69: #{tpu_custom_call.1} parent=11 // pred_check
          %p585 = pneg %p442
        $region70: #{tpu_custom_call.1} parent=11 // pred_check_branch
          %587 = sbr.rel (%p585) target = $region72
        $region71: #{tpu_custom_call.1} parent=11 // pred_region
          _
        $region72: #{tpu_custom_call.1} parent=11 // pred_fallthru
          _
      $region12: #{tpu_custom_call.1} parent=5 // pred_fallthru
        _
      %p588 = scmp.lt.s32.totalorder %s37, 2
      // Predicated region
      $region73: #{tpu_custom_call.1} parent=5 // pred_check
        %p589 = pneg %p588
      $region74: #{tpu_custom_call.1} parent=5 // pred_check_branch
        %591 = sbr.rel (%p589) target = $region76
      $region75: #{tpu_custom_call.1} parent=5 // pred_region
        // Predicated region
        $region77: #{tpu_custom_call.1} parent=75 // pred_check
          %p592 = pneg %p69
        $region78: #{tpu_custom_call.1} parent=75 // pred_check_branch
          %594 = sbr.rel (%p592) target = $region80
        $region79: #{tpu_custom_call.1} parent=75 // pred_region
          %s595 = sand.u32 %s59, 1
          %s596 = scalar_lea.sflag [#allocation5], %s595
          %s597 = sand.u32 %s59, 1
          %s598 = smul.addr %s597, 8
          %s599 = scalar_lea.vmem [#allocation4], %s598
          %s601 = ssub.s32 128, 128
          %602 = vsyncadd %s596, %s601
          %s603 = smul.addr %s44, 128
          %s604 = scalar_lea.hbm %s0, %s603
          %s606 = sshll.u32 %s599, 4
          %s607 = int_to_ptr.vmem [resolvable:$true] %s606
          %609 = dma.hbm_to_vmem [thread:$0]  %s604, 128, %s607, %s596
        $region80: #{tpu_custom_call.1} parent=75 // pred_fallthru
          _
        // Predicated region
        $region81: #{tpu_custom_call.1} parent=75 // pred_check
          %p610 = pneg %p95
        $region82: #{tpu_custom_call.1} parent=75 // pred_check_branch
          %612 = sbr.rel (%p610) target = $region84
        $region83: #{tpu_custom_call.1} parent=75 // pred_region
          %s613 = sand.u32 %s37, 1
          %s614 = scalar_lea.sflag [#allocation8], %s613
          %s615 = sand.u32 %s85, 1
          %s616 = smul.addr %s615, 64
          %s617 = scalar_lea.vmem [#allocation7], %s616
          %s618 = smul.u32 8, %s44
          %s620 = ssub.s32 1024, 1024
          %621 = vsyncadd %s614, %s620
          %s622 = smul.addr %s618, 2
          %s623 = smul.addr %s622, 64
          %s624 = scalar_lea.hbm %s1, %s623
          %s625 = sshll.u32 %s617, 4
          %s626 = int_to_ptr.vmem [resolvable:$true] %s625
          %631 = dma.hbm_to_vmem [thread:$0]  %s624, 1024, %s626, %s614, 64, 64, 4
        $region84: #{tpu_custom_call.1} parent=75 // pred_fallthru
          _
        // Predicated region
        $region85: #{tpu_custom_call.1} parent=75 // pred_check
          %p632 = pneg %p121
        $region86: #{tpu_custom_call.1} parent=75 // pred_check_branch
          %634 = sbr.rel (%p632) target = $region88
        $region87: #{tpu_custom_call.1} parent=75 // pred_region
          %s635 = sand.u32 %s37, 1
          %s636 = scalar_lea.sflag [#allocation8], %s635
          %s637 = sand.u32 %s111, 1
          %s638 = smul.addr %s637, 8
          %s639 = scalar_lea.vmem [#allocation9], %s638
          %s641 = ssub.s32 128, 128
          %642 = vsyncadd %s636, %s641
          %s643 = smul.addr %s44, 128
          %s644 = scalar_lea.hbm %s2, %s643
          %s646 = sshll.u32 %s639, 4
          %s647 = int_to_ptr.vmem [resolvable:$true] %s646
          %649 = dma.hbm_to_vmem [thread:$0]  %s644, 128, %s647, %s636
        $region88: #{tpu_custom_call.1} parent=75 // pred_fallthru
          _
      $region76: #{tpu_custom_call.1} parent=5 // pred_fallthru
        _
      %p650 = scmp.le.s32.totalorder 1, %s37
      %p651 = scmp.lt.s32.totalorder %s37, 3
      %p652 = pnand %p650, %p651
      %p653 = pneg %p652
      // Predicated region
      $region89: #{tpu_custom_call.1} parent=5 // pred_check
        _
      $region90: #{tpu_custom_call.1} parent=5 // pred_check_branch
        %655 = sbr.rel (%p652) target = $region92
      $region91: #{tpu_custom_call.1} parent=5 // pred_region
        %s656 = ssub.s32 %s37, 1
        %s657 = sand.u32 %s62, 1
        %s658 = scalar_lea.sflag [#allocation5], %s657
        %s659 = sand.u32 %s62, 1
        %s660 = smul.addr %s659, 8
        %s661 = scalar_lea.vmem [#allocation4], %s660
        // Predicated region
        $region93: #{tpu_custom_call.1} parent=91 // pred_check
          %p662 = pneg %p75
        $region94: #{tpu_custom_call.1} parent=91 // pred_check_branch
          %664 = sbr.rel (%p662) target = $region96
        $region95: #{tpu_custom_call.1} parent=91 // pred_region
          %665 = dma.done %s658, 128
        $region96: #{tpu_custom_call.1} parent=91 // pred_fallthru
          _
        %s666 = sand.u32 %s42, 1
        %s667 = scalar_lea.sflag [#allocation8], %s666
        %s668 = sand.u32 %s88, 1
        %s669 = smul.addr %s668, 64
        %s670 = scalar_lea.vmem [#allocation7], %s669
        // Predicated region
        $region97: #{tpu_custom_call.1} parent=91 // pred_check
          %p671 = pneg %p101
        $region98: #{tpu_custom_call.1} parent=91 // pred_check_branch
          %673 = sbr.rel (%p671) target = $region100
        $region99: #{tpu_custom_call.1} parent=91 // pred_region
          %674 = dma.done %s667, 1024
        $region100: #{tpu_custom_call.1} parent=91 // pred_fallthru
          _
        %s675 = sand.u32 %s42, 1
        %s676 = scalar_lea.sflag [#allocation8], %s675
        %s677 = sand.u32 %s114, 1
        %s678 = smul.addr %s677, 8
        %s679 = scalar_lea.vmem [#allocation9], %s678
        // Predicated region
        $region101: #{tpu_custom_call.1} parent=91 // pred_check
          %p680 = pneg %p127
        $region102: #{tpu_custom_call.1} parent=91 // pred_check_branch
          %682 = sbr.rel (%p680) target = $region104
        $region103: #{tpu_custom_call.1} parent=91 // pred_region
          %683 = dma.done %s676, 128
        $region104: #{tpu_custom_call.1} parent=91 // pred_fallthru
          _
        // Predicated region
        $region105: #{tpu_custom_call.1} parent=91 // pred_check
          %p684 = pneg %p169
        $region106: #{tpu_custom_call.1} parent=91 // pred_check_branch
          %686 = sbr.rel (%p684) target = $region108
        $region107: #{tpu_custom_call.1} parent=91 // pred_region
          %687 = dma.done [#allocation11], 1024
        $region108: #{tpu_custom_call.1} parent=91 // pred_fallthru
          _
        // Predicated region
        $region109: #{tpu_custom_call.1} parent=91 // pred_check
          %p688 = pneg %p211
        $region110: #{tpu_custom_call.1} parent=91 // pred_check_branch
          %690 = sbr.rel (%p688) target = $region112
        $region111: #{tpu_custom_call.1} parent=91 // pred_region
          %691 = dma.done [#allocation11], 1024
        $region112: #{tpu_custom_call.1} parent=91 // pred_fallthru
          _
        // Predicated region
        $region113: #{tpu_custom_call.1} parent=91 // pred_check
          %p692 = pneg %p295
        $region114: #{tpu_custom_call.1} parent=91 // pred_check_branch
          %694 = sbr.rel (%p692) target = $region116
        $region115: #{tpu_custom_call.1} parent=91 // pred_region
          %695 = dma.done [#allocation14], 1024
        $region116: #{tpu_custom_call.1} parent=91 // pred_fallthru
          _
        // Predicated region
        $region117: #{tpu_custom_call.1} parent=91 // pred_check
          %p696 = pneg %p337
        $region118: #{tpu_custom_call.1} parent=91 // pred_check_branch
          %698 = sbr.rel (%p696) target = $region120
        $region119: #{tpu_custom_call.1} parent=91 // pred_region
          %699 = dma.done [#allocation14], 1024
        $region120: #{tpu_custom_call.1} parent=91 // pred_fallthru
          _
        // Predicated region
        $region121: #{tpu_custom_call.1} parent=91 // pred_check
          %p700 = pneg %p358
        $region122: #{tpu_custom_call.1} parent=91 // pred_check_branch
          %702 = sbr.rel (%p700) target = $region124
        $region123: #{tpu_custom_call.1} parent=91 // pred_region
          %703 = dma.done [#allocation17], 16
        $region124: #{tpu_custom_call.1} parent=91 // pred_fallthru
          _
        // Predicated region
        $region125: #{tpu_custom_call.1} parent=91 // pred_check
          %p704 = pneg %p421
        $region126: #{tpu_custom_call.1} parent=91 // pred_check_branch
          %706 = sbr.rel (%p704) target = $region128
        $region127: #{tpu_custom_call.1} parent=91 // pred_region
          %707 = dma.done [#allocation17], 2048
        $region128: #{tpu_custom_call.1} parent=91 // pred_fallthru
          _
        %s708 = sand.u32 %s62, 1
        %s709 = scalar_lea.sflag [#allocation5], %s708
        %s710 = sand.u32 %s62, 1
        %s711 = smul.addr %s710, 8
        %s712 = scalar_lea.vmem [#allocation4], %s711
        %p713 = pneg %p75
        %p714 = pneg %p72
        %s715 = sand.u32 %s42, 1
        %s716 = scalar_lea.sflag [#allocation8], %s715
        %s717 = sand.u32 %s88, 1
        %s718 = smul.addr %s717, 64
        %s719 = scalar_lea.vmem [#allocation7], %s718
        %p720 = pneg %p101
        %p721 = pneg %p98
        %s722 = sand.u32 %s42, 1
        %s723 = scalar_lea.sflag [#allocation8], %s722
        %s724 = sand.u32 %s114, 1
        %s725 = smul.addr %s724, 8
        %s726 = scalar_lea.vmem [#allocation9], %s725
        %p727 = pneg %p127
        %p728 = pneg %p124
        %p729 = pneg %p148
        %p730 = pneg %p145
        %p731 = pneg %p169
        %p732 = pneg %p166
        %p733 = pneg %p190
        %p734 = pneg %p187
        %p735 = pneg %p211
        %p736 = pneg %p208
        %p737 = pneg %p232
        %p738 = pneg %p229
        %p739 = pneg %p253
        %p740 = pneg %p250
        %p741 = pneg %p274
        %p742 = pneg %p271
        %p743 = pneg %p295
        %p744 = pneg %p292
        %p745 = pneg %p316
        %p746 = pneg %p313
        %p747 = pneg %p337
        %p748 = pneg %p334
        %p749 = pneg %p358
        %p750 = pneg %p355
        %p751 = pneg %p379
        %p752 = pneg %p376
        %p753 = pneg %p400
        %p754 = pneg %p397
        %p755 = pneg %p421
        %p756 = pneg %p418
        %p757 = pneg %p442
        %p758 = pneg %p439
        %p759 = pneg %p470
        %p760 = pneg %p467
        %s761 = sand.u32 %s457, 1
        %s762 = scalar_lea.sflag [#allocation6], %s761
        %s763 = sand.u32 %s457, 1
        %s764 = smul.addr %s763, 16
        %s765 = scalar_lea.vmem [#allocation19], %s764
        %s766 = smul.u32 8, %s46
        %s767 = smul.u32 2, %s47
        %p769 = scmp.eq.s32.totalorder %s47, 0
        // Predicated region
        $region129: #{tpu_custom_call.1} parent=91 // pred_check
          %p770 = pneg %p769
        $region130: #{tpu_custom_call.1} parent=91 // pred_check_branch
          %772 = sbr.rel (%p770) target = $region132
        $region131: #{tpu_custom_call.1} parent=91 // pred_region
          %v773 = vld [vmem:[%s661] sm:$0xff]
          %v774 = vpack.c.bf16 %v773, %v773
          %v775 = vld [vmem:[%s670] sm:$0xf]
          %v776 = vld [vmem:[%s670 + $0x4] sm:$0xf]
          %v777 = vld [vmem:[%s670 + $0x8] sm:$0xf]
          %v778 = vld [vmem:[%s670 + $0xc] sm:$0xf]
          %v779 = vld [vmem:[%s670 + $0x10] sm:$0xf]
          %v780 = vld [vmem:[%s670 + $0x14] sm:$0xf]
          %v781 = vld [vmem:[%s670 + $0x18] sm:$0xf]
          %v782 = vld [vmem:[%s670 + $0x1c] sm:$0xf]
          %v783 = vld [vmem:[%s670 + $0x20] sm:$0xf]
          %v784 = vld [vmem:[%s670 + $0x24] sm:$0xf]
          %v785 = vld [vmem:[%s670 + $0x28] sm:$0xf]
          %v786 = vld [vmem:[%s670 + $0x2c] sm:$0xf]
          %v787 = vld [vmem:[%s670 + $0x30] sm:$0xf]
          %v788 = vld [vmem:[%s670 + $0x34] sm:$0xf]
          %v789 = vld [vmem:[%s670 + $0x38] sm:$0xf]
          %v790 = vld [vmem:[%s670 + $0x3c] sm:$0xf]
          %v791 = vld [vmem:[%s679] sm:$0xff]
          %v792 = vld [vmem:[#allocation10] sm:$0xf]
          %v793 = vld [vmem:[#allocation10 + $0x4] sm:$0xf]
          %v794 = vld [vmem:[#allocation10 + $0x8] sm:$0xf]
          %v795 = vld [vmem:[#allocation10 + $0xc] sm:$0xf]
          %v796 = vld [vmem:[#allocation10 + $0x10] sm:$0xf]
          %v797 = vld [vmem:[#allocation10 + $0x14] sm:$0xf]
          %v798 = vld [vmem:[#allocation10 + $0x18] sm:$0xf]
          %v799 = vld [vmem:[#allocation10 + $0x1c] sm:$0xf]
          %v800 = vld [vmem:[#allocation10 + $0x20] sm:$0xf]
          %v801 = vld [vmem:[#allocation10 + $0x24] sm:$0xf]
          %v802 = vld [vmem:[#allocation10 + $0x28] sm:$0xf]
          %v803 = vld [vmem:[#allocation10 + $0x2c] sm:$0xf]
          %v804 = vld [vmem:[#allocation10 + $0x30] sm:$0xf]
          %v805 = vld [vmem:[#allocation10 + $0x34] sm:$0xf]
          %v806 = vld [vmem:[#allocation10 + $0x38] sm:$0xf]
          %v807 = vld [vmem:[#allocation10 + $0x3c] sm:$0xf]
          %v808 = vld [vmem:[%s5] sm:$0x1]
          %v810 = vlaneseq
          %v811 = vshrl.u32 %v810, 7
          %v812 = vsub.s32 0, %v811
          %v813 = vrot.slane %v808, %v812
          %v831 = vunpack.c.l.b16 %v775
          %v832 = vunpack.c.l.b16 %v776
          %v833 = vunpack.c.l.b16 %v777
          %v834 = vunpack.c.l.b16 %v778
          %v835 = vunpack.c.l.b16 %v779
          %v836 = vunpack.c.l.b16 %v780
          %v837 = vunpack.c.l.b16 %v781
          %v838 = vunpack.c.l.b16 %v782
          %v839 = vunpack.c.l.b16 %v783
          %v840 = vunpack.c.l.b16 %v784
          %v841 = vunpack.c.l.b16 %v785
          %v842 = vunpack.c.l.b16 %v786
          %v843 = vunpack.c.l.b16 %v787
          %v844 = vunpack.c.l.b16 %v788
          %v845 = vunpack.c.l.b16 %v789
          %v846 = vunpack.c.l.b16 %v790
          %v847 = vpack.c.b16 %v832, %v831
          %v848 = vpack.c.b16 %v834, %v833
          %v849 = vpack.c.b16 %v836, %v835
          %v850 = vpack.c.b16 %v838, %v837
          %v851 = vpack.c.b16 %v840, %v839
          %v852 = vpack.c.b16 %v842, %v841
          %v853 = vpack.c.b16 %v844, %v843
          %v854 = vpack.c.b16 %v846, %v845
          %v879 = vunpack.c.l.b16 %v792
          %v880 = vunpack.c.l.b16 %v793
          %v881 = vunpack.c.l.b16 %v794
          %v882 = vunpack.c.l.b16 %v795
          %v883 = vunpack.c.l.b16 %v796
          %v884 = vunpack.c.l.b16 %v797
          %v885 = vunpack.c.l.b16 %v798
          %v886 = vunpack.c.l.b16 %v799
          %v887 = vunpack.c.l.b16 %v800
          %v888 = vunpack.c.l.b16 %v801
          %v889 = vunpack.c.l.b16 %v802
          %v890 = vunpack.c.l.b16 %v803
          %v891 = vunpack.c.l.b16 %v804
          %v892 = vunpack.c.l.b16 %v805
          %v893 = vunpack.c.l.b16 %v806
          %v894 = vunpack.c.l.b16 %v807
          %v895 = vpack.c.b16 %v880, %v879
          %v896 = vpack.c.b16 %v882, %v881
          %v897 = vpack.c.b16 %v884, %v883
          %v898 = vpack.c.b16 %v886, %v885
          %v899 = vpack.c.b16 %v888, %v887
          %v900 = vpack.c.b16 %v890, %v889
          %v901 = vpack.c.b16 %v892, %v891
          %v902 = vpack.c.b16 %v894, %v893
          %911 = vmatprep.subr.bf16.mxu0 0
          %912 = vmatpush1.bf16.msra.mxu0 %v895
          %913 = vmatprep.subr.bf16.mxu0 0
          %914 = vmatpush1.bf16.msra.mxu0 %v896
          %915 = vmatprep.subr.bf16.mxu0 0
          %916 = vmatpush1.bf16.msra.mxu0 %v897
          %917 = vmatprep.subr.bf16.mxu0 0
          %918 = vmatpush1.bf16.msra.mxu0 %v898
          %919 = vmatprep.subr.bf16.mxu0 0
          %920 = vmatpush1.bf16.msra.mxu0 %v899
          %921 = vmatprep.subr.bf16.mxu0 0
          %922 = vmatpush1.bf16.msra.mxu0 %v900
          %923 = vmatprep.subr.bf16.mxu0 0
          %924 = vmatpush1.bf16.msra.mxu0 %v901
          %925 = vmatprep.subr.bf16.mxu0 0
          %926 = vmatpush1.bf16.msra.mxu0 %v902
          %927 = vmatprep.subr.bf16.mxu0 0
          %928 = vmatpush1.bf16.msra.mxu0 0
          %929 = vmatprep.subr.bf16.mxu0 0
          %930 = vmatpush1.bf16.msra.mxu0 0
          %931 = vmatprep.subr.bf16.mxu0 0
          %932 = vmatpush1.bf16.msra.mxu0 0
          %933 = vmatprep.subr.bf16.mxu0 0
          %934 = vmatpush1.bf16.msra.mxu0 0
          %935 = vmatprep.subr.bf16.mxu0 0
          %936 = vmatpush1.bf16.msra.mxu0 0
          %937 = vmatprep.subr.bf16.mxu0 0
          %938 = vmatpush1.bf16.msra.mxu0 0
          %939 = vmatprep.subr.bf16.mxu0 0
          %940 = vmatpush1.bf16.msra.mxu0 0
          %941 = vmatprep.subr.bf16.mxu0 0
          %942 = vmatpush1.bf16.msra.mxu0 0
          %943 = vmatprep.mubr.bf16.mxu0 0
          %944 = vmatmul.mubr.bf16.gmra.mrb[0].mxu0 %v847
          %v945 = vpop.f32.mrb[0].mxu0
          %v946 = vadd.f32 %v813, %v945
          %v947 = vpop.f32.mrb[0].mxu0
          %v948 = vpop.f32.mrb[0].mxu0
          %v949 = vadd.f32 %v813, %v948
          %v950 = vpop.f32.mrb[0].mxu0
          %951 = vmatprep.mubr.bf16.mxu0 0
          %952 = vmatmul.mubr.bf16.gmra.mrb[0].mxu0 %v848
          %v953 = vpop.f32.mrb[0].mxu0
          %v954 = vadd.f32 %v813, %v953
          %v955 = vpop.f32.mrb[0].mxu0
          %v956 = vpop.f32.mrb[0].mxu0
          %v957 = vadd.f32 %v813, %v956
          %v958 = vpop.f32.mrb[0].mxu0
          %959 = vmatprep.mubr.bf16.mxu0 0
          %960 = vmatmul.mubr.bf16.gmra.mrb[0].mxu0 %v849
          %v961 = vpop.f32.mrb[0].mxu0
          %v962 = vadd.f32 %v813, %v961
          %v963 = vpop.f32.mrb[0].mxu0
          %v964 = vpop.f32.mrb[0].mxu0
          %v965 = vadd.f32 %v813, %v964
          %v966 = vpop.f32.mrb[0].mxu0
          %967 = vmatprep.mubr.bf16.mxu0 0
          %968 = vmatmul.mubr.bf16.gmra.mrb[0].mxu0 %v850
          %v969 = vpop.f32.mrb[0].mxu0
          %v970 = vadd.f32 %v813, %v969
          %v971 = vpop.f32.mrb[0].mxu0
          %v972 = vpop.f32.mrb[0].mxu0
          %v973 = vadd.f32 %v813, %v972
          %v974 = vpop.f32.mrb[0].mxu0
          %975 = vmatprep.mubr.bf16.mxu0 0
          %976 = vmatmul.mubr.bf16.gmra.mrb[0].mxu0 %v851
          %v977 = vpop.f32.mrb[0].mxu0
          %v978 = vadd.f32 %v813, %v977
          %v979 = vpop.f32.mrb[0].mxu0
          %v980 = vpop.f32.mrb[0].mxu0
          %v981 = vadd.f32 %v813, %v980
          %v982 = vpop.f32.mrb[0].mxu0
          %983 = vmatprep.mubr.bf16.mxu0 0
          %984 = vmatmul.mubr.bf16.gmra.mrb[0].mxu0 %v852
          %v985 = vpop.f32.mrb[0].mxu0
          %v986 = vadd.f32 %v813, %v985
          %v987 = vpop.f32.mrb[0].mxu0
          %v988 = vpop.f32.mrb[0].mxu0
          %v989 = vadd.f32 %v813, %v988
          %v990 = vpop.f32.mrb[0].mxu0
          %991 = vmatprep.mubr.bf16.mxu0 0
          %992 = vmatmul.mubr.bf16.gmra.mrb[0].mxu0 %v853
          %v993 = vpop.f32.mrb[0].mxu0
          %v994 = vadd.f32 %v813, %v993
          %v995 = vpop.f32.mrb[0].mxu0
          %v996 = vpop.f32.mrb[0].mxu0
          %v997 = vadd.f32 %v813, %v996
          %v998 = vpop.f32.mrb[0].mxu0
          %999 = vmatprep.mubr.bf16.mxu0 0
          %1000 = vmatmul.mubr.bf16.gmra.mrb[0].mxu0 %v854
          %v1001 = vpop.f32.mrb[0].mxu0
          %v1002 = vadd.f32 %v813, %v1001
          %v1003 = vpop.f32.mrb[0].mxu0
          %v1004 = vpop.f32.mrb[0].mxu0
          %v1005 = vadd.f32 %v813, %v1004
          %v1006 = vpop.f32.mrb[0].mxu0
          %1007 = vdwg.mxu0
          %v1008 = vmax.f32 %v946, 0.0
          %v1009 = vmax.f32 %v949, 0.0
          %v1010 = vmax.f32 %v954, 0.0
          %v1011 = vmax.f32 %v957, 0.0
          %v1012 = vmax.f32 %v962, 0.0
          %v1013 = vmax.f32 %v965, 0.0
          %v1014 = vmax.f32 %v970, 0.0
          %v1015 = vmax.f32 %v973, 0.0
          %v1016 = vmax.f32 %v978, 0.0
          %v1017 = vmax.f32 %v981, 0.0
          %v1018 = vmax.f32 %v986, 0.0
          %v1019 = vmax.f32 %v989, 0.0
          %v1020 = vmax.f32 %v994, 0.0
          %v1021 = vmax.f32 %v997, 0.0
          %v1022 = vmax.f32 %v1002, 0.0
          %v1023 = vmax.f32 %v1005, 0.0
          %v1024 = vld [vmem:[#allocation12] sm:$0xf]
          %v1025 = vld [vmem:[#allocation12 + $0x4] sm:$0xf]
          %v1026 = vld [vmem:[#allocation12 + $0x8] sm:$0xf]
          %v1027 = vld [vmem:[#allocation12 + $0xc] sm:$0xf]
          %v1028 = vld [vmem:[#allocation12 + $0x10] sm:$0xf]
          %v1029 = vld [vmem:[#allocation12 + $0x14] sm:$0xf]
          %v1030 = vld [vmem:[#allocation12 + $0x18] sm:$0xf]
          %v1031 = vld [vmem:[#allocation12 + $0x1c] sm:$0xf]
          %v1032 = vld [vmem:[#allocation12 + $0x20] sm:$0xf]
          %v1033 = vld [vmem:[#allocation12 + $0x24] sm:$0xf]
          %v1034 = vld [vmem:[#allocation12 + $0x28] sm:$0xf]
          %v1035 = vld [vmem:[#allocation12 + $0x2c] sm:$0xf]
          %v1036 = vld [vmem:[#allocation12 + $0x30] sm:$0xf]
          %v1037 = vld [vmem:[#allocation12 + $0x34] sm:$0xf]
          %v1038 = vld [vmem:[#allocation12 + $0x38] sm:$0xf]
          %v1039 = vld [vmem:[#allocation12 + $0x3c] sm:$0xf]
          %v1040 = vld [vmem:[%s7] sm:$0x1]
          %v1042 = vlaneseq
          %v1043 = vshrl.u32 %v1042, 7
          %v1044 = vsub.s32 0, %v1043
          %v1045 = vrot.slane %v1040, %v1044
          %v1063 = vunpack.c.l.b16 %v1024
          %v1064 = vunpack.c.l.b16 %v1025
          %v1065 = vunpack.c.l.b16 %v1026
          %v1066 = vunpack.c.l.b16 %v1027
          %v1067 = vunpack.c.l.b16 %v1028
          %v1068 = vunpack.c.l.b16 %v1029
          %v1069 = vunpack.c.l.b16 %v1030
          %v1070 = vunpack.c.l.b16 %v1031
          %v1071 = vunpack.c.l.b16 %v1032
          %v1072 = vunpack.c.l.b16 %v1033
          %v1073 = vunpack.c.l.b16 %v1034
          %v1074 = vunpack.c.l.b16 %v1035
          %v1075 = vunpack.c.l.b16 %v1036
          %v1076 = vunpack.c.l.b16 %v1037
          %v1077 = vunpack.c.l.b16 %v1038
          %v1078 = vunpack.c.l.b16 %v1039
          %v1079 = vpack.c.b16 %v1064, %v1063
          %v1080 = vpack.c.b16 %v1066, %v1065
          %v1081 = vpack.c.b16 %v1068, %v1067
          %v1082 = vpack.c.b16 %v1070, %v1069
          %v1083 = vpack.c.b16 %v1072, %v1071
          %v1084 = vpack.c.b16 %v1074, %v1073
          %v1085 = vpack.c.b16 %v1076, %v1075
          %v1086 = vpack.c.b16 %v1078, %v1077
          %1095 = vmatprep.subr.bf16.mxu0 0
          %1096 = vmatpush1.bf16.msra.mxu0 %v1079
          %1097 = vmatprep.subr.bf16.mxu0 0
          %1098 = vmatpush1.bf16.msra.mxu0 %v1080
          %1099 = vmatprep.subr.bf16.mxu0 0
          %1100 = vmatpush1.bf16.msra.mxu0 %v1081
          %1101 = vmatprep.subr.bf16.mxu0 0
          %1102 = vmatpush1.bf16.msra.mxu0 %v1082
          %1103 = vmatprep.subr.bf16.mxu0 0
          %1104 = vmatpush1.bf16.msra.mxu0 %v1083
          %1105 = vmatprep.subr.bf16.mxu0 0
          %1106 = vmatpush1.bf16.msra.mxu0 %v1084
          %1107 = vmatprep.subr.bf16.mxu0 0
          %1108 = vmatpush1.bf16.msra.mxu0 %v1085
          %1109 = vmatprep.subr.bf16.mxu0 0
          %1110 = vmatpush1.bf16.msra.mxu0 %v1086
          %1111 = vmatprep.subr.bf16.mxu0 0
          %1112 = vmatpush1.bf16.msra.mxu0 0
          %1113 = vmatprep.subr.bf16.mxu0 0
          %1114 = vmatpush1.bf16.msra.mxu0 0
          %1115 = vmatprep.subr.bf16.mxu0 0
          %1116 = vmatpush1.bf16.msra.mxu0 0
          %1117 = vmatprep.subr.bf16.mxu0 0
          %1118 = vmatpush1.bf16.msra.mxu0 0
          %1119 = vmatprep.subr.bf16.mxu0 0
          %1120 = vmatpush1.bf16.msra.mxu0 0
          %1121 = vmatprep.subr.bf16.mxu0 0
          %1122 = vmatpush1.bf16.msra.mxu0 0
          %1123 = vmatprep.subr.bf16.mxu0 0
          %1124 = vmatpush1.bf16.msra.mxu0 0
          %1125 = vmatprep.subr.bf16.mxu0 0
          %1126 = vmatpush1.bf16.msra.mxu0 0
          %1127 = vmatprep.mubr.bf16.mxu0 0
          %1128 = vmatmul.mubr.bf16.gmra.mrb[0].mxu0 %v774
          %v1129 = vpop.f32.mrb[0].mxu0
          %v1130 = vadd.f32 %v1045, %v1129
          %v1131 = vpop.f32.mrb[0].mxu0
          %v1132 = vpop.f32.mrb[0].mxu0
          %v1133 = vpop.f32.mrb[0].mxu0
          %1134 = vdwg.mxu0
          %v1135 = vmax.f32 %v1130, 0.0
          %v1136 = vld [vmem:[%s8] sm:$0x1]
          %v1138 = vlaneseq
          %v1139 = vshrl.u32 %v1138, 7
          %v1140 = vsub.s32 0, %v1139
          %v1141 = vrot.slane %v1136, %v1140
          %v1143 = vmul.f32 %v1135, %v1141
          %v1145 = vcombine.high %v1143, %v1143
          %v1147 = vunpack.c.l.s4 1966171168
          %v1148 = vunpack.c.0.s8 %v1147
          %v1149 = vlaneseq
          %v1150 = vshrl.u32 %v1149, 7
          %v1151 = vsub.s32 %v1148, %v1150
          %v1152 = vrot.slane %v1143, %v1151
          %v1154 = vunpack.c.l.s4 1966171168
          %v1155 = vunpack.c.0.s8 %v1154
          %v1156 = vlaneseq
          %v1157 = vshrl.u32 %v1156, 7
          %v1158 = vsub.s32 %v1155, %v1157
          %v1159 = vrot.slane %v1145, %v1158
          %v1160 = vcombine.high %v1152, %v1152
          %v1161 = vcombine.high %v1159, %v1159
          %v1163 = vunpack.c.l.s4 1966171168
          %v1164 = vunpack.c.0.s8 %v1163
          %v1165 = vlaneseq
          %v1166 = vshrl.u32 %v1165, 7
          %v1167 = vsub.s32 %v1164, %v1166
          %v1168 = vrot.slane %v1152, %v1167
          %v1170 = vunpack.c.l.s4 1966171168
          %v1171 = vunpack.c.0.s8 %v1170
          %v1172 = vlaneseq
          %v1173 = vshrl.u32 %v1172, 7
          %v1174 = vsub.s32 %v1171, %v1173
          %v1175 = vrot.slane %v1159, %v1174
          %v1177 = vunpack.c.l.s4 1966171168
          %v1178 = vunpack.c.0.s8 %v1177
          %v1179 = vlaneseq
          %v1180 = vshrl.u32 %v1179, 7
          %v1181 = vsub.s32 %v1178, %v1180
          %v1182 = vrot.slane %v1160, %v1181
          %v1184 = vunpack.c.l.s4 1966171168
          %v1185 = vunpack.c.0.s8 %v1184
          %v1186 = vlaneseq
          %v1187 = vshrl.u32 %v1186, 7
          %v1188 = vsub.s32 %v1185, %v1187
          %v1189 = vrot.slane %v1161, %v1188
          %v1190 = vcombine.high %v1168, %v1168
          %v1191 = vcombine.high %v1175, %v1175
          %v1192 = vcombine.high %v1182, %v1182
          %v1193 = vcombine.high %v1189, %v1189
          %v1194 = vlaneseq
          %v1195 = vshrl.u32 %v1194, 7
          %v1196 = vsub.s32 0, %v1195
          %v1197 = vrot.slane %v1168, %v1196
          %v1198 = vlaneseq
          %v1199 = vshrl.u32 %v1198, 7
          %v1200 = vsub.s32 0, %v1199
          %v1201 = vrot.slane %v1182, %v1200
          %v1202 = vlaneseq
          %v1203 = vshrl.u32 %v1202, 7
          %v1204 = vsub.s32 0, %v1203
          %v1205 = vrot.slane %v1190, %v1204
          %v1206 = vlaneseq
          %v1207 = vshrl.u32 %v1206, 7
          %v1208 = vsub.s32 0, %v1207
          %v1209 = vrot.slane %v1192, %v1208
          %v1210 = vlaneseq
          %v1211 = vshrl.u32 %v1210, 7
          %v1212 = vsub.s32 0, %v1211
          %v1213 = vrot.slane %v1175, %v1212
          %v1214 = vlaneseq
          %v1215 = vshrl.u32 %v1214, 7
          %v1216 = vsub.s32 0, %v1215
          %v1217 = vrot.slane %v1189, %v1216
          %v1218 = vlaneseq
          %v1219 = vshrl.u32 %v1218, 7
          %v1220 = vsub.s32 0, %v1219
          %v1221 = vrot.slane %v1191, %v1220
          %v1222 = vlaneseq
          %v1223 = vshrl.u32 %v1222, 7
          %v1224 = vsub.s32 0, %v1223
          %v1225 = vrot.slane %v1193, %v1224
          %v1234 = vmul.f32 %v1008, %v1197
          %v1235 = vmul.f32 %v1009, %v1197
          %v1236 = vmul.f32 %v1010, %v1201
          %v1237 = vmul.f32 %v1011, %v1201
          %v1238 = vmul.f32 %v1012, %v1205
          %v1239 = vmul.f32 %v1013, %v1205
          %v1240 = vmul.f32 %v1014, %v1209
          %v1241 = vmul.f32 %v1015, %v1209
          %v1242 = vmul.f32 %v1016, %v1213
          %v1243 = vmul.f32 %v1017, %v1213
          %v1244 = vmul.f32 %v1018, %v1217
          %v1245 = vmul.f32 %v1019, %v1217
          %v1246 = vmul.f32 %v1020, %v1221
          %v1247 = vmul.f32 %v1021, %v1221
          %v1248 = vmul.f32 %v1022, %v1225
          %v1249 = vmul.f32 %v1023, %v1225
          %1250 = vadd.xlane.f32.xlu0 %v1234
          %v1251 = vpop.xlane.xlu0 %1250
          %1252 = vadd.xlane.f32.xlu0 %v1235
          %v1253 = vpop.xlane.xlu0 %1252
          %1254 = vadd.xlane.f32.xlu0 %v1236
          %v1255 = vpop.xlane.xlu0 %1254
          %1256 = vadd.xlane.f32.xlu0 %v1237
          %v1257 = vpop.xlane.xlu0 %1256
          %1258 = vadd.xlane.f32.xlu0 %v1238
          %v1259 = vpop.xlane.xlu0 %1258
          %1260 = vadd.xlane.f32.xlu0 %v1239
          %v1261 = vpop.xlane.xlu0 %1260
          %1262 = vadd.xlane.f32.xlu0 %v1240
          %v1263 = vpop.xlane.xlu0 %1262
          %1264 = vadd.xlane.f32.xlu0 %v1241
          %v1265 = vpop.xlane.xlu0 %1264
          %1266 = vadd.xlane.f32.xlu0 %v1242
          %v1267 = vpop.xlane.xlu0 %1266
          %1268 = vadd.xlane.f32.xlu0 %v1243
          %v1269 = vpop.xlane.xlu0 %1268
          %1270 = vadd.xlane.f32.xlu0 %v1244
          %v1271 = vpop.xlane.xlu0 %1270
          %1272 = vadd.xlane.f32.xlu0 %v1245
          %v1273 = vpop.xlane.xlu0 %1272
          %1274 = vadd.xlane.f32.xlu0 %v1246
          %v1275 = vpop.xlane.xlu0 %1274
          %1276 = vadd.xlane.f32.xlu0 %v1247
          %v1277 = vpop.xlane.xlu0 %1276
          %1278 = vadd.xlane.f32.xlu0 %v1248
          %v1279 = vpop.xlane.xlu0 %1278
          %1280 = vadd.xlane.f32.xlu0 %v1249
          %v1281 = vpop.xlane.xlu0 %1280
          %s1282 = sld [smem:[#allocation3]]
          %v1283 = vstv %s1282
          %v1284 = vadd.f32 %v1251, %v1283
          %v1285 = vadd.f32 %v1253, %v1283
          %v1286 = vadd.f32 %v1255, %v1283
          %v1287 = vadd.f32 %v1257, %v1283
          %v1288 = vadd.f32 %v1259, %v1283
          %v1289 = vadd.f32 %v1261, %v1283
          %v1290 = vadd.f32 %v1263, %v1283
          %v1291 = vadd.f32 %v1265, %v1283
          %v1292 = vadd.f32 %v1267, %v1283
          %v1293 = vadd.f32 %v1269, %v1283
          %v1294 = vadd.f32 %v1271, %v1283
          %v1295 = vadd.f32 %v1273, %v1283
          %v1296 = vadd.f32 %v1275, %v1283
          %v1297 = vadd.f32 %v1277, %v1283
          %v1298 = vadd.f32 %v1279, %v1283
          %v1299 = vadd.f32 %v1281, %v1283
          %v1300 = vlaneseq
          %v1301 = vshrl.u32 %v1300, 7
          %v1302 = vsub.s32 0, %v1301
          %v1303 = vrot.slane %v791, %v1302
          %1305 = vbcast.lane.b32.xlu0 %v1303, 256
          %v1306 = vpop.permute.xlu0 %1305
          %s1308 = sor.u32 256, 8
          %1309 = vbcast.lane.b32.xlu0 %v1303, %s1308
          %v1310 = vpop.permute.xlu0 %1309
          %v1311 = vlaneseq
          %v1312 = vshrl.u32 %v1311, 7
          %v1313 = vsub.s32 1, %v1312
          %v1314 = vrot.slane %v791, %v1313
          %1316 = vbcast.lane.b32.xlu0 %v1314, 256
          %v1317 = vpop.permute.xlu0 %1316
          %s1319 = sor.u32 256, 8
          %1320 = vbcast.lane.b32.xlu0 %v1314, %s1319
          %v1321 = vpop.permute.xlu0 %1320
          %v1322 = vlaneseq
          %v1323 = vshrl.u32 %v1322, 7
          %v1324 = vsub.s32 2, %v1323
          %v1325 = vrot.slane %v791, %v1324
          %1327 = vbcast.lane.b32.xlu0 %v1325, 256
          %v1328 = vpop.permute.xlu0 %1327
          %s1330 = sor.u32 256, 8
          %1331 = vbcast.lane.b32.xlu0 %v1325, %s1330
          %v1332 = vpop.permute.xlu0 %1331
          %v1333 = vlaneseq
          %v1334 = vshrl.u32 %v1333, 7
          %v1335 = vsub.s32 3, %v1334
          %v1336 = vrot.slane %v791, %v1335
          %1338 = vbcast.lane.b32.xlu0 %v1336, 256
          %v1339 = vpop.permute.xlu0 %1338
          %s1341 = sor.u32 256, 8
          %1342 = vbcast.lane.b32.xlu0 %v1336, %s1341
          %v1343 = vpop.permute.xlu0 %1342
          %v1344 = vlaneseq
          %v1345 = vshrl.u32 %v1344, 7
          %v1346 = vsub.s32 4, %v1345
          %v1347 = vrot.slane %v791, %v1346
          %1349 = vbcast.lane.b32.xlu0 %v1347, 256
          %v1350 = vpop.permute.xlu0 %1349
          %s1352 = sor.u32 256, 8
          %1353 = vbcast.lane.b32.xlu0 %v1347, %s1352
          %v1354 = vpop.permute.xlu0 %1353
          %v1355 = vlaneseq
          %v1356 = vshrl.u32 %v1355, 7
          %v1357 = vsub.s32 5, %v1356
          %v1358 = vrot.slane %v791, %v1357
          %1360 = vbcast.lane.b32.xlu0 %v1358, 256
          %v1361 = vpop.permute.xlu0 %1360
          %s1363 = sor.u32 256, 8
          %1364 = vbcast.lane.b32.xlu0 %v1358, %s1363
          %v1365 = vpop.permute.xlu0 %1364
          %v1366 = vlaneseq
          %v1367 = vshrl.u32 %v1366, 7
          %v1368 = vsub.s32 6, %v1367
          %v1369 = vrot.slane %v791, %v1368
          %1371 = vbcast.lane.b32.xlu0 %v1369, 256
          %v1372 = vpop.permute.xlu0 %1371
          %s1374 = sor.u32 256, 8
          %1375 = vbcast.lane.b32.xlu0 %v1369, %s1374
          %v1376 = vpop.permute.xlu0 %1375
          %v1377 = vlaneseq
          %v1378 = vshrl.u32 %v1377, 7
          %v1379 = vsub.s32 7, %v1378
          %v1380 = vrot.slane %v791, %v1379
          %1382 = vbcast.lane.b32.xlu0 %v1380, 256
          %v1383 = vpop.permute.xlu0 %1382
          %s1385 = sor.u32 256, 8
          %1386 = vbcast.lane.b32.xlu0 %v1380, %s1385
          %v1387 = vpop.permute.xlu0 %1386
          %v1388 = vmul.f32 %v1284, %v1306
          %v1389 = vmul.f32 %v1285, %v1310
          %v1390 = vmul.f32 %v1286, %v1317
          %v1391 = vmul.f32 %v1287, %v1321
          %v1392 = vmul.f32 %v1288, %v1328
          %v1393 = vmul.f32 %v1289, %v1332
          %v1394 = vmul.f32 %v1290, %v1339
          %v1395 = vmul.f32 %v1291, %v1343
          %v1396 = vmul.f32 %v1292, %v1350
          %v1397 = vmul.f32 %v1293, %v1354
          %v1398 = vmul.f32 %v1294, %v1361
          %v1399 = vmul.f32 %v1295, %v1365
          %v1400 = vmul.f32 %v1296, %v1372
          %v1401 = vmul.f32 %v1297, %v1376
          %v1402 = vmul.f32 %v1298, %v1383
          %v1403 = vmul.f32 %v1299, %v1387
          %v1404 = vld [vmem:[%s3] sm:$0xff]
          %v1405 = vld [vmem:[%s3 + $0x8] sm:$0xff]
          %v1406 = vadd.f32 %v1388, %v1404
          %v1407 = vadd.f32 %v1389, %v1405
          %v1408 = vadd.f32 %v1390, %v1404
          %v1409 = vadd.f32 %v1391, %v1405
          %v1410 = vadd.f32 %v1392, %v1404
          %v1411 = vadd.f32 %v1393, %v1405
          %v1412 = vadd.f32 %v1394, %v1404
          %v1413 = vadd.f32 %v1395, %v1405
          %v1414 = vadd.f32 %v1396, %v1404
          %v1415 = vadd.f32 %v1397, %v1405
          %v1416 = vadd.f32 %v1398, %v1404
          %v1417 = vadd.f32 %v1399, %v1405
          %v1418 = vadd.f32 %v1400, %v1404
          %v1419 = vadd.f32 %v1401, %v1405
          %v1420 = vadd.f32 %v1402, %v1404
          %v1421 = vadd.f32 %v1403, %v1405
          %vm1422 = vcmask 7168
          %v1423 = vsel %vm1422, %v1406, -inf
          %v1424 = vsel %vm1422, %v1407, -inf
          %v1425 = vmax.f32 %v1423, %v1424
          %v1426 = vrot.slane %v1425, 4
          %v1427 = vmax.f32 %v1425, %v1426
          %v1428 = vrot.slane %v1427, 2
          %v1429 = vmax.f32 %v1427, %v1428
          %v1430 = vrot.slane %v1429, 1
          %v1431 = vmax.f32 %v1429, %v1430
          %v1432 = vsel %vm1422, %v1408, -inf
          %v1433 = vsel %vm1422, %v1409, -inf
          %v1434 = vmax.f32 %v1432, %v1433
          %v1435 = vrot.slane %v1434, 4
          %v1436 = vmax.f32 %v1434, %v1435
          %v1437 = vrot.slane %v1436, 2
          %v1438 = vmax.f32 %v1436, %v1437
          %v1439 = vrot.slane %v1438, 1
          %v1440 = vmax.f32 %v1438, %v1439
          %v1441 = vsel %vm1422, %v1410, -inf
          %v1442 = vsel %vm1422, %v1411, -inf
          %v1443 = vmax.f32 %v1441, %v1442
          %v1444 = vrot.slane %v1443, 4
          %v1445 = vmax.f32 %v1443, %v1444
          %v1446 = vrot.slane %v1445, 2
          %v1447 = vmax.f32 %v1445, %v1446
          %v1448 = vrot.slane %v1447, 1
          %v1449 = vmax.f32 %v1447, %v1448
          %v1450 = vsel %vm1422, %v1412, -inf
          %v1451 = vsel %vm1422, %v1413, -inf
          %v1452 = vmax.f32 %v1450, %v1451
          %v1453 = vrot.slane %v1452, 4
          %v1454 = vmax.f32 %v1452, %v1453
          %v1455 = vrot.slane %v1454, 2
          %v1456 = vmax.f32 %v1454, %v1455
          %v1457 = vrot.slane %v1456, 1
          %v1458 = vmax.f32 %v1456, %v1457
          %v1459 = vsel %vm1422, %v1414, -inf
          %v1460 = vsel %vm1422, %v1415, -inf
          %v1461 = vmax.f32 %v1459, %v1460
          %v1462 = vrot.slane %v1461, 4
          %v1463 = vmax.f32 %v1461, %v1462
          %v1464 = vrot.slane %v1463, 2
          %v1465 = vmax.f32 %v1463, %v1464
          %v1466 = vrot.slane %v1465, 1
          %v1467 = vmax.f32 %v1465, %v1466
          %v1468 = vsel %vm1422, %v1416, -inf
          %v1469 = vsel %vm1422, %v1417, -inf
          %v1470 = vmax.f32 %v1468, %v1469
          %v1471 = vrot.slane %v1470, 4
          %v1472 = vmax.f32 %v1470, %v1471
          %v1473 = vrot.slane %v1472, 2
          %v1474 = vmax.f32 %v1472, %v1473
          %v1475 = vrot.slane %v1474, 1
          %v1476 = vmax.f32 %v1474, %v1475
          %v1477 = vsel %vm1422, %v1418, -inf
          %v1478 = vsel %vm1422, %v1419, -inf
          %v1479 = vmax.f32 %v1477, %v1478
          %v1480 = vrot.slane %v1479, 4
          %v1481 = vmax.f32 %v1479, %v1480
          %v1482 = vrot.slane %v1481, 2
          %v1483 = vmax.f32 %v1481, %v1482
          %v1484 = vrot.slane %v1483, 1
          %v1485 = vmax.f32 %v1483, %v1484
          %v1486 = vsel %vm1422, %v1420, -inf
          %v1487 = vsel %vm1422, %v1421, -inf
          %v1488 = vmax.f32 %v1486, %v1487
          %v1489 = vrot.slane %v1488, 4
          %v1490 = vmax.f32 %v1488, %v1489
          %v1491 = vrot.slane %v1490, 2
          %v1492 = vmax.f32 %v1490, %v1491
          %v1493 = vrot.slane %v1492, 1
          %v1494 = vmax.f32 %v1492, %v1493
          %v1495 = vsub.f32 %v1406, %v1431
          %v1496 = vsub.f32 %v1407, %v1431
          %v1497 = vsub.f32 %v1408, %v1440
          %v1498 = vsub.f32 %v1409, %v1440
          %v1499 = vsub.f32 %v1410, %v1449
          %v1500 = vsub.f32 %v1411, %v1449
          %v1501 = vsub.f32 %v1412, %v1458
          %v1502 = vsub.f32 %v1413, %v1458
          %v1503 = vsub.f32 %v1414, %v1467
          %v1504 = vsub.f32 %v1415, %v1467
          %v1505 = vsub.f32 %v1416, %v1476
          %v1506 = vsub.f32 %v1417, %v1476
          %v1507 = vsub.f32 %v1418, %v1485
          %v1508 = vsub.f32 %v1419, %v1485
          %v1509 = vsub.f32 %v1420, %v1494
          %v1510 = vsub.f32 %v1421, %v1494
          %v1511 = vmul.f32 %v1495, 1.442695
          %v1512 = vpow.pop %v1511
          %v1513 = vmul.f32 %v1496, 1.442695
          %v1514 = vpow.pop %v1513
          %v1515 = vmul.f32 %v1497, 1.442695
          %v1516 = vpow.pop %v1515
          %v1517 = vmul.f32 %v1498, 1.442695
          %v1518 = vpow.pop %v1517
          %v1519 = vmul.f32 %v1499, 1.442695
          %v1520 = vpow.pop %v1519
          %v1521 = vmul.f32 %v1500, 1.442695
          %v1522 = vpow.pop %v1521
          %v1523 = vmul.f32 %v1501, 1.442695
          %v1524 = vpow.pop %v1523
          %v1525 = vmul.f32 %v1502, 1.442695
          %v1526 = vpow.pop %v1525
          %v1527 = vmul.f32 %v1503, 1.442695
          %v1528 = vpow.pop %v1527
          %v1529 = vmul.f32 %v1504, 1.442695
          %v1530 = vpow.pop %v1529
          %v1531 = vmul.f32 %v1505, 1.442695
          %v1532 = vpow.pop %v1531
          %v1533 = vmul.f32 %v1506, 1.442695
          %v1534 = vpow.pop %v1533
          %v1535 = vmul.f32 %v1507, 1.442695
          %v1536 = vpow.pop %v1535
          %v1537 = vmul.f32 %v1508, 1.442695
          %v1538 = vpow.pop %v1537
          %v1539 = vmul.f32 %v1509, 1.442695
          %v1540 = vpow.pop %v1539
          %v1541 = vmul.f32 %v1510, 1.442695
          %v1542 = vpow.pop %v1541
          %v1543 = vsel %vm1422, %v1512, 0.0
          %v1544 = vsel %vm1422, %v1514, 0.0
          %v1545 = vadd.f32 %v1543, %v1544
          %v1546 = vrot.slane %v1545, 4
          %v1547 = vadd.f32 %v1545, %v1546
          %v1548 = vrot.slane %v1547, 2
          %v1549 = vadd.f32 %v1547, %v1548
          %v1550 = vrot.slane %v1549, 1
          %v1551 = vadd.f32 %v1549, %v1550
          %v1552 = vsel %vm1422, %v1516, 0.0
          %v1553 = vsel %vm1422, %v1518, 0.0
          %v1554 = vadd.f32 %v1552, %v1553
          %v1555 = vrot.slane %v1554, 4
          %v1556 = vadd.f32 %v1554, %v1555
          %v1557 = vrot.slane %v1556, 2
          %v1558 = vadd.f32 %v1556, %v1557
          %v1559 = vrot.slane %v1558, 1
          %v1560 = vadd.f32 %v1558, %v1559
          %v1561 = vsel %vm1422, %v1520, 0.0
          %v1562 = vsel %vm1422, %v1522, 0.0
          %v1563 = vadd.f32 %v1561, %v1562
          %v1564 = vrot.slane %v1563, 4
          %v1565 = vadd.f32 %v1563, %v1564
          %v1566 = vrot.slane %v1565, 2
          %v1567 = vadd.f32 %v1565, %v1566
          %v1568 = vrot.slane %v1567, 1
          %v1569 = vadd.f32 %v1567, %v1568
          %v1570 = vsel %vm1422, %v1524, 0.0
          %v1571 = vsel %vm1422, %v1526, 0.0
          %v1572 = vadd.f32 %v1570, %v1571
          %v1573 = vrot.slane %v1572, 4
          %v1574 = vadd.f32 %v1572, %v1573
          %v1575 = vrot.slane %v1574, 2
          %v1576 = vadd.f32 %v1574, %v1575
          %v1577 = vrot.slane %v1576, 1
          %v1578 = vadd.f32 %v1576, %v1577
          %v1579 = vsel %vm1422, %v1528, 0.0
          %v1580 = vsel %vm1422, %v1530, 0.0
          %v1581 = vadd.f32 %v1579, %v1580
          %v1582 = vrot.slane %v1581, 4
          %v1583 = vadd.f32 %v1581, %v1582
          %v1584 = vrot.slane %v1583, 2
          %v1585 = vadd.f32 %v1583, %v1584
          %v1586 = vrot.slane %v1585, 1
          %v1587 = vadd.f32 %v1585, %v1586
          %v1588 = vsel %vm1422, %v1532, 0.0
          %v1589 = vsel %vm1422, %v1534, 0.0
          %v1590 = vadd.f32 %v1588, %v1589
          %v1591 = vrot.slane %v1590, 4
          %v1592 = vadd.f32 %v1590, %v1591
          %v1593 = vrot.slane %v1592, 2
          %v1594 = vadd.f32 %v1592, %v1593
          %v1595 = vrot.slane %v1594, 1
          %v1596 = vadd.f32 %v1594, %v1595
          %v1597 = vsel %vm1422, %v1536, 0.0
          %v1598 = vsel %vm1422, %v1538, 0.0
          %v1599 = vadd.f32 %v1597, %v1598
          %v1600 = vrot.slane %v1599, 4
          %v1601 = vadd.f32 %v1599, %v1600
          %v1602 = vrot.slane %v1601, 2
          %v1603 = vadd.f32 %v1601, %v1602
          %v1604 = vrot.slane %v1603, 1
          %v1605 = vadd.f32 %v1603, %v1604
          %v1606 = vsel %vm1422, %v1540, 0.0
          %v1607 = vsel %vm1422, %v1542, 0.0
          %v1608 = vadd.f32 %v1606, %v1607
          %v1609 = vrot.slane %v1608, 4
          %v1610 = vadd.f32 %v1608, %v1609
          %v1611 = vrot.slane %v1610, 2
          %v1612 = vadd.f32 %v1610, %v1611
          %v1613 = vrot.slane %v1612, 1
          %v1614 = vadd.f32 %v1612, %v1613
          %v1615 = vrcp.pop %v1551
          %v1616 = vrcp.pop %v1560
          %v1617 = vrcp.pop %v1569
          %v1618 = vrcp.pop %v1578
          %v1619 = vrcp.pop %v1587
          %v1620 = vrcp.pop %v1596
          %v1621 = vrcp.pop %v1605
          %v1622 = vrcp.pop %v1614
          %v1623 = vmul.f32 %v1512, %v1615
          %v1624 = vmul.f32 %v1514, %v1615
          %v1625 = vmul.f32 %v1516, %v1616
          %v1626 = vmul.f32 %v1518, %v1616
          %v1627 = vmul.f32 %v1520, %v1617
          %v1628 = vmul.f32 %v1522, %v1617
          %v1629 = vmul.f32 %v1524, %v1618
          %v1630 = vmul.f32 %v1526, %v1618
          %v1631 = vmul.f32 %v1528, %v1619
          %v1632 = vmul.f32 %v1530, %v1619
          %v1633 = vmul.f32 %v1532, %v1620
          %v1634 = vmul.f32 %v1534, %v1620
          %v1635 = vmul.f32 %v1536, %v1621
          %v1636 = vmul.f32 %v1538, %v1621
          %v1637 = vmul.f32 %v1540, %v1622
          %v1638 = vmul.f32 %v1542, %v1622
          %v1639 = vpack.c.bf16 %v1624, %v1623
          %v1640 = vpack.c.bf16 %v1626, %v1625
          %v1641 = vpack.c.bf16 %v1628, %v1627
          %v1642 = vpack.c.bf16 %v1630, %v1629
          %v1643 = vpack.c.bf16 %v1632, %v1631
          %v1644 = vpack.c.bf16 %v1634, %v1633
          %v1645 = vpack.c.bf16 %v1636, %v1635
          %v1646 = vpack.c.bf16 %v1638, %v1637
          %1647 = vxpose.xlu0.c.b16.start [1/8] %v1639, 128
          %1648 = vxpose.xlu0.c.b16.cont [2/8] 0, 128
          %1649 = vxpose.xlu0.c.b16.cont [3/8] 0, 128
          %1650 = vxpose.xlu0.c.b16.cont [4/8] 0, 128
          %1651 = vxpose.xlu0.c.b16.cont [5/8] 0, 128
          %1652 = vxpose.xlu0.c.b16.cont [6/8] 0, 128
          %1653 = vxpose.xlu0.c.b16.cont [7/8] 0, 128
          %1654 = vxpose.xlu0.c.b16.end [8/8] 0, 128
          %v1655 = vpop.trf.xlu0
          %v1656 = vpop.trf.xlu0
          %v1657 = vpop.trf.xlu0
          %v1658 = vpop.trf.xlu0
          %v1659 = vpop.trf.xlu0
          %v1660 = vpop.trf.xlu0
          %v1661 = vpop.trf.xlu0
          %v1662 = vpop.trf.xlu0
          %vm1663 = vcmask 130048
          %v1665 = vsel %vm1663, %v1655, 0
          %1667 = vmatprep.subr.bf16.mxu0 0
          %1668 = vmatpush1.bf16.msra.mxu0 %v847
          %1669 = vmatprep.subr.bf16.mxu0 0
          %1670 = vmatpush1.bf16.msra.mxu0 0
          %1671 = vmatprep.subr.bf16.mxu0 0
          %1672 = vmatpush1.bf16.msra.mxu0 0
          %1673 = vmatprep.subr.bf16.mxu0 0
          %1674 = vmatpush1.bf16.msra.mxu0 0
          %1675 = vmatprep.subr.bf16.mxu0 0
          %1676 = vmatpush1.bf16.msra.mxu0 0
          %1677 = vmatprep.subr.bf16.mxu0 0
          %1678 = vmatpush1.bf16.msra.mxu0 0
          %1679 = vmatprep.subr.bf16.mxu0 0
          %1680 = vmatpush1.bf16.msra.mxu0 0
          %1681 = vmatprep.subr.bf16.mxu0 0
          %1682 = vmatpush1.bf16.msra.mxu0 0
          %1683 = vmatprep.subr.bf16.mxu0 0
          %1684 = vmatpush1.bf16.msra.mxu0 0
          %1685 = vmatprep.subr.bf16.mxu0 0
          %1686 = vmatpush1.bf16.msra.mxu0 0
          %1687 = vmatprep.subr.bf16.mxu0 0
          %1688 = vmatpush1.bf16.msra.mxu0 0
          %1689 = vmatprep.subr.bf16.mxu0 0
          %1690 = vmatpush1.bf16.msra.mxu0 0
          %1691 = vmatprep.subr.bf16.mxu0 0
          %1692 = vmatpush1.bf16.msra.mxu0 0
          %1693 = vmatprep.subr.bf16.mxu0 0
          %1694 = vmatpush1.bf16.msra.mxu0 0
          %1695 = vmatprep.subr.bf16.mxu0 0
          %1696 = vmatpush1.bf16.msra.mxu0 0
          %1697 = vmatprep.subr.bf16.mxu0 0
          %1698 = vmatpush1.bf16.msra.mxu0 0
          %1699 = vmatprep.mubr.bf16.mxu0 0
          %1700 = vmatmul.mubr.bf16.gmra.mrb[0].mxu0 %v1665
          %v1701 = vpop.f32.mrb[0].mxu0
          %v1702 = vadd.f32 0.0, %v1701
          %v1703 = vpop.f32.mrb[0].mxu0
          %v1704 = vpop.f32.mrb[0].mxu0
          %v1705 = vpop.f32.mrb[0].mxu0
          %1706 = vdwg.mxu0
          %1707 = vxpose.xlu0.c.b16.start [1/8] %v1640, 128
          %1708 = vxpose.xlu0.c.b16.cont [2/8] 0, 128
          %1709 = vxpose.xlu0.c.b16.cont [3/8] 0, 128
          %1710 = vxpose.xlu0.c.b16.cont [4/8] 0, 128
          %1711 = vxpose.xlu0.c.b16.cont [5/8] 0, 128
          %1712 = vxpose.xlu0.c.b16.cont [6/8] 0, 128
          %1713 = vxpose.xlu0.c.b16.cont [7/8] 0, 128
          %1714 = vxpose.xlu0.c.b16.end [8/8] 0, 128
          %v1715 = vpop.trf.xlu0
          %v1716 = vpop.trf.xlu0
          %v1717 = vpop.trf.xlu0
          %v1718 = vpop.trf.xlu0
          %v1719 = vpop.trf.xlu0
          %v1720 = vpop.trf.xlu0
          %v1721 = vpop.trf.xlu0
          %v1722 = vpop.trf.xlu0
          %v1724 = vsel %vm1663, %v1715, 0
          %1726 = vmatprep.subr.bf16.mxu0 0
          %1727 = vmatpush1.bf16.msra.mxu0 %v848
          %1728 = vmatprep.subr.bf16.mxu0 0
          %1729 = vmatpush1.bf16.msra.mxu0 0
          %1730 = vmatprep.subr.bf16.mxu0 0
          %1731 = vmatpush1.bf16.msra.mxu0 0
          %1732 = vmatprep.subr.bf16.mxu0 0
          %1733 = vmatpush1.bf16.msra.mxu0 0
          %1734 = vmatprep.subr.bf16.mxu0 0
          %1735 = vmatpush1.bf16.msra.mxu0 0
          %1736 = vmatprep.subr.bf16.mxu0 0
          %1737 = vmatpush1.bf16.msra.mxu0 0
          %1738 = vmatprep.subr.bf16.mxu0 0
          %1739 = vmatpush1.bf16.msra.mxu0 0
          %1740 = vmatprep.subr.bf16.mxu0 0
          %1741 = vmatpush1.bf16.msra.mxu0 0
          %1742 = vmatprep.subr.bf16.mxu0 0
          %1743 = vmatpush1.bf16.msra.mxu0 0
          %1744 = vmatprep.subr.bf16.mxu0 0
          %1745 = vmatpush1.bf16.msra.mxu0 0
          %1746 = vmatprep.subr.bf16.mxu0 0
          %1747 = vmatpush1.bf16.msra.mxu0 0
          %1748 = vmatprep.subr.bf16.mxu0 0
          %1749 = vmatpush1.bf16.msra.mxu0 0
          %1750 = vmatprep.subr.bf16.mxu0 0
          %1751 = vmatpush1.bf16.msra.mxu0 0
          %1752 = vmatprep.subr.bf16.mxu0 0
          %1753 = vmatpush1.bf16.msra.mxu0 0
          %1754 = vmatprep.subr.bf16.mxu0 0
          %1755 = vmatpush1.bf16.msra.mxu0 0
          %1756 = vmatprep.subr.bf16.mxu0 0
          %1757 = vmatpush1.bf16.msra.mxu0 0
          %1758 = vmatprep.mubr.bf16.mxu0 0
          %1759 = vmatmul.mubr.bf16.gmra.mrb[0].mxu0 %v1724
          %v1760 = vpop.f32.mrb[0].mxu0
          %v1761 = vadd.f32 0.0, %v1760
          %v1762 = vpop.f32.mrb[0].mxu0
          %v1763 = vpop.f32.mrb[0].mxu0
          %v1764 = vpop.f32.mrb[0].mxu0
          %1765 = vdwg.mxu0
          %1766 = vxpose.xlu0.c.b16.start [1/8] %v1641, 128
          %1767 = vxpose.xlu0.c.b16.cont [2/8] 0, 128
          %1768 = vxpose.xlu0.c.b16.cont [3/8] 0, 128
          %1769 = vxpose.xlu0.c.b16.cont [4/8] 0, 128
          %1770 = vxpose.xlu0.c.b16.cont [5/8] 0, 128
          %1771 = vxpose.xlu0.c.b16.cont [6/8] 0, 128
          %1772 = vxpose.xlu0.c.b16.cont [7/8] 0, 128
          %1773 = vxpose.xlu0.c.b16.end [8/8] 0, 128
          %v1774 = vpop.trf.xlu0
          %v1775 = vpop.trf.xlu0
          %v1776 = vpop.trf.xlu0
          %v1777 = vpop.trf.xlu0
          %v1778 = vpop.trf.xlu0
          %v1779 = vpop.trf.xlu0
          %v1780 = vpop.trf.xlu0
          %v1781 = vpop.trf.xlu0
          %v1783 = vsel %vm1663, %v1774, 0
          %1785 = vmatprep.subr.bf16.mxu0 0
          %1786 = vmatpush1.bf16.msra.mxu0 %v849
          %1787 = vmatprep.subr.bf16.mxu0 0
          %1788 = vmatpush1.bf16.msra.mxu0 0
          %1789 = vmatprep.subr.bf16.mxu0 0
          %1790 = vmatpush1.bf16.msra.mxu0 0
          %1791 = vmatprep.subr.bf16.mxu0 0
          %1792 = vmatpush1.bf16.msra.mxu0 0
          %1793 = vmatprep.subr.bf16.mxu0 0
          %1794 = vmatpush1.bf16.msra.mxu0 0
          %1795 = vmatprep.subr.bf16.mxu0 0
          %1796 = vmatpush1.bf16.msra.mxu0 0
          %1797 = vmatprep.subr.bf16.mxu0 0
          %1798 = vmatpush1.bf16.msra.mxu0 0
          %1799 = vmatprep.subr.bf16.mxu0 0
          %1800 = vmatpush1.bf16.msra.mxu0 0
          %1801 = vmatprep.subr.bf16.mxu0 0
          %1802 = vmatpush1.bf16.msra.mxu0 0
          %1803 = vmatprep.subr.bf16.mxu0 0
          %1804 = vmatpush1.bf16.msra.mxu0 0
          %1805 = vmatprep.subr.bf16.mxu0 0
          %1806 = vmatpush1.bf16.msra.mxu0 0
          %1807 = vmatprep.subr.bf16.mxu0 0
          %1808 = vmatpush1.bf16.msra.mxu0 0
          %1809 = vmatprep.subr.bf16.mxu0 0
          %1810 = vmatpush1.bf16.msra.mxu0 0
          %1811 = vmatprep.subr.bf16.mxu0 0
          %1812 = vmatpush1.bf16.msra.mxu0 0
          %1813 = vmatprep.subr.bf16.mxu0 0
          %1814 = vmatpush1.bf16.msra.mxu0 0
          %1815 = vmatprep.subr.bf16.mxu0 0
          %1816 = vmatpush1.bf16.msra.mxu0 0
          %1817 = vmatprep.mubr.bf16.mxu0 0
          %1818 = vmatmul.mubr.bf16.gmra.mrb[0].mxu0 %v1783
          %v1819 = vpop.f32.mrb[0].mxu0
          %v1820 = vadd.f32 0.0, %v1819
          %v1821 = vpop.f32.mrb[0].mxu0
          %v1822 = vpop.f32.mrb[0].mxu0
          %v1823 = vpop.f32.mrb[0].mxu0
          %1824 = vdwg.mxu0
          %1825 = vxpose.xlu0.c.b16.start [1/8] %v1642, 128
          %1826 = vxpose.xlu0.c.b16.cont [2/8] 0, 128
          %1827 = vxpose.xlu0.c.b16.cont [3/8] 0, 128
          %1828 = vxpose.xlu0.c.b16.cont [4/8] 0, 128
          %1829 = vxpose.xlu0.c.b16.cont [5/8] 0, 128
          %1830 = vxpose.xlu0.c.b16.cont [6/8] 0, 128
          %1831 = vxpose.xlu0.c.b16.cont [7/8] 0, 128
          %1832 = vxpose.xlu0.c.b16.end [8/8] 0, 128
          %v1833 = vpop.trf.xlu0
          %v1834 = vpop.trf.xlu0
          %v1835 = vpop.trf.xlu0
          %v1836 = vpop.trf.xlu0
          %v1837 = vpop.trf.xlu0
          %v1838 = vpop.trf.xlu0
          %v1839 = vpop.trf.xlu0
          %v1840 = vpop.trf.xlu0
          %v1842 = vsel %vm1663, %v1833, 0
          %1844 = vmatprep.subr.bf16.mxu0 0
          %1845 = vmatpush1.bf16.msra.mxu0 %v850
          %1846 = vmatprep.subr.bf16.mxu0 0
          %1847 = vmatpush1.bf16.msra.mxu0 0
          %1848 = vmatprep.subr.bf16.mxu0 0
          %1849 = vmatpush1.bf16.msra.mxu0 0
          %1850 = vmatprep.subr.bf16.mxu0 0
          %1851 = vmatpush1.bf16.msra.mxu0 0
          %1852 = vmatprep.subr.bf16.mxu0 0
          %1853 = vmatpush1.bf16.msra.mxu0 0
          %1854 = vmatprep.subr.bf16.mxu0 0
          %1855 = vmatpush1.bf16.msra.mxu0 0
          %1856 = vmatprep.subr.bf16.mxu0 0
          %1857 = vmatpush1.bf16.msra.mxu0 0
          %1858 = vmatprep.subr.bf16.mxu0 0
          %1859 = vmatpush1.bf16.msra.mxu0 0
          %1860 = vmatprep.subr.bf16.mxu0 0
          %1861 = vmatpush1.bf16.msra.mxu0 0
          %1862 = vmatprep.subr.bf16.mxu0 0
          %1863 = vmatpush1.bf16.msra.mxu0 0
          %1864 = vmatprep.subr.bf16.mxu0 0
          %1865 = vmatpush1.bf16.msra.mxu0 0
          %1866 = vmatprep.subr.bf16.mxu0 0
          %1867 = vmatpush1.bf16.msra.mxu0 0
          %1868 = vmatprep.subr.bf16.mxu0 0
          %1869 = vmatpush1.bf16.msra.mxu0 0
          %1870 = vmatprep.subr.bf16.mxu0 0
          %1871 = vmatpush1.bf16.msra.mxu0 0
          %1872 = vmatprep.subr.bf16.mxu0 0
          %1873 = vmatpush1.bf16.msra.mxu0 0
          %1874 = vmatprep.subr.bf16.mxu0 0
          %1875 = vmatpush1.bf16.msra.mxu0 0
          %1876 = vmatprep.mubr.bf16.mxu0 0
          %1877 = vmatmul.mubr.bf16.gmra.mrb[0].mxu0 %v1842
          %v1878 = vpop.f32.mrb[0].mxu0
          %v1879 = vadd.f32 0.0, %v1878
          %v1880 = vpop.f32.mrb[0].mxu0
          %v1881 = vpop.f32.mrb[0].mxu0
          %v1882 = vpop.f32.mrb[0].mxu0
          %1883 = vdwg.mxu0
          %1884 = vxpose.xlu0.c.b16.start [1/8] %v1643, 128
          %1885 = vxpose.xlu0.c.b16.cont [2/8] 0, 128
          %1886 = vxpose.xlu0.c.b16.cont [3/8] 0, 128
          %1887 = vxpose.xlu0.c.b16.cont [4/8] 0, 128
          %1888 = vxpose.xlu0.c.b16.cont [5/8] 0, 128
          %1889 = vxpose.xlu0.c.b16.cont [6/8] 0, 128
          %1890 = vxpose.xlu0.c.b16.cont [7/8] 0, 128
          %1891 = vxpose.xlu0.c.b16.end [8/8] 0, 128
          %v1892 = vpop.trf.xlu0
          %v1893 = vpop.trf.xlu0
          %v1894 = vpop.trf.xlu0
          %v1895 = vpop.trf.xlu0
          %v1896 = vpop.trf.xlu0
          %v1897 = vpop.trf.xlu0
          %v1898 = vpop.trf.xlu0
          %v1899 = vpop.trf.xlu0
          %v1901 = vsel %vm1663, %v1892, 0
          %1903 = vmatprep.subr.bf16.mxu0 0
          %1904 = vmatpush1.bf16.msra.mxu0 %v851
          %1905 = vmatprep.subr.bf16.mxu0 0
          %1906 = vmatpush1.bf16.msra.mxu0 0
          %1907 = vmatprep.subr.bf16.mxu0 0
          %1908 = vmatpush1.bf16.msra.mxu0 0
          %1909 = vmatprep.subr.bf16.mxu0 0
          %1910 = vmatpush1.bf16.msra.mxu0 0
          %1911 = vmatprep.subr.bf16.mxu0 0
          %1912 = vmatpush1.bf16.msra.mxu0 0
          %1913 = vmatprep.subr.bf16.mxu0 0
          %1914 = vmatpush1.bf16.msra.mxu0 0
          %1915 = vmatprep.subr.bf16.mxu0 0
          %1916 = vmatpush1.bf16.msra.mxu0 0
          %1917 = vmatprep.subr.bf16.mxu0 0
          %1918 = vmatpush1.bf16.msra.mxu0 0
          %1919 = vmatprep.subr.bf16.mxu0 0
          %1920 = vmatpush1.bf16.msra.mxu0 0
          %1921 = vmatprep.subr.bf16.mxu0 0
          %1922 = vmatpush1.bf16.msra.mxu0 0
          %1923 = vmatprep.subr.bf16.mxu0 0
          %1924 = vmatpush1.bf16.msra.mxu0 0
          %1925 = vmatprep.subr.bf16.mxu0 0
          %1926 = vmatpush1.bf16.msra.mxu0 0
          %1927 = vmatprep.subr.bf16.mxu0 0
          %1928 = vmatpush1.bf16.msra.mxu0 0
          %1929 = vmatprep.subr.bf16.mxu0 0
          %1930 = vmatpush1.bf16.msra.mxu0 0
          %1931 = vmatprep.subr.bf16.mxu0 0
          %1932 = vmatpush1.bf16.msra.mxu0 0
          %1933 = vmatprep.subr.bf16.mxu0 0
          %1934 = vmatpush1.bf16.msra.mxu0 0
          %1935 = vmatprep.mubr.bf16.mxu0 0
          %1936 = vmatmul.mubr.bf16.gmra.mrb[0].mxu0 %v1901
          %v1937 = vpop.f32.mrb[0].mxu0
          %v1938 = vadd.f32 0.0, %v1937
          %v1939 = vpop.f32.mrb[0].mxu0
          %v1940 = vpop.f32.mrb[0].mxu0
          %v1941 = vpop.f32.mrb[0].mxu0
          %1942 = vdwg.mxu0
          %1943 = vxpose.xlu0.c.b16.start [1/8] %v1644, 128
          %1944 = vxpose.xlu0.c.b16.cont [2/8] 0, 128
          %1945 = vxpose.xlu0.c.b16.cont [3/8] 0, 128
          %1946 = vxpose.xlu0.c.b16.cont [4/8] 0, 128
          %1947 = vxpose.xlu0.c.b16.cont [5/8] 0, 128
          %1948 = vxpose.xlu0.c.b16.cont [6/8] 0, 128
          %1949 = vxpose.xlu0.c.b16.cont [7/8] 0, 128
          %1950 = vxpose.xlu0.c.b16.end [8/8] 0, 128
          %v1951 = vpop.trf.xlu0
          %v1952 = vpop.trf.xlu0
          %v1953 = vpop.trf.xlu0
          %v1954 = vpop.trf.xlu0
          %v1955 = vpop.trf.xlu0
          %v1956 = vpop.trf.xlu0
          %v1957 = vpop.trf.xlu0
          %v1958 = vpop.trf.xlu0
          %v1960 = vsel %vm1663, %v1951, 0
          %1962 = vmatprep.subr.bf16.mxu0 0
          %1963 = vmatpush1.bf16.msra.mxu0 %v852
          %1964 = vmatprep.subr.bf16.mxu0 0
          %1965 = vmatpush1.bf16.msra.mxu0 0
          %1966 = vmatprep.subr.bf16.mxu0 0
          %1967 = vmatpush1.bf16.msra.mxu0 0
          %1968 = vmatprep.subr.bf16.mxu0 0
          %1969 = vmatpush1.bf16.msra.mxu0 0
          %1970 = vmatprep.subr.bf16.mxu0 0
          %1971 = vmatpush1.bf16.msra.mxu0 0
          %1972 = vmatprep.subr.bf16.mxu0 0
          %1973 = vmatpush1.bf16.msra.mxu0 0
          %1974 = vmatprep.subr.bf16.mxu0 0
          %1975 = vmatpush1.bf16.msra.mxu0 0
          %1976 = vmatprep.subr.bf16.mxu0 0
          %1977 = vmatpush1.bf16.msra.mxu0 0
          %1978 = vmatprep.subr.bf16.mxu0 0
          %1979 = vmatpush1.bf16.msra.mxu0 0
          %1980 = vmatprep.subr.bf16.mxu0 0
          %1981 = vmatpush1.bf16.msra.mxu0 0
          %1982 = vmatprep.subr.bf16.mxu0 0
          %1983 = vmatpush1.bf16.msra.mxu0 0
          %1984 = vmatprep.subr.bf16.mxu0 0
          %1985 = vmatpush1.bf16.msra.mxu0 0
          %1986 = vmatprep.subr.bf16.mxu0 0
          %1987 = vmatpush1.bf16.msra.mxu0 0
          %1988 = vmatprep.subr.bf16.mxu0 0
          %1989 = vmatpush1.bf16.msra.mxu0 0
          %1990 = vmatprep.subr.bf16.mxu0 0
          %1991 = vmatpush1.bf16.msra.mxu0 0
          %1992 = vmatprep.subr.bf16.mxu0 0
          %1993 = vmatpush1.bf16.msra.mxu0 0
          %1994 = vmatprep.mubr.bf16.mxu0 0
          %1995 = vmatmul.mubr.bf16.gmra.mrb[0].mxu0 %v1960
          %v1996 = vpop.f32.mrb[0].mxu0
          %v1997 = vadd.f32 0.0, %v1996
          %v1998 = vpop.f32.mrb[0].mxu0
          %v1999 = vpop.f32.mrb[0].mxu0
          %v2000 = vpop.f32.mrb[0].mxu0
          %2001 = vdwg.mxu0
          %2002 = vxpose.xlu0.c.b16.start [1/8] %v1645, 128
          %2003 = vxpose.xlu0.c.b16.cont [2/8] 0, 128
          %2004 = vxpose.xlu0.c.b16.cont [3/8] 0, 128
          %2005 = vxpose.xlu0.c.b16.cont [4/8] 0, 128
          %2006 = vxpose.xlu0.c.b16.cont [5/8] 0, 128
          %2007 = vxpose.xlu0.c.b16.cont [6/8] 0, 128
          %2008 = vxpose.xlu0.c.b16.cont [7/8] 0, 128
          %2009 = vxpose.xlu0.c.b16.end [8/8] 0, 128
          %v2010 = vpop.trf.xlu0
          %v2011 = vpop.trf.xlu0
          %v2012 = vpop.trf.xlu0
          %v2013 = vpop.trf.xlu0
          %v2014 = vpop.trf.xlu0
          %v2015 = vpop.trf.xlu0
          %v2016 = vpop.trf.xlu0
          %v2017 = vpop.trf.xlu0
          %v2019 = vsel %vm1663, %v2010, 0
          %2021 = vmatprep.subr.bf16.mxu0 0
          %2022 = vmatpush1.bf16.msra.mxu0 %v853
          %2023 = vmatprep.subr.bf16.mxu0 0
          %2024 = vmatpush1.bf16.msra.mxu0 0
          %2025 = vmatprep.subr.bf16.mxu0 0
          %2026 = vmatpush1.bf16.msra.mxu0 0
          %2027 = vmatprep.subr.bf16.mxu0 0
          %2028 = vmatpush1.bf16.msra.mxu0 0
          %2029 = vmatprep.subr.bf16.mxu0 0
          %2030 = vmatpush1.bf16.msra.mxu0 0
          %2031 = vmatprep.subr.bf16.mxu0 0
          %2032 = vmatpush1.bf16.msra.mxu0 0
          %2033 = vmatprep.subr.bf16.mxu0 0
          %2034 = vmatpush1.bf16.msra.mxu0 0
          %2035 = vmatprep.subr.bf16.mxu0 0
          %2036 = vmatpush1.bf16.msra.mxu0 0
          %2037 = vmatprep.subr.bf16.mxu0 0
          %2038 = vmatpush1.bf16.msra.mxu0 0
          %2039 = vmatprep.subr.bf16.mxu0 0
          %2040 = vmatpush1.bf16.msra.mxu0 0
          %2041 = vmatprep.subr.bf16.mxu0 0
          %2042 = vmatpush1.bf16.msra.mxu0 0
          %2043 = vmatprep.subr.bf16.mxu0 0
          %2044 = vmatpush1.bf16.msra.mxu0 0
          %2045 = vmatprep.subr.bf16.mxu0 0
          %2046 = vmatpush1.bf16.msra.mxu0 0
          %2047 = vmatprep.subr.bf16.mxu0 0
          %2048 = vmatpush1.bf16.msra.mxu0 0
          %2049 = vmatprep.subr.bf16.mxu0 0
          %2050 = vmatpush1.bf16.msra.mxu0 0
          %2051 = vmatprep.subr.bf16.mxu0 0
          %2052 = vmatpush1.bf16.msra.mxu0 0
          %2053 = vmatprep.mubr.bf16.mxu0 0
          %2054 = vmatmul.mubr.bf16.gmra.mrb[0].mxu0 %v2019
          %v2055 = vpop.f32.mrb[0].mxu0
          %v2056 = vadd.f32 0.0, %v2055
          %v2057 = vpop.f32.mrb[0].mxu0
          %v2058 = vpop.f32.mrb[0].mxu0
          %v2059 = vpop.f32.mrb[0].mxu0
          %2060 = vdwg.mxu0
          %2061 = vxpose.xlu0.c.b16.start [1/8] %v1646, 128
          %2062 = vxpose.xlu0.c.b16.cont [2/8] 0, 128
          %2063 = vxpose.xlu0.c.b16.cont [3/8] 0, 128
          %2064 = vxpose.xlu0.c.b16.cont [4/8] 0, 128
          %2065 = vxpose.xlu0.c.b16.cont [5/8] 0, 128
          %2066 = vxpose.xlu0.c.b16.cont [6/8] 0, 128
          %2067 = vxpose.xlu0.c.b16.cont [7/8] 0, 128
          %2068 = vxpose.xlu0.c.b16.end [8/8] 0, 128
          %v2069 = vpop.trf.xlu0
          %v2070 = vpop.trf.xlu0
          %v2071 = vpop.trf.xlu0
          %v2072 = vpop.trf.xlu0
          %v2073 = vpop.trf.xlu0
          %v2074 = vpop.trf.xlu0
          %v2075 = vpop.trf.xlu0
          %v2076 = vpop.trf.xlu0
          %v2078 = vsel %vm1663, %v2069, 0
          %2080 = vmatprep.subr.bf16.mxu0 0
          %2081 = vmatpush1.bf16.msra.mxu0 %v854
          %2082 = vmatprep.subr.bf16.mxu0 0
          %2083 = vmatpush1.bf16.msra.mxu0 0
          %2084 = vmatprep.subr.bf16.mxu0 0
          %2085 = vmatpush1.bf16.msra.mxu0 0
          %2086 = vmatprep.subr.bf16.mxu0 0
          %2087 = vmatpush1.bf16.msra.mxu0 0
          %2088 = vmatprep.subr.bf16.mxu0 0
          %2089 = vmatpush1.bf16.msra.mxu0 0
          %2090 = vmatprep.subr.bf16.mxu0 0
          %2091 = vmatpush1.bf16.msra.mxu0 0
          %2092 = vmatprep.subr.bf16.mxu0 0
          %2093 = vmatpush1.bf16.msra.mxu0 0
          %2094 = vmatprep.subr.bf16.mxu0 0
          %2095 = vmatpush1.bf16.msra.mxu0 0
          %2096 = vmatprep.subr.bf16.mxu0 0
          %2097 = vmatpush1.bf16.msra.mxu0 0
          %2098 = vmatprep.subr.bf16.mxu0 0
          %2099 = vmatpush1.bf16.msra.mxu0 0
          %2100 = vmatprep.subr.bf16.mxu0 0
          %2101 = vmatpush1.bf16.msra.mxu0 0
          %2102 = vmatprep.subr.bf16.mxu0 0
          %2103 = vmatpush1.bf16.msra.mxu0 0
          %2104 = vmatprep.subr.bf16.mxu0 0
          %2105 = vmatpush1.bf16.msra.mxu0 0
          %2106 = vmatprep.subr.bf16.mxu0 0
          %2107 = vmatpush1.bf16.msra.mxu0 0
          %2108 = vmatprep.subr.bf16.mxu0 0
          %2109 = vmatpush1.bf16.msra.mxu0 0
          %2110 = vmatprep.subr.bf16.mxu0 0
          %2111 = vmatpush1.bf16.msra.mxu0 0
          %2112 = vmatprep.mubr.bf16.mxu0 0
          %2113 = vmatmul.mubr.bf16.gmra.mrb[0].mxu0 %v2078
          %v2114 = vpop.f32.mrb[0].mxu0
          %v2115 = vadd.f32 0.0, %v2114
          %v2116 = vpop.f32.mrb[0].mxu0
          %v2117 = vpop.f32.mrb[0].mxu0
          %v2118 = vpop.f32.mrb[0].mxu0
          %2119 = vdwg.mxu0
          %v2120 = vld [vmem:[#allocation13] sm:$0xf]
          %v2121 = vld [vmem:[#allocation13 + $0x4] sm:$0xf]
          %v2122 = vld [vmem:[#allocation13 + $0x8] sm:$0xf]
          %v2123 = vld [vmem:[#allocation13 + $0xc] sm:$0xf]
          %v2124 = vld [vmem:[#allocation13 + $0x10] sm:$0xf]
          %v2125 = vld [vmem:[#allocation13 + $0x14] sm:$0xf]
          %v2126 = vld [vmem:[#allocation13 + $0x18] sm:$0xf]
          %v2127 = vld [vmem:[#allocation13 + $0x1c] sm:$0xf]
          %v2128 = vld [vmem:[#allocation13 + $0x20] sm:$0xf]
          %v2129 = vld [vmem:[#allocation13 + $0x24] sm:$0xf]
          %v2130 = vld [vmem:[#allocation13 + $0x28] sm:$0xf]
          %v2131 = vld [vmem:[#allocation13 + $0x2c] sm:$0xf]
          %v2132 = vld [vmem:[#allocation13 + $0x30] sm:$0xf]
          %v2133 = vld [vmem:[#allocation13 + $0x34] sm:$0xf]
          %v2134 = vld [vmem:[#allocation13 + $0x38] sm:$0xf]
          %v2135 = vld [vmem:[#allocation13 + $0x3c] sm:$0xf]
          %v2136 = vld [vmem:[%s11] sm:$0x1]
          %v2138 = vlaneseq
          %v2139 = vshrl.u32 %v2138, 7
          %v2140 = vsub.s32 0, %v2139
          %v2141 = vrot.slane %v2136, %v2140
          %v2159 = vunpack.c.l.b16 %v2120
          %v2160 = vunpack.c.l.b16 %v2121
          %v2161 = vunpack.c.l.b16 %v2122
          %v2162 = vunpack.c.l.b16 %v2123
          %v2163 = vunpack.c.l.b16 %v2124
          %v2164 = vunpack.c.l.b16 %v2125
          %v2165 = vunpack.c.l.b16 %v2126
          %v2166 = vunpack.c.l.b16 %v2127
          %v2167 = vunpack.c.l.b16 %v2128
          %v2168 = vunpack.c.l.b16 %v2129
          %v2169 = vunpack.c.l.b16 %v2130
          %v2170 = vunpack.c.l.b16 %v2131
          %v2171 = vunpack.c.l.b16 %v2132
          %v2172 = vunpack.c.l.b16 %v2133
          %v2173 = vunpack.c.l.b16 %v2134
          %v2174 = vunpack.c.l.b16 %v2135
          %v2175 = vpack.c.b16 %v2160, %v2159
          %v2176 = vpack.c.b16 %v2162, %v2161
          %v2177 = vpack.c.b16 %v2164, %v2163
          %v2178 = vpack.c.b16 %v2166, %v2165
          %v2179 = vpack.c.b16 %v2168, %v2167
          %v2180 = vpack.c.b16 %v2170, %v2169
          %v2181 = vpack.c.b16 %v2172, %v2171
          %v2182 = vpack.c.b16 %v2174, %v2173
          %2191 = vmatprep.subr.bf16.mxu0 0
          %2192 = vmatpush1.bf16.msra.mxu0 %v2175
          %2193 = vmatprep.subr.bf16.mxu0 0
          %2194 = vmatpush1.bf16.msra.mxu0 %v2176
          %2195 = vmatprep.subr.bf16.mxu0 0
          %2196 = vmatpush1.bf16.msra.mxu0 %v2177
          %2197 = vmatprep.subr.bf16.mxu0 0
          %2198 = vmatpush1.bf16.msra.mxu0 %v2178
          %2199 = vmatprep.subr.bf16.mxu0 0
          %2200 = vmatpush1.bf16.msra.mxu0 %v2179
          %2201 = vmatprep.subr.bf16.mxu0 0
          %2202 = vmatpush1.bf16.msra.mxu0 %v2180
          %2203 = vmatprep.subr.bf16.mxu0 0
          %2204 = vmatpush1.bf16.msra.mxu0 %v2181
          %2205 = vmatprep.subr.bf16.mxu0 0
          %2206 = vmatpush1.bf16.msra.mxu0 %v2182
          %2207 = vmatprep.subr.bf16.mxu0 0
          %2208 = vmatpush1.bf16.msra.mxu0 0
          %2209 = vmatprep.subr.bf16.mxu0 0
          %2210 = vmatpush1.bf16.msra.mxu0 0
          %2211 = vmatprep.subr.bf16.mxu0 0
          %2212 = vmatpush1.bf16.msra.mxu0 0
          %2213 = vmatprep.subr.bf16.mxu0 0
          %2214 = vmatpush1.bf16.msra.mxu0 0
          %2215 = vmatprep.subr.bf16.mxu0 0
          %2216 = vmatpush1.bf16.msra.mxu0 0
          %2217 = vmatprep.subr.bf16.mxu0 0
          %2218 = vmatpush1.bf16.msra.mxu0 0
          %2219 = vmatprep.subr.bf16.mxu0 0
          %2220 = vmatpush1.bf16.msra.mxu0 0
          %2221 = vmatprep.subr.bf16.mxu0 0
          %2222 = vmatpush1.bf16.msra.mxu0 0
          %2223 = vmatprep.mubr.bf16.mxu0 0
          %2224 = vmatmul.mubr.bf16.gmra.mrb[0].mxu0 %v774
          %v2225 = vpop.f32.mrb[0].mxu0
          %v2226 = vadd.f32 %v2141, %v2225
          %v2227 = vpop.f32.mrb[0].mxu0
          %v2228 = vpop.f32.mrb[0].mxu0
          %v2229 = vpop.f32.mrb[0].mxu0
          %2230 = vdwg.mxu0
          %v2231 = vmax.f32 %v2226, 0.0
          %v2232 = vpack.c.bf16 %v1702, %v1702
          %v2233 = vpack.c.bf16 %v1761, %v1761
          %v2234 = vpack.c.bf16 %v1820, %v1820
          %v2235 = vpack.c.bf16 %v1879, %v1879
          %v2236 = vpack.c.bf16 %v1938, %v1938
          %v2237 = vpack.c.bf16 %v1997, %v1997
          %v2238 = vpack.c.bf16 %v2056, %v2056
          %v2239 = vpack.c.bf16 %v2115, %v2115
          %v2240 = vld [vmem:[#allocation15] sm:$0xf]
          %v2241 = vld [vmem:[#allocation15 + $0x4] sm:$0xf]
          %v2242 = vld [vmem:[#allocation15 + $0x8] sm:$0xf]
          %v2243 = vld [vmem:[#allocation15 + $0xc] sm:$0xf]
          %v2244 = vld [vmem:[#allocation15 + $0x10] sm:$0xf]
          %v2245 = vld [vmem:[#allocation15 + $0x14] sm:$0xf]
          %v2246 = vld [vmem:[#allocation15 + $0x18] sm:$0xf]
          %v2247 = vld [vmem:[#allocation15 + $0x1c] sm:$0xf]
          %v2248 = vld [vmem:[#allocation15 + $0x20] sm:$0xf]
          %v2249 = vld [vmem:[#allocation15 + $0x24] sm:$0xf]
          %v2250 = vld [vmem:[#allocation15 + $0x28] sm:$0xf]
          %v2251 = vld [vmem:[#allocation15 + $0x2c] sm:$0xf]
          %v2252 = vld [vmem:[#allocation15 + $0x30] sm:$0xf]
          %v2253 = vld [vmem:[#allocation15 + $0x34] sm:$0xf]
          %v2254 = vld [vmem:[#allocation15 + $0x38] sm:$0xf]
          %v2255 = vld [vmem:[#allocation15 + $0x3c] sm:$0xf]
          %v2256 = vld [vmem:[#allocation16] sm:$0x1]
          %v2258 = vlaneseq
          %v2259 = vshrl.u32 %v2258, 7
          %v2260 = vsub.s32 0, %v2259
          %v2261 = vrot.slane %v2256, %v2260
          %v2271 = vunpack.c.l.b16 %v2232
          %v2272 = vunpack.c.l.b16 %v2233
          %v2273 = vunpack.c.l.b16 %v2234
          %v2274 = vunpack.c.l.b16 %v2235
          %v2275 = vunpack.c.l.b16 %v2236
          %v2276 = vunpack.c.l.b16 %v2237
          %v2277 = vunpack.c.l.b16 %v2238
          %v2278 = vunpack.c.l.b16 %v2239
          %v2279 = vrot.slane %v2272, 7
          %vm2280 = vcmask 1041409
          %v2281 = vsel %vm2280, %v2279, %v2271
          %v2282 = vrot.slane %v2273, 6
          %vm2283 = vcmask 1042434
          %v2284 = vsel %vm2283, %v2282, %v2281
          %v2285 = vrot.slane %v2274, 5
          %vm2286 = vcmask 1043459
          %v2287 = vsel %vm2286, %v2285, %v2284
          %v2288 = vrot.slane %v2275, 4
          %vm2289 = vcmask 1044484
          %v2290 = vsel %vm2289, %v2288, %v2287
          %v2291 = vrot.slane %v2276, 3
          %vm2292 = vcmask 1045509
          %v2293 = vsel %vm2292, %v2291, %v2290
          %v2294 = vrot.slane %v2277, 2
          %vm2295 = vcmask 1046534
          %v2296 = vsel %vm2295, %v2294, %v2293
          %v2297 = vrot.slane %v2278, 1
          %vm2298 = vcmask 1047559
          %v2299 = vsel %vm2298, %v2297, %v2296
          %v2300 = vpack.c.b16 %v2299, %v2299
          %v2318 = vunpack.c.l.b16 %v2240
          %v2319 = vunpack.c.l.b16 %v2241
          %v2320 = vunpack.c.l.b16 %v2242
          %v2321 = vunpack.c.l.b16 %v2243
          %v2322 = vunpack.c.l.b16 %v2244
          %v2323 = vunpack.c.l.b16 %v2245
          %v2324 = vunpack.c.l.b16 %v2246
          %v2325 = vunpack.c.l.b16 %v2247
          %v2326 = vunpack.c.l.b16 %v2248
          %v2327 = vunpack.c.l.b16 %v2249
          %v2328 = vunpack.c.l.b16 %v2250
          %v2329 = vunpack.c.l.b16 %v2251
          %v2330 = vunpack.c.l.b16 %v2252
          %v2331 = vunpack.c.l.b16 %v2253
          %v2332 = vunpack.c.l.b16 %v2254
          %v2333 = vunpack.c.l.b16 %v2255
          %v2334 = vpack.c.b16 %v2319, %v2318
          %v2335 = vpack.c.b16 %v2321, %v2320
          %v2336 = vpack.c.b16 %v2323, %v2322
          %v2337 = vpack.c.b16 %v2325, %v2324
          %v2338 = vpack.c.b16 %v2327, %v2326
          %v2339 = vpack.c.b16 %v2329, %v2328
          %v2340 = vpack.c.b16 %v2331, %v2330
          %v2341 = vpack.c.b16 %v2333, %v2332
          %2350 = vmatprep.subr.bf16.mxu0 0
          %2351 = vmatpush1.bf16.msra.mxu0 %v2334
          %2352 = vmatprep.subr.bf16.mxu0 0
          %2353 = vmatpush1.bf16.msra.mxu0 %v2335
          %2354 = vmatprep.subr.bf16.mxu0 0
          %2355 = vmatpush1.bf16.msra.mxu0 %v2336
          %2356 = vmatprep.subr.bf16.mxu0 0
          %2357 = vmatpush1.bf16.msra.mxu0 %v2337
          %2358 = vmatprep.subr.bf16.mxu0 0
          %2359 = vmatpush1.bf16.msra.mxu0 %v2338
          %2360 = vmatprep.subr.bf16.mxu0 0
          %2361 = vmatpush1.bf16.msra.mxu0 %v2339
          %2362 = vmatprep.subr.bf16.mxu0 0
          %2363 = vmatpush1.bf16.msra.mxu0 %v2340
          %2364 = vmatprep.subr.bf16.mxu0 0
          %2365 = vmatpush1.bf16.msra.mxu0 %v2341
          %2366 = vmatprep.subr.bf16.mxu0 0
          %2367 = vmatpush1.bf16.msra.mxu0 0
          %2368 = vmatprep.subr.bf16.mxu0 0
          %2369 = vmatpush1.bf16.msra.mxu0 0
          %2370 = vmatprep.subr.bf16.mxu0 0
          %2371 = vmatpush1.bf16.msra.mxu0 0
          %2372 = vmatprep.subr.bf16.mxu0 0
          %2373 = vmatpush1.bf16.msra.mxu0 0
          %2374 = vmatprep.subr.bf16.mxu0 0
          %2375 = vmatpush1.bf16.msra.mxu0 0
          %2376 = vmatprep.subr.bf16.mxu0 0
          %2377 = vmatpush1.bf16.msra.mxu0 0
          %2378 = vmatprep.subr.bf16.mxu0 0
          %2379 = vmatpush1.bf16.msra.mxu0 0
          %2380 = vmatprep.subr.bf16.mxu0 0
          %2381 = vmatpush1.bf16.msra.mxu0 0
          %2382 = vmatprep.mubr.bf16.mxu0 0
          %2383 = vmatmul.mubr.bf16.gmra.mrb[0].mxu0 %v2300
          %v2384 = vpop.f32.mrb[0].mxu0
          %v2385 = vadd.f32 %v2261, %v2384
          %v2386 = vpop.f32.mrb[0].mxu0
          %v2387 = vpop.f32.mrb[0].mxu0
          %v2388 = vpop.f32.mrb[0].mxu0
          %2389 = vdwg.mxu0
          %v2390 = vmax.f32 %v2385, 0.0
          %v2391 = vmul.f32 %v2231, %v2390
          %v2392 = vpack.c.bf16 %v2391, %v2391
          %v2393 = vld [vmem:[%s14] sm:$0xf]
          %v2394 = vld [vmem:[%s14 + $0x4] sm:$0xf]
          %v2395 = vld [vmem:[%s14 + $0x8] sm:$0xf]
          %v2396 = vld [vmem:[%s14 + $0xc] sm:$0xf]
          %v2397 = vld [vmem:[%s14 + $0x10] sm:$0xf]
          %v2398 = vld [vmem:[%s14 + $0x14] sm:$0xf]
          %v2399 = vld [vmem:[%s14 + $0x18] sm:$0xf]
          %v2400 = vld [vmem:[%s14 + $0x1c] sm:$0xf]
          %v2401 = vld [vmem:[%s14 + $0x20] sm:$0xf]
          %v2402 = vld [vmem:[%s14 + $0x24] sm:$0xf]
          %v2403 = vld [vmem:[%s14 + $0x28] sm:$0xf]
          %v2404 = vld [vmem:[%s14 + $0x2c] sm:$0xf]
          %v2405 = vld [vmem:[%s14 + $0x30] sm:$0xf]
          %v2406 = vld [vmem:[%s14 + $0x34] sm:$0xf]
          %v2407 = vld [vmem:[%s14 + $0x38] sm:$0xf]
          %v2408 = vld [vmem:[%s14 + $0x3c] sm:$0xf]
          %v2409 = vld [vmem:[%s15] sm:$0x1]
          %v2411 = vlaneseq
          %v2412 = vshrl.u32 %v2411, 7
          %v2413 = vsub.s32 0, %v2412
          %v2414 = vrot.slane %v2409, %v2413
          %v2432 = vunpack.c.l.b16 %v2393
          %v2433 = vunpack.c.l.b16 %v2394
          %v2434 = vunpack.c.l.b16 %v2395
          %v2435 = vunpack.c.l.b16 %v2396
          %v2436 = vunpack.c.l.b16 %v2397
          %v2437 = vunpack.c.l.b16 %v2398
          %v2438 = vunpack.c.l.b16 %v2399
          %v2439 = vunpack.c.l.b16 %v2400
          %v2440 = vunpack.c.l.b16 %v2401
          %v2441 = vunpack.c.l.b16 %v2402
          %v2442 = vunpack.c.l.b16 %v2403
          %v2443 = vunpack.c.l.b16 %v2404
          %v2444 = vunpack.c.l.b16 %v2405
          %v2445 = vunpack.c.l.b16 %v2406
          %v2446 = vunpack.c.l.b16 %v2407
          %v2447 = vunpack.c.l.b16 %v2408
          %v2448 = vpack.c.b16 %v2433, %v2432
          %v2449 = vpack.c.b16 %v2435, %v2434
          %v2450 = vpack.c.b16 %v2437, %v2436
          %v2451 = vpack.c.b16 %v2439, %v2438
          %v2452 = vpack.c.b16 %v2441, %v2440
          %v2453 = vpack.c.b16 %v2443, %v2442
          %v2454 = vpack.c.b16 %v2445, %v2444
          %v2455 = vpack.c.b16 %v2447, %v2446
          %2464 = vmatprep.subr.bf16.mxu0 0
          %2465 = vmatpush1.bf16.msra.mxu0 %v2448
          %2466 = vmatprep.subr.bf16.mxu0 0
          %2467 = vmatpush1.bf16.msra.mxu0 %v2449
          %2468 = vmatprep.subr.bf16.mxu0 0
          %2469 = vmatpush1.bf16.msra.mxu0 %v2450
          %2470 = vmatprep.subr.bf16.mxu0 0
          %2471 = vmatpush1.bf16.msra.mxu0 %v2451
          %2472 = vmatprep.subr.bf16.mxu0 0
          %2473 = vmatpush1.bf16.msra.mxu0 %v2452
          %2474 = vmatprep.subr.bf16.mxu0 0
          %2475 = vmatpush1.bf16.msra.mxu0 %v2453
          %2476 = vmatprep.subr.bf16.mxu0 0
          %2477 = vmatpush1.bf16.msra.mxu0 %v2454
          %2478 = vmatprep.subr.bf16.mxu0 0
          %2479 = vmatpush1.bf16.msra.mxu0 %v2455
          %2480 = vmatprep.subr.bf16.mxu0 0
          %2481 = vmatpush1.bf16.msra.mxu0 0
          %2482 = vmatprep.subr.bf16.mxu0 0
          %2483 = vmatpush1.bf16.msra.mxu0 0
          %2484 = vmatprep.subr.bf16.mxu0 0
          %2485 = vmatpush1.bf16.msra.mxu0 0
          %2486 = vmatprep.subr.bf16.mxu0 0
          %2487 = vmatpush1.bf16.msra.mxu0 0
          %2488 = vmatprep.subr.bf16.mxu0 0
          %2489 = vmatpush1.bf16.msra.mxu0 0
          %2490 = vmatprep.subr.bf16.mxu0 0
          %2491 = vmatpush1.bf16.msra.mxu0 0
          %2492 = vmatprep.subr.bf16.mxu0 0
          %2493 = vmatpush1.bf16.msra.mxu0 0
          %2494 = vmatprep.subr.bf16.mxu0 0
          %2495 = vmatpush1.bf16.msra.mxu0 0
          %2496 = vmatprep.mubr.bf16.mxu0 0
          %2497 = vmatmul.mubr.bf16.gmra.mrb[0].mxu0 %v2392
          %v2498 = vpop.f32.mrb[0].mxu0
          %v2499 = vadd.f32 %v2414, %v2498
          %v2500 = vpop.f32.mrb[0].mxu0
          %v2501 = vpop.f32.mrb[0].mxu0
          %v2502 = vpop.f32.mrb[0].mxu0
          %2503 = vdwg.mxu0
          %v2504 = vmax.f32 %v2499, 0.0
          %v2505 = vpack.c.bf16 %v2504, %v2504
          %2506 = vst [vmem:[#allocation2] sm:$0xf] %v2505
        $region132: #{tpu_custom_call.1} parent=91 // pred_fallthru
          _
        %v2507 = vld [vmem:[#allocation2] sm:$0xf]
        %v2508 = vld [vmem:[#allocation18] sm:$0xff]
        %v2509 = vld [vmem:[#allocation18 + $0x8] sm:$0xff]
        %v2510 = vld [vmem:[#allocation18 + $0x10] sm:$0xff]
        %v2511 = vld [vmem:[#allocation18 + $0x18] sm:$0xff]
        %v2512 = vld [vmem:[#allocation18 + $0x20] sm:$0xff]
        %v2513 = vld [vmem:[#allocation18 + $0x28] sm:$0xff]
        %v2514 = vld [vmem:[#allocation18 + $0x30] sm:$0xff]
        %v2515 = vld [vmem:[#allocation18 + $0x38] sm:$0xff]
        %v2516 = vld [vmem:[#allocation18 + $0x40] sm:$0xff]
        %v2517 = vld [vmem:[#allocation18 + $0x48] sm:$0xff]
        %v2518 = vld [vmem:[#allocation18 + $0x50] sm:$0xff]
        %v2519 = vld [vmem:[#allocation18 + $0x58] sm:$0xff]
        %v2520 = vld [vmem:[#allocation18 + $0x60] sm:$0xff]
        %v2521 = vld [vmem:[#allocation18 + $0x68] sm:$0xff]
        %v2522 = vld [vmem:[#allocation18 + $0x70] sm:$0xff]
        %v2523 = vld [vmem:[#allocation18 + $0x78] sm:$0xff]
        %v2524 = vld [vmem:[%s17] sm:$0x3]
        %v2526 = vlaneseq
        %v2527 = vshrl.u32 %v2526, 7
        %v2528 = vsub.s32 0, %v2527
        %v2529 = vrot.slane %v2524, %v2528
        %v2530 = vlaneseq
        %v2531 = vshrl.u32 %v2530, 7
        %v2532 = vsub.s32 1, %v2531
        %v2533 = vrot.slane %v2524, %v2532
        %v2552 = vunpack.c.l.b16 %v2508
        %v2553 = vunpack.c.h.b16 %v2508
        %v2554 = vunpack.c.l.b16 %v2509
        %v2555 = vunpack.c.h.b16 %v2509
        %v2556 = vunpack.c.l.b16 %v2510
        %v2557 = vunpack.c.h.b16 %v2510
        %v2558 = vunpack.c.l.b16 %v2511
        %v2559 = vunpack.c.h.b16 %v2511
        %v2560 = vunpack.c.l.b16 %v2512
        %v2561 = vunpack.c.h.b16 %v2512
        %v2562 = vunpack.c.l.b16 %v2513
        %v2563 = vunpack.c.h.b16 %v2513
        %v2564 = vunpack.c.l.b16 %v2514
        %v2565 = vunpack.c.h.b16 %v2514
        %v2566 = vunpack.c.l.b16 %v2515
        %v2567 = vunpack.c.h.b16 %v2515
        %v2568 = vunpack.c.l.b16 %v2516
        %v2569 = vunpack.c.h.b16 %v2516
        %v2570 = vunpack.c.l.b16 %v2517
        %v2571 = vunpack.c.h.b16 %v2517
        %v2572 = vunpack.c.l.b16 %v2518
        %v2573 = vunpack.c.h.b16 %v2518
        %v2574 = vunpack.c.l.b16 %v2519
        %v2575 = vunpack.c.h.b16 %v2519
        %v2576 = vunpack.c.l.b16 %v2520
        %v2577 = vunpack.c.h.b16 %v2520
        %v2578 = vunpack.c.l.b16 %v2521
        %v2579 = vunpack.c.h.b16 %v2521
        %v2580 = vunpack.c.l.b16 %v2522
        %v2581 = vunpack.c.h.b16 %v2522
        %v2582 = vunpack.c.l.b16 %v2523
        %v2583 = vunpack.c.h.b16 %v2523
        %v2584 = vpack.c.b16 %v2554, %v2552
        %v2585 = vpack.c.b16 %v2555, %v2553
        %v2586 = vpack.c.b16 %v2558, %v2556
        %v2587 = vpack.c.b16 %v2559, %v2557
        %v2588 = vpack.c.b16 %v2562, %v2560
        %v2589 = vpack.c.b16 %v2563, %v2561
        %v2590 = vpack.c.b16 %v2566, %v2564
        %v2591 = vpack.c.b16 %v2567, %v2565
        %v2592 = vpack.c.b16 %v2570, %v2568
        %v2593 = vpack.c.b16 %v2571, %v2569
        %v2594 = vpack.c.b16 %v2574, %v2572
        %v2595 = vpack.c.b16 %v2575, %v2573
        %v2596 = vpack.c.b16 %v2578, %v2576
        %v2597 = vpack.c.b16 %v2579, %v2577
        %v2598 = vpack.c.b16 %v2582, %v2580
        %v2599 = vpack.c.b16 %v2583, %v2581
        %2616 = vmatprep.subr.bf16.mxu0 %v2585
        %2617 = vmatpush1.bf16.msra.mxu0 %v2584
        %2618 = vmatprep.subr.bf16.mxu0 %v2587
        %2619 = vmatpush1.bf16.msra.mxu0 %v2586
        %2620 = vmatprep.subr.bf16.mxu0 %v2589
        %2621 = vmatpush1.bf16.msra.mxu0 %v2588
        %2622 = vmatprep.subr.bf16.mxu0 %v2591
        %2623 = vmatpush1.bf16.msra.mxu0 %v2590
        %2624 = vmatprep.subr.bf16.mxu0 %v2593
        %2625 = vmatpush1.bf16.msra.mxu0 %v2592
        %2626 = vmatprep.subr.bf16.mxu0 %v2595
        %2627 = vmatpush1.bf16.msra.mxu0 %v2594
        %2628 = vmatprep.subr.bf16.mxu0 %v2597
        %2629 = vmatpush1.bf16.msra.mxu0 %v2596
        %2630 = vmatprep.subr.bf16.mxu0 %v2599
        %2631 = vmatpush1.bf16.msra.mxu0 %v2598
        %2632 = vmatprep.subr.bf16.mxu0 0
        %2633 = vmatpush1.bf16.msra.mxu0 0
        %2634 = vmatprep.subr.bf16.mxu0 0
        %2635 = vmatpush1.bf16.msra.mxu0 0
        %2636 = vmatprep.subr.bf16.mxu0 0
        %2637 = vmatpush1.bf16.msra.mxu0 0
        %2638 = vmatprep.subr.bf16.mxu0 0
        %2639 = vmatpush1.bf16.msra.mxu0 0
        %2640 = vmatprep.subr.bf16.mxu0 0
        %2641 = vmatpush1.bf16.msra.mxu0 0
        %2642 = vmatprep.subr.bf16.mxu0 0
        %2643 = vmatpush1.bf16.msra.mxu0 0
        %2644 = vmatprep.subr.bf16.mxu0 0
        %2645 = vmatpush1.bf16.msra.mxu0 0
        %2646 = vmatprep.subr.bf16.mxu0 0
        %2647 = vmatpush1.bf16.msra.mxu0 0
        %2648 = vmatprep.mubr.bf16.mxu0 0
        %2649 = vmatmul.mubr.bf16.gmra.mrb[0].mxu0 %v2507
        %v2650 = vpop.f32.mrb[0].mxu0
        %v2651 = vadd.f32 %v2529, %v2650
        %v2652 = vpop.f32.mrb[0].mxu0
        %v2653 = vadd.f32 %v2533, %v2652
        %v2654 = vpop.f32.mrb[0].mxu0
        %v2655 = vpop.f32.mrb[0].mxu0
        %2656 = vdwg.mxu0
        %2657 = vst [vmem:[%s765] sm:$0xff] %v2651
        %2658 = vst [vmem:[%s765 + $0x8] sm:$0xff] %v2653
        %s2659 = sand.u32 %s457, 1
        %s2660 = scalar_lea.sflag [#allocation6], %s2659
        %s2661 = sand.u32 %s457, 1
        %s2662 = smul.addr %s2661, 16
        %s2663 = scalar_lea.vmem [#allocation19], %s2662
        // Predicated region
        $region133: #{tpu_custom_call.1} parent=91 // pred_check
          %p2664 = pneg %p467
        $region134: #{tpu_custom_call.1} parent=91 // pred_check_branch
          %2666 = sbr.rel (%p2664) target = $region136
        $region135: #{tpu_custom_call.1} parent=91 // pred_region
          %s2667 = smul.u32 2, %s47
          %s2669 = ssub.s32 256, 256
          %2670 = vsyncadd %s2660, %s2669
          %s2671 = smul.addr %s46, 2
          %s2672 = sadd.s32 %s2667, %s2671
          %s2673 = smul.addr %s2672, 128
          %s2674 = scalar_lea.hbm %s18, %s2673
          %s2676 = sshll.u32 %s2663, 4
          %s2677 = int_to_ptr.vmem [resolvable:$true] %s2676
          %2679 = dma.vmem_to_hbm [thread:$0]  %s2677, 256, %s2674, %s2660
        $region136: #{tpu_custom_call.1} parent=91 // pred_fallthru
          _
      $region92: #{tpu_custom_call.1} parent=5 // pred_fallthru
        _
      %p2680 = scmp.le.s32.totalorder 2, %s37
      // Predicated region
      $region137: #{tpu_custom_call.1} parent=5 // pred_check
        %p2681 = pneg %p2680
      $region138: #{tpu_custom_call.1} parent=5 // pred_check_branch
        %2683 = sbr.rel (%p2681) target = $region140
      $region139: #{tpu_custom_call.1} parent=5 // pred_region
        %s2684 = ssub.s32 %s37, 2
        // Predicated region
        $region141: #{tpu_custom_call.1} parent=139 // pred_check
          %p2685 = pneg %p473
        $region142: #{tpu_custom_call.1} parent=139 // pred_check_branch
          %2687 = sbr.rel (%p2685) target = $region144
        $region143: #{tpu_custom_call.1} parent=139 // pred_region
          %s2688 = sand.u32 %s458, 1
          %s2689 = scalar_lea.sflag [#allocation6], %s2688
          %s2690 = sand.u32 %s458, 1
          %s2691 = smul.addr %s2690, 16
          %s2692 = scalar_lea.vmem [#allocation19], %s2691
          %2693 = dma.done %s2689, 256
        $region144: #{tpu_custom_call.1} parent=139 // pred_fallthru
          _
      $region140: #{tpu_custom_call.1} parent=5 // pred_fallthru
        _
    $region6: #{tpu_custom_call.1} parent=1 // loop_footer
      %s41 = sadd.s32 1, %s37
    $region7: #{tpu_custom_call.1} parent=1 // loop_footer_branch
      %36 = sbr.rel target = $region3
    $region8: #{tpu_custom_call.1} parent=1 // loop_exit
      _
    %2694 = vsyncpa [#allocation5], 1
    %s2695 = scalar_lea.sflag [#allocation5], 1
    %2696 = vsyncpa %s2695, 1
    %2697 = vsyncpa [#allocation8], 1
    %s2698 = scalar_lea.sflag [#allocation8], 1
    %2699 = vsyncpa %s2698, 1
    %2700 = vsyncpa [#allocation11], 1
    %2701 = vsyncpa [#allocation14], 1
    %2702 = vsyncpa [#allocation17], 1
    %2703 = vsyncpa [#allocation6], 1
    %s2704 = scalar_lea.sflag [#allocation6], 1
    %2705 = vsyncpa %s2704, 1

// kernel: tpu_custom_call.1
$region0: #{tpu_custom_call.1}
  #allocation0 [shape = 'u32[]', space=smem, size = 0x4, offset = 0x4, fixed_abs, tag = 'smem constant byte address 0x4 - core index']
  #allocation1 [shape = 'u32[144,128]{1,0:T(1,128)}', space=vmem, size = 0x12000, scoped, tag = 'internal scratch']
  #allocation2 [shape = 'bf16[8,128]{1,0:T(8,128)(2,1)}', space=vmem, size = 0x800, scoped, tag = 'scratch operand']
  #allocation3 [shape = 'f32[1,1]{1,0:T(1,128)S(6)}', space=smem, size = 0x200, scoped, tag = 'scoped memory for tpu_custom_call.1']
  %s0 = inlined_call_operand.hbm [shape: f32[16,128], index: 0, kind: input, shape index: {}]
  %s1 = inlined_call_operand.hbm [shape: bf16[16,16,128], index: 1, kind: input, shape index: {}]
  %s2 = inlined_call_operand.hbm [shape: f32[16,16], index: 2, kind: input, shape index: {}]
  %s3 = inlined_call_operand.vmem [shape: f32[16,1], index: 3, kind: input, shape index: {}]
  %s4 = inlined_call_operand.hbm [shape: bf16[128,128], index: 4, kind: input, shape index: {}]
  %s5 = inlined_call_operand.vmem [shape: f32[1,128], index: 5, kind: input, shape index: {}]
  %s6 = inlined_call_operand.hbm [shape: bf16[128,128], index: 6, kind: input, shape index: {}]
  %s7 = inlined_call_operand.vmem [shape: f32[1,128], index: 7, kind: input, shape index: {}]
  %s8 = inlined_call_operand.vmem [shape: f32[1,128], index: 8, kind: input, shape index: {}]
  %s9 = inlined_call_operand.<no memory space> [shape: f32[1,1], index: 9, kind: input, shape index: {}]
  %s10 = inlined_call_operand.hbm [shape: bf16[128,128], index: 10, kind: input, shape index: {}]
  %s11 = inlined_call_operand.vmem [shape: f32[1,128], index: 11, kind: input, shape index: {}]
  %s12 = inlined_call_operand.hbm [shape: bf16[128,128], index: 12, kind: input, shape index: {}]
  %s13 = inlined_call_operand.hbm [shape: f32[1,128], index: 13, kind: input, shape index: {}]
  %s14 = inlined_call_operand.vmem [shape: bf16[128,128], index: 14, kind: input, shape index: {}]
  %s15 = inlined_call_operand.vmem [shape: f32[1,128], index: 15, kind: input, shape index: {}]
  %s16 = inlined_call_operand.hbm [shape: bf16[128,256], index: 16, kind: input, shape index: {}]
  %s17 = inlined_call_operand.vmem [shape: f32[1,256], index: 17, kind: input, shape index: {}]
  %s18 = inlined_call_operand.hbm [shape: f32[16,256], index: 18, kind: output, shape index: {}]
  %s19 = sld [smem:[#allocation0]]
  $region145: #{tpu_custom_call.1} parent=0
    _
  %s21 = ssub.s32 1, %s19
  %s22 = scalar_select 0, %s21, %s19
  %23 = sst [smem:[#allocation3]] %s9
  $region1: #{tpu_custom_call.1} parent=0
    #allocation4 [shape = 'u8[8192]{0}', space=vmem, size = 0x2000, scoped, tag = 'input window, operand 0']
    #allocation5 [shape = 's32[2]{0}', space=sflag, size = 0x8, scoped, tag = 'scoped memory for tpu_custom_call.1']
    #allocation6 [shape = 's32[2]{0}', space=sflag, size = 0x8, scoped, tag = 'scoped memory for tpu_custom_call.1']
    #allocation7 [shape = 'u8[65536]{0}', space=vmem, size = 0x10000, scoped, tag = 'input window, operand 1']
    #allocation8 [shape = 's32[2]{0}', space=sflag, size = 0x8, scoped, tag = 'scoped memory for tpu_custom_call.1']
    #allocation9 [shape = 'u8[8192]{0}', space=vmem, size = 0x2000, scoped, tag = 'input window, operand 2']
    #allocation10 [shape = 'u8[32768]{0}', space=vmem, size = 0x8000, scoped, tag = 'input window, operand 4, single buffered']
    #allocation11 [shape = 's32[1]{0}', space=sflag, size = 0x4, scoped, tag = 'scoped memory for tpu_custom_call.1']
    #allocation12 [shape = 'u8[32768]{0}', space=vmem, size = 0x8000, scoped, tag = 'input window, operand 6, single buffered']
    #allocation13 [shape = 'u8[32768]{0}', space=vmem, size = 0x8000, scoped, tag = 'input window, operand 10, single buffered']
    #allocation14 [shape = 's32[1]{0}', space=sflag, size = 0x4, scoped, tag = 'scoped memory for tpu_custom_call.1']
    #allocation15 [shape = 'u8[32768]{0}', space=vmem, size = 0x8000, scoped, tag = 'input window, operand 12, single buffered']
    #allocation16 [shape = 'u8[512]{0}', space=vmem, size = 0x400, scoped, tag = 'input window, operand 13, single buffered']
    #allocation17 [shape = 's32[1]{0}', space=sflag, size = 0x4, scoped, tag = 'scoped memory for tpu_custom_call.1']
    #allocation18 [shape = 'u8[65536]{0}', space=vmem, size = 0x10000, scoped, tag = 'input window, operand 16, single buffered']
    #allocation19 [shape = 'u8[16384]{0}', space=vmem, size = 0x4000, scoped, tag = 'output window, operand 0']
    %24 = vsyncpa [#allocation5], 0
    %s25 = scalar_lea.sflag [#allocation5], 1
    %26 = vsyncpa %s25, 0
    %27 = vsyncpa [#allocation8], 0
    %s28 = scalar_lea.sflag [#allocation8], 1
    %29 = vsyncpa %s28, 0
    %30 = vsyncpa [#allocation11], 0
    %31 = vsyncpa [#allocation14], 0
    %32 = vsyncpa [#allocation17], 0
    %33 = vsyncpa [#allocation6], 0
    %s34 = scalar_lea.sflag [#allocation6], 1
    %35 = vsyncpa %s34, 0
    loop: start=0, step=1, limit=4
    $region2: #{tpu_custom_call.1} parent=1 // loop_pre_header
      _
    $region3: #{tpu_custom_call.1} parent=1 // loop_header
      %s37 = sphi 0, %s41
      %p38 = scmp.ge.s32.totalorder %s37, 4
      %s44 = sphi 0, %s56
      %s45 = sphi 0, %s52
      %s46 = sphi 0, %s44
      %s47 = sphi 0, %s45
      %s48 = sphi 0, %s46
      %s49 = sphi 0, %s47
      %s59 = sphi 0, %s61
      %s62 = sphi 0, %s59
      %s63 = sphi 0, %s62
      %s79 = sphi 0, %s63
      %s85 = sphi 0, %s87
      %s88 = sphi 0, %s85
      %s89 = sphi 0, %s88
      %s105 = sphi 0, %s89
      %s111 = sphi 0, %s113
      %s114 = sphi 0, %s111
      %s115 = sphi 0, %s114
      %s131 = sphi 0, %s115
      %s135 = sphi 0, %s135
      %s137 = sphi 0, %s135
      %s138 = sphi 0, %s137
      %s152 = sphi 0, %s138
      %s156 = sphi 0, %s156
      %s158 = sphi 0, %s156
      %s159 = sphi 0, %s158
      %s173 = sphi 0, %s159
      %s177 = sphi 0, %s177
      %s179 = sphi 0, %s177
      %s180 = sphi 0, %s179
      %s194 = sphi 0, %s180
      %s198 = sphi 0, %s198
      %s200 = sphi 0, %s198
      %s201 = sphi 0, %s200
      %s215 = sphi 0, %s201
      %s219 = sphi 0, %s219
      %s221 = sphi 0, %s219
      %s222 = sphi 0, %s221
      %s236 = sphi 0, %s222
      %s240 = sphi 0, %s240
      %s242 = sphi 0, %s240
      %s243 = sphi 0, %s242
      %s257 = sphi 0, %s243
      %s261 = sphi 0, %s261
      %s263 = sphi 0, %s261
      %s264 = sphi 0, %s263
      %s278 = sphi 0, %s264
      %s282 = sphi 0, %s282
      %s284 = sphi 0, %s282
      %s285 = sphi 0, %s284
      %s299 = sphi 0, %s285
      %s303 = sphi 0, %s303
      %s305 = sphi 0, %s303
      %s306 = sphi 0, %s305
      %s320 = sphi 0, %s306
      %s324 = sphi 0, %s324
      %s326 = sphi 0, %s324
      %s327 = sphi 0, %s326
      %s341 = sphi 0, %s327
      %s345 = sphi 0, %s345
      %s347 = sphi 0, %s345
      %s348 = sphi 0, %s347
      %s362 = sphi 0, %s348
      %s366 = sphi 0, %s366
      %s368 = sphi 0, %s366
      %s369 = sphi 0, %s368
      %s383 = sphi 0, %s369
      %s387 = sphi 0, %s387
      %s389 = sphi 0, %s387
      %s390 = sphi 0, %s389
      %s404 = sphi 0, %s390
      %s408 = sphi 0, %s408
      %s410 = sphi 0, %s408
      %s411 = sphi 0, %s410
      %s425 = sphi 0, %s411
      %s429 = sphi 0, %s429
      %s431 = sphi 0, %s429
      %s432 = sphi 0, %s431
      %s446 = sphi 0, %s432
      %s454 = sphi 0, %s456
      %s457 = sphi 0, %s454
      %s458 = sphi 0, %s457
      %s474 = sphi 0, %s458
    $region4: #{tpu_custom_call.1} parent=1 // loop_header_branch
      %40 = sbr.rel (%p38) target = $region8
    $region5: #{tpu_custom_call.1} parent=1 // loop_body
      %s42 = ssub.s32 %s37, 1
      %s43 = ssub.s32 %s37, 2
      %s50 = sadd.s32 1, %s45
      %p51 = scmp.ge.s32.totalorder %s50, 1
      %s52 = scalar_select %p51, 0, %s50
      %s53 = sadd.s32 1, %s44
      %s54 = scalar_select %p51, %s53, %s44
      %p55 = scmp.ge.s32.totalorder %s54, 2
      %s56 = scalar_select %p55, 0, %s54
      %s57 = ssub.s32 %s44, %s56
      %p58 = scmp.eq.s32.totalorder %s57, 0
      %s60 = sadd.s32 %s59, 1
      %s61 = scalar_select %p58, %s59, %s60
      %p64 = pneg %p58
      %p65 = scmp.eq.s32.totalorder %s37, 1
      %p66 = por %p64, %p65
      %p67 = scmp.ne.s32.totalorder %s59, %s62
      %p68 = scmp.eq.s32.totalorder %s37, 0
      %p69 = por %p67, %p68
      %p70 = scmp.ne.s32.totalorder %s59, %s62
      %p71 = scmp.eq.s32.totalorder %s42, 1
      %p72 = por %p70, %p71
      %p73 = scmp.ne.s32.totalorder %s62, %s63
      %p74 = scmp.eq.s32.totalorder %s42, 0
      %p75 = por %p73, %p74
      %p76 = scmp.ne.s32.totalorder %s62, %s63
      %p77 = scmp.eq.s32.totalorder %s43, 1
      %p78 = por %p76, %p77
      %p80 = scmp.ne.s32.totalorder %s63, %s79
      %p81 = scmp.eq.s32.totalorder %s43, 0
      %p82 = por %p80, %p81
      %s83 = ssub.s32 %s44, %s56
      %p84 = scmp.eq.s32.totalorder %s83, 0
      %s86 = sadd.s32 %s85, 1
      %s87 = scalar_select %p84, %s85, %s86
      %p90 = pneg %p84
      %p91 = scmp.eq.s32.totalorder %s37, 1
      %p92 = por %p90, %p91
      %p93 = scmp.ne.s32.totalorder %s85, %s88
      %p94 = scmp.eq.s32.totalorder %s37, 0
      %p95 = por %p93, %p94
      %p96 = scmp.ne.s32.totalorder %s85, %s88
      %p97 = scmp.eq.s32.totalorder %s42, 1
      %p98 = por %p96, %p97
      %p99 = scmp.ne.s32.totalorder %s88, %s89
      %p100 = scmp.eq.s32.totalorder %s42, 0
      %p101 = por %p99, %p100
      %p102 = scmp.ne.s32.totalorder %s88, %s89
      %p103 = scmp.eq.s32.totalorder %s43, 1
      %p104 = por %p102, %p103
      %p106 = scmp.ne.s32.totalorder %s89, %s105
      %p107 = scmp.eq.s32.totalorder %s43, 0
      %p108 = por %p106, %p107
      %s109 = ssub.s32 %s44, %s56
      %p110 = scmp.eq.s32.totalorder %s109, 0
      %s112 = sadd.s32 %s111, 1
      %s113 = scalar_select %p110, %s111, %s112
      %p116 = pneg %p110
      %p117 = scmp.eq.s32.totalorder %s37, 1
      %p118 = por %p116, %p117
      %p119 = scmp.ne.s32.totalorder %s111, %s114
      %p120 = scmp.eq.s32.totalorder %s37, 0
      %p121 = por %p119, %p120
      %p122 = scmp.ne.s32.totalorder %s111, %s114
      %p123 = scmp.eq.s32.totalorder %s42, 1
      %p124 = por %p122, %p123
      %p125 = scmp.ne.s32.totalorder %s114, %s115
      %p126 = scmp.eq.s32.totalorder %s42, 0
      %p127 = por %p125, %p126
      %p128 = scmp.ne.s32.totalorder %s114, %s115
      %p129 = scmp.eq.s32.totalorder %s43, 1
      %p130 = por %p128, %p129
      %p132 = scmp.ne.s32.totalorder %s115, %s131
      %p133 = scmp.eq.s32.totalorder %s43, 0
      %p134 = por %p132, %p133
      %s136 = sadd.s32 %s135, 1
      %p139 = scmp.eq.s32.totalorder %s37, 1
      %p140 = scmp.ne.s32.totalorder %s135, %s137
      %p141 = scmp.eq.s32.totalorder %s37, 0
      %p142 = por %p140, %p141
      %p143 = scmp.ne.s32.totalorder %s135, %s137
      %p144 = scmp.eq.s32.totalorder %s42, 1
      %p145 = por %p143, %p144
      %p146 = scmp.ne.s32.totalorder %s137, %s138
      %p147 = scmp.eq.s32.totalorder %s42, 0
      %p148 = por %p146, %p147
      %p149 = scmp.ne.s32.totalorder %s137, %s138
      %p150 = scmp.eq.s32.totalorder %s43, 1
      %p151 = por %p149, %p150
      %p153 = scmp.ne.s32.totalorder %s138, %s152
      %p154 = scmp.eq.s32.totalorder %s43, 0
      %p155 = por %p153, %p154
      %s157 = sadd.s32 %s156, 1
      %p160 = scmp.eq.s32.totalorder %s37, 1
      %p161 = scmp.ne.s32.totalorder %s156, %s158
      %p162 = scmp.eq.s32.totalorder %s37, 0
      %p163 = por %p161, %p162
      %p164 = scmp.ne.s32.totalorder %s156, %s158
      %p165 = scmp.eq.s32.totalorder %s42, 1
      %p166 = por %p164, %p165
      %p167 = scmp.ne.s32.totalorder %s158, %s159
      %p168 = scmp.eq.s32.totalorder %s42, 0
      %p169 = por %p167, %p168
      %p170 = scmp.ne.s32.totalorder %s158, %s159
      %p171 = scmp.eq.s32.totalorder %s43, 1
      %p172 = por %p170, %p171
      %p174 = scmp.ne.s32.totalorder %s159, %s173
      %p175 = scmp.eq.s32.totalorder %s43, 0
      %p176 = por %p174, %p175
      %s178 = sadd.s32 %s177, 1
      %p181 = scmp.eq.s32.totalorder %s37, 1
      %p182 = scmp.ne.s32.totalorder %s177, %s179
      %p183 = scmp.eq.s32.totalorder %s37, 0
      %p184 = por %p182, %p183
      %p185 = scmp.ne.s32.totalorder %s177, %s179
      %p186 = scmp.eq.s32.totalorder %s42, 1
      %p187 = por %p185, %p186
      %p188 = scmp.ne.s32.totalorder %s179, %s180
      %p189 = scmp.eq.s32.totalorder %s42, 0
      %p190 = por %p188, %p189
      %p191 = scmp.ne.s32.totalorder %s179, %s180
      %p192 = scmp.eq.s32.totalorder %s43, 1
      %p193 = por %p191, %p192
      %p195 = scmp.ne.s32.totalorder %s180, %s194
      %p196 = scmp.eq.s32.totalorder %s43, 0
      %p197 = por %p195, %p196
      %s199 = sadd.s32 %s198, 1
      %p202 = scmp.eq.s32.totalorder %s37, 1
      %p203 = scmp.ne.s32.totalorder %s198, %s200
      %p204 = scmp.eq.s32.totalorder %s37, 0
      %p205 = por %p203, %p204
      %p206 = scmp.ne.s32.totalorder %s198, %s200
      %p207 = scmp.eq.s32.totalorder %s42, 1
      %p208 = por %p206, %p207
      %p209 = scmp.ne.s32.totalorder %s200, %s201
      %p210 = scmp.eq.s32.totalorder %s42, 0
      %p211 = por %p209, %p210
      %p212 = scmp.ne.s32.totalorder %s200, %s201
      %p213 = scmp.eq.s32.totalorder %s43, 1
      %p214 = por %p212, %p213
      %p216 = scmp.ne.s32.totalorder %s201, %s215
      %p217 = scmp.eq.s32.totalorder %s43, 0
      %p218 = por %p216, %p217
      %s220 = sadd.s32 %s219, 1
      %p223 = scmp.eq.s32.totalorder %s37, 1
      %p224 = scmp.ne.s32.totalorder %s219, %s221
      %p225 = scmp.eq.s32.totalorder %s37, 0
      %p226 = por %p224, %p225
      %p227 = scmp.ne.s32.totalorder %s219, %s221
      %p228 = scmp.eq.s32.totalorder %s42, 1
      %p229 = por %p227, %p228
      %p230 = scmp.ne.s32.totalorder %s221, %s222
      %p231 = scmp.eq.s32.totalorder %s42, 0
      %p232 = por %p230, %p231
      %p233 = scmp.ne.s32.totalorder %s221, %s222
      %p234 = scmp.eq.s32.totalorder %s43, 1
      %p235 = por %p233, %p234
      %p237 = scmp.ne.s32.totalorder %s222, %s236
      %p238 = scmp.eq.s32.totalorder %s43, 0
      %p239 = por %p237, %p238
      %s241 = sadd.s32 %s240, 1
      %p244 = scmp.eq.s32.totalorder %s37, 1
      %p245 = scmp.ne.s32.totalorder %s240, %s242
      %p246 = scmp.eq.s32.totalorder %s37, 0
      %p247 = por %p245, %p246
      %p248 = scmp.ne.s32.totalorder %s240, %s242
      %p249 = scmp.eq.s32.totalorder %s42, 1
      %p250 = por %p248, %p249
      %p251 = scmp.ne.s32.totalorder %s242, %s243
      %p252 = scmp.eq.s32.totalorder %s42, 0
      %p253 = por %p251, %p252
      %p254 = scmp.ne.s32.totalorder %s242, %s243
      %p255 = scmp.eq.s32.totalorder %s43, 1
      %p256 = por %p254, %p255
      %p258 = scmp.ne.s32.totalorder %s243, %s257
      %p259 = scmp.eq.s32.totalorder %s43, 0
      %p260 = por %p258, %p259
      %s262 = sadd.s32 %s261, 1
      %p265 = scmp.eq.s32.totalorder %s37, 1
      %p266 = scmp.ne.s32.totalorder %s261, %s263
      %p267 = scmp.eq.s32.totalorder %s37, 0
      %p268 = por %p266, %p267
      %p269 = scmp.ne.s32.totalorder %s261, %s263
      %p270 = scmp.eq.s32.totalorder %s42, 1
      %p271 = por %p269, %p270
      %p272 = scmp.ne.s32.totalorder %s263, %s264
      %p273 = scmp.eq.s32.totalorder %s42, 0
      %p274 = por %p272, %p273
      %p275 = scmp.ne.s32.totalorder %s263, %s264
      %p276 = scmp.eq.s32.totalorder %s43, 1
      %p277 = por %p275, %p276
      %p279 = scmp.ne.s32.totalorder %s264, %s278
      %p280 = scmp.eq.s32.totalorder %s43, 0
      %p281 = por %p279, %p280
      %s283 = sadd.s32 %s282, 1
      %p286 = scmp.eq.s32.totalorder %s37, 1
      %p287 = scmp.ne.s32.totalorder %s282, %s284
      %p288 = scmp.eq.s32.totalorder %s37, 0
      %p289 = por %p287, %p288
      %p290 = scmp.ne.s32.totalorder %s282, %s284
      %p291 = scmp.eq.s32.totalorder %s42, 1
      %p292 = por %p290, %p291
      %p293 = scmp.ne.s32.totalorder %s284, %s285
      %p294 = scmp.eq.s32.totalorder %s42, 0
      %p295 = por %p293, %p294
      %p296 = scmp.ne.s32.totalorder %s284, %s285
      %p297 = scmp.eq.s32.totalorder %s43, 1
      %p298 = por %p296, %p297
      %p300 = scmp.ne.s32.totalorder %s285, %s299
      %p301 = scmp.eq.s32.totalorder %s43, 0
      %p302 = por %p300, %p301
      %s304 = sadd.s32 %s303, 1
      %p307 = scmp.eq.s32.totalorder %s37, 1
      %p308 = scmp.ne.s32.totalorder %s303, %s305
      %p309 = scmp.eq.s32.totalorder %s37, 0
      %p310 = por %p308, %p309
      %p311 = scmp.ne.s32.totalorder %s303, %s305
      %p312 = scmp.eq.s32.totalorder %s42, 1
      %p313 = por %p311, %p312
      %p314 = scmp.ne.s32.totalorder %s305, %s306
      %p315 = scmp.eq.s32.totalorder %s42, 0
      %p316 = por %p314, %p315
      %p317 = scmp.ne.s32.totalorder %s305, %s306
      %p318 = scmp.eq.s32.totalorder %s43, 1
      %p319 = por %p317, %p318
      %p321 = scmp.ne.s32.totalorder %s306, %s320
      %p322 = scmp.eq.s32.totalorder %s43, 0
      %p323 = por %p321, %p322
      %s325 = sadd.s32 %s324, 1
      %p328 = scmp.eq.s32.totalorder %s37, 1
      %p329 = scmp.ne.s32.totalorder %s324, %s326
      %p330 = scmp.eq.s32.totalorder %s37, 0
      %p331 = por %p329, %p330
      %p332 = scmp.ne.s32.totalorder %s324, %s326
      %p333 = scmp.eq.s32.totalorder %s42, 1
      %p334 = por %p332, %p333
      %p335 = scmp.ne.s32.totalorder %s326, %s327
      %p336 = scmp.eq.s32.totalorder %s42, 0
      %p337 = por %p335, %p336
      %p338 = scmp.ne.s32.totalorder %s326, %s327
      %p339 = scmp.eq.s32.totalorder %s43, 1
      %p340 = por %p338, %p339
      %p342 = scmp.ne.s32.totalorder %s327, %s341
      %p343 = scmp.eq.s32.totalorder %s43, 0
      %p344 = por %p342, %p343
      %s346 = sadd.s32 %s345, 1
      %p349 = scmp.eq.s32.totalorder %s37, 1
      %p350 = scmp.ne.s32.totalorder %s345, %s347
      %p351 = scmp.eq.s32.totalorder %s37, 0
      %p352 = por %p350, %p351
      %p353 = scmp.ne.s32.totalorder %s345, %s347
      %p354 = scmp.eq.s32.totalorder %s42, 1
      %p355 = por %p353, %p354
      %p356 = scmp.ne.s32.totalorder %s347, %s348
      %p357 = scmp.eq.s32.totalorder %s42, 0
      %p358 = por %p356, %p357
      %p359 = scmp.ne.s32.totalorder %s347, %s348
      %p360 = scmp.eq.s32.totalorder %s43, 1
      %p361 = por %p359, %p360
      %p363 = scmp.ne.s32.totalorder %s348, %s362
      %p364 = scmp.eq.s32.totalorder %s43, 0
      %p365 = por %p363, %p364
      %s367 = sadd.s32 %s366, 1
      %p370 = scmp.eq.s32.totalorder %s37, 1
      %p371 = scmp.ne.s32.totalorder %s366, %s368
      %p372 = scmp.eq.s32.totalorder %s37, 0
      %p373 = por %p371, %p372
      %p374 = scmp.ne.s32.totalorder %s366, %s368
      %p375 = scmp.eq.s32.totalorder %s42, 1
      %p376 = por %p374, %p375
      %p377 = scmp.ne.s32.totalorder %s368, %s369
      %p378 = scmp.eq.s32.totalorder %s42, 0
      %p379 = por %p377, %p378
      %p380 = scmp.ne.s32.totalorder %s368, %s369
      %p381 = scmp.eq.s32.totalorder %s43, 1
      %p382 = por %p380, %p381
      %p384 = scmp.ne.s32.totalorder %s369, %s383
      %p385 = scmp.eq.s32.totalorder %s43, 0
      %p386 = por %p384, %p385
      %s388 = sadd.s32 %s387, 1
      %p391 = scmp.eq.s32.totalorder %s37, 1
      %p392 = scmp.ne.s32.totalorder %s387, %s389
      %p393 = scmp.eq.s32.totalorder %s37, 0
      %p394 = por %p392, %p393
      %p395 = scmp.ne.s32.totalorder %s387, %s389
      %p396 = scmp.eq.s32.totalorder %s42, 1
      %p397 = por %p395, %p396
      %p398 = scmp.ne.s32.totalorder %s389, %s390
      %p399 = scmp.eq.s32.totalorder %s42, 0
      %p400 = por %p398, %p399
      %p401 = scmp.ne.s32.totalorder %s389, %s390
      %p402 = scmp.eq.s32.totalorder %s43, 1
      %p403 = por %p401, %p402
      %p405 = scmp.ne.s32.totalorder %s390, %s404
      %p406 = scmp.eq.s32.totalorder %s43, 0
      %p407 = por %p405, %p406
      %s409 = sadd.s32 %s408, 1
      %p412 = scmp.eq.s32.totalorder %s37, 1
      %p413 = scmp.ne.s32.totalorder %s408, %s410
      %p414 = scmp.eq.s32.totalorder %s37, 0
      %p415 = por %p413, %p414
      %p416 = scmp.ne.s32.totalorder %s408, %s410
      %p417 = scmp.eq.s32.totalorder %s42, 1
      %p418 = por %p416, %p417
      %p419 = scmp.ne.s32.totalorder %s410, %s411
      %p420 = scmp.eq.s32.totalorder %s42, 0
      %p421 = por %p419, %p420
      %p422 = scmp.ne.s32.totalorder %s410, %s411
      %p423 = scmp.eq.s32.totalorder %s43, 1
      %p424 = por %p422, %p423
      %p426 = scmp.ne.s32.totalorder %s411, %s425
      %p427 = scmp.eq.s32.totalorder %s43, 0
      %p428 = por %p426, %p427
      %s430 = sadd.s32 %s429, 1
      %p433 = scmp.eq.s32.totalorder %s37, 1
      %p434 = scmp.ne.s32.totalorder %s429, %s431
      %p435 = scmp.eq.s32.totalorder %s37, 0
      %p436 = por %p434, %p435
      %p437 = scmp.ne.s32.totalorder %s429, %s431
      %p438 = scmp.eq.s32.totalorder %s42, 1
      %p439 = por %p437, %p438
      %p440 = scmp.ne.s32.totalorder %s431, %s432
      %p441 = scmp.eq.s32.totalorder %s42, 0
      %p442 = por %p440, %p441
      %p443 = scmp.ne.s32.totalorder %s431, %s432
      %p444 = scmp.eq.s32.totalorder %s43, 1
      %p445 = por %p443, %p444
      %p447 = scmp.ne.s32.totalorder %s432, %s446
      %p448 = scmp.eq.s32.totalorder %s43, 0
      %p449 = por %p447, %p448
      %s450 = ssub.s32 %s44, %s56
      %s451 = ssub.s32 %s45, %s52
      %s452 = sor.u32 %s450, %s451
      %p453 = scmp.eq.s32.totalorder %s452, 0
      %s455 = sadd.s32 %s454, 1
      %s456 = scalar_select %p453, %s454, %s455
      %p459 = pneg %p453
      %p460 = scmp.eq.s32.totalorder %s37, 1
      %p461 = por %p459, %p460
      %p462 = scmp.ne.s32.totalorder %s454, %s457
      %p463 = scmp.eq.s32.totalorder %s37, 0
      %p464 = por %p462, %p463
      %p465 = scmp.ne.s32.totalorder %s454, %s457
      %p466 = scmp.eq.s32.totalorder %s42, 1
      %p467 = por %p465, %p466
      %p468 = scmp.ne.s32.totalorder %s457, %s458
      %p469 = scmp.eq.s32.totalorder %s42, 0
      %p470 = por %p468, %p469
      %p471 = scmp.ne.s32.totalorder %s457, %s458
      %p472 = scmp.eq.s32.totalorder %s43, 1
      %p473 = por %p471, %p472
      %p475 = scmp.ne.s32.totalorder %s458, %s474
      %p476 = scmp.eq.s32.totalorder %s43, 0
      %p477 = por %p475, %p476
      %p478 = scmp.le.s32.totalorder 1, %s37
      %p479 = scmp.lt.s32.totalorder %s37, 3
      %p480 = pnand %p478, %p479
      %p481 = pneg %p480
      // Predicated region
      $region9: #{tpu_custom_call.1} parent=5 // pred_check
        _
      $region10: #{tpu_custom_call.1} parent=5 // pred_check_branch
        %483 = sbr.rel (%p480) target = $region12
      $region11: #{tpu_custom_call.1} parent=5 // pred_region
        %s484 = ssub.s32 %s37, 1
        // Predicated region
        $region13: #{tpu_custom_call.1} parent=11 // pred_check
          %p485 = pneg %p148
        $region14: #{tpu_custom_call.1} parent=11 // pred_check_branch
          %487 = sbr.rel (%p485) target = $region16
        $region15: #{tpu_custom_call.1} parent=11 // pred_region
          _
        $region16: #{tpu_custom_call.1} parent=11 // pred_fallthru
          _
        // Predicated region
        $region17: #{tpu_custom_call.1} parent=11 // pred_check
          %p488 = pneg %p169
        $region18: #{tpu_custom_call.1} parent=11 // pred_check_branch
          %490 = sbr.rel (%p488) target = $region20
        $region19: #{tpu_custom_call.1} parent=11 // pred_region
          %s492 = ssub.s32 1024, 1024
          %493 = vsyncadd [#allocation11], %s492
          %s494 = sshll.u32 [#allocation10], 4
          %s495 = int_to_ptr.vmem [resolvable:$true] %s494
          %500 = dma.hbm_to_vmem [thread:$0]  %s4, 1024, %s495, [#allocation11], 64, 64, 4
        $region20: #{tpu_custom_call.1} parent=11 // pred_fallthru
          _
        // Predicated region
        $region21: #{tpu_custom_call.1} parent=11 // pred_check
          %p501 = pneg %p190
        $region22: #{tpu_custom_call.1} parent=11 // pred_check_branch
          %503 = sbr.rel (%p501) target = $region24
        $region23: #{tpu_custom_call.1} parent=11 // pred_region
          _
        $region24: #{tpu_custom_call.1} parent=11 // pred_fallthru
          _
        // Predicated region
        $region25: #{tpu_custom_call.1} parent=11 // pred_check
          %p504 = pneg %p211
        $region26: #{tpu_custom_call.1} parent=11 // pred_check_branch
          %506 = sbr.rel (%p504) target = $region28
        $region27: #{tpu_custom_call.1} parent=11 // pred_region
          %s508 = ssub.s32 1024, 1024
          %509 = vsyncadd [#allocation11], %s508
          %s510 = sshll.u32 [#allocation12], 4
          %s511 = int_to_ptr.vmem [resolvable:$true] %s510
          %516 = dma.hbm_to_vmem [thread:$0]  %s6, 1024, %s511, [#allocation11], 64, 64, 4
        $region28: #{tpu_custom_call.1} parent=11 // pred_fallthru
          _
        // Predicated region
        $region29: #{tpu_custom_call.1} parent=11 // pred_check
          %p517 = pneg %p232
        $region30: #{tpu_custom_call.1} parent=11 // pred_check_branch
          %519 = sbr.rel (%p517) target = $region32
        $region31: #{tpu_custom_call.1} parent=11 // pred_region
          _
        $region32: #{tpu_custom_call.1} parent=11 // pred_fallthru
          _
        // Predicated region
        $region33: #{tpu_custom_call.1} parent=11 // pred_check
          %p520 = pneg %p253
        $region34: #{tpu_custom_call.1} parent=11 // pred_check_branch
          %522 = sbr.rel (%p520) target = $region36
        $region35: #{tpu_custom_call.1} parent=11 // pred_region
          _
        $region36: #{tpu_custom_call.1} parent=11 // pred_fallthru
          _
        // Predicated region
        $region37: #{tpu_custom_call.1} parent=11 // pred_check
          %p523 = pneg %p274
        $region38: #{tpu_custom_call.1} parent=11 // pred_check_branch
          %525 = sbr.rel (%p523) target = $region40
        $region39: #{tpu_custom_call.1} parent=11 // pred_region
          _
        $region40: #{tpu_custom_call.1} parent=11 // pred_fallthru
          _
        // Predicated region
        $region41: #{tpu_custom_call.1} parent=11 // pred_check
          %p526 = pneg %p295
        $region42: #{tpu_custom_call.1} parent=11 // pred_check_branch
          %528 = sbr.rel (%p526) target = $region44
        $region43: #{tpu_custom_call.1} parent=11 // pred_region
          %s530 = ssub.s32 1024, 1024
          %531 = vsyncadd [#allocation14], %s530
          %s532 = sshll.u32 [#allocation13], 4
          %s533 = int_to_ptr.vmem [resolvable:$true] %s532
          %538 = dma.hbm_to_vmem [thread:$0]  %s10, 1024, %s533, [#allocation14], 64, 64, 4
        $region44: #{tpu_custom_call.1} parent=11 // pred_fallthru
          _
        // Predicated region
        $region45: #{tpu_custom_call.1} parent=11 // pred_check
          %p539 = pneg %p316
        $region46: #{tpu_custom_call.1} parent=11 // pred_check_branch
          %541 = sbr.rel (%p539) target = $region48
        $region47: #{tpu_custom_call.1} parent=11 // pred_region
          _
        $region48: #{tpu_custom_call.1} parent=11 // pred_fallthru
          _
        // Predicated region
        $region49: #{tpu_custom_call.1} parent=11 // pred_check
          %p542 = pneg %p337
        $region50: #{tpu_custom_call.1} parent=11 // pred_check_branch
          %544 = sbr.rel (%p542) target = $region52
        $region51: #{tpu_custom_call.1} parent=11 // pred_region
          %s546 = ssub.s32 1024, 1024
          %547 = vsyncadd [#allocation14], %s546
          %s548 = sshll.u32 [#allocation15], 4
          %s549 = int_to_ptr.vmem [resolvable:$true] %s548
          %554 = dma.hbm_to_vmem [thread:$0]  %s12, 1024, %s549, [#allocation14], 64, 64, 4
        $region52: #{tpu_custom_call.1} parent=11 // pred_fallthru
          _
        // Predicated region
        $region53: #{tpu_custom_call.1} parent=11 // pred_check
          %p555 = pneg %p358
        $region54: #{tpu_custom_call.1} parent=11 // pred_check_branch
          %557 = sbr.rel (%p555) target = $region56
        $region55: #{tpu_custom_call.1} parent=11 // pred_region
          %s559 = ssub.s32 16, 16
          %560 = vsyncadd [#allocation17], %s559
          %s562 = sshll.u32 [#allocation16], 4
          %s563 = int_to_ptr.vmem [resolvable:$true] %s562
          %565 = dma.hbm_to_vmem [thread:$0]  %s13, 16, %s563, [#allocation17]
        $region56: #{tpu_custom_call.1} parent=11 // pred_fallthru
          _
        // Predicated region
        $region57: #{tpu_custom_call.1} parent=11 // pred_check
          %p566 = pneg %p379
        $region58: #{tpu_custom_call.1} parent=11 // pred_check_branch
          %568 = sbr.rel (%p566) target = $region60
        $region59: #{tpu_custom_call.1} parent=11 // pred_region
          _
        $region60: #{tpu_custom_call.1} parent=11 // pred_fallthru
          _
        // Predicated region
        $region61: #{tpu_custom_call.1} parent=11 // pred_check
          %p569 = pneg %p400
        $region62: #{tpu_custom_call.1} parent=11 // pred_check_branch
          %571 = sbr.rel (%p569) target = $region64
        $region63: #{tpu_custom_call.1} parent=11 // pred_region
          _
        $region64: #{tpu_custom_call.1} parent=11 // pred_fallthru
          _
        // Predicated region
        $region65: #{tpu_custom_call.1} parent=11 // pred_check
          %p572 = pneg %p421
        $region66: #{tpu_custom_call.1} parent=11 // pred_check_branch
          %574 = sbr.rel (%p572) target = $region68
        $region67: #{tpu_custom_call.1} parent=11 // pred_region
          %s576 = ssub.s32 2048, 2048
          %577 = vsyncadd [#allocation17], %s576
          %s578 = sshll.u32 [#allocation18], 4
          %s579 = int_to_ptr.vmem [resolvable:$true] %s578
          %584 = dma.hbm_to_vmem [thread:$0]  %s16, 2048, %s579, [#allocation17], 128, 128, 8
        $region68: #{tpu_custom_call.1} parent=11 // pred_fallthru
          _
        // Predicated region
        $region69: #{tpu_custom_call.1} parent=11 // pred_check
          %p585 = pneg %p442
        $region70: #{tpu_custom_call.1} parent=11 // pred_check_branch
          %587 = sbr.rel (%p585) target = $region72
        $region71: #{tpu_custom_call.1} parent=11 // pred_region
          _
        $region72: #{tpu_custom_call.1} parent=11 // pred_fallthru
          _
      $region12: #{tpu_custom_call.1} parent=5 // pred_fallthru
        _
      %p588 = scmp.lt.s32.totalorder %s37, 2
      // Predicated region
      $region73: #{tpu_custom_call.1} parent=5 // pred_check
        %p589 = pneg %p588
      $region74: #{tpu_custom_call.1} parent=5 // pred_check_branch
        %591 = sbr.rel (%p589) target = $region76
      $region75: #{tpu_custom_call.1} parent=5 // pred_region
        // Predicated region
        $region77: #{tpu_custom_call.1} parent=75 // pred_check
          %p592 = pneg %p69
        $region78: #{tpu_custom_call.1} parent=75 // pred_check_branch
          %594 = sbr.rel (%p592) target = $region80
        $region79: #{tpu_custom_call.1} parent=75 // pred_region
          %s595 = sand.u32 %s59, 1
          %s596 = scalar_lea.sflag [#allocation5], %s595
          %s597 = sand.u32 %s59, 1
          %s598 = smul.addr %s597, 8
          %s599 = scalar_lea.vmem [#allocation4], %s598
          %s601 = ssub.s32 128, 128
          %602 = vsyncadd %s596, %s601
          %s603 = smul.addr %s44, 128
          %s604 = scalar_lea.hbm %s0, %s603
          %s606 = sshll.u32 %s599, 4
          %s607 = int_to_ptr.vmem [resolvable:$true] %s606
          %609 = dma.hbm_to_vmem [thread:$0]  %s604, 128, %s607, %s596
        $region80: #{tpu_custom_call.1} parent=75 // pred_fallthru
          _
        // Predicated region
        $region81: #{tpu_custom_call.1} parent=75 // pred_check
          %p610 = pneg %p95
        $region82: #{tpu_custom_call.1} parent=75 // pred_check_branch
          %612 = sbr.rel (%p610) target = $region84
        $region83: #{tpu_custom_call.1} parent=75 // pred_region
          %s613 = sand.u32 %s37, 1
          %s614 = scalar_lea.sflag [#allocation8], %s613
          %s615 = sand.u32 %s85, 1
          %s616 = smul.addr %s615, 64
          %s617 = scalar_lea.vmem [#allocation7], %s616
          %s618 = smul.u32 8, %s44
          %s620 = ssub.s32 1024, 1024
          %621 = vsyncadd %s614, %s620
          %s622 = smul.addr %s618, 2
          %s623 = smul.addr %s622, 64
          %s624 = scalar_lea.hbm %s1, %s623
          %s625 = sshll.u32 %s617, 4
          %s626 = int_to_ptr.vmem [resolvable:$true] %s625
          %631 = dma.hbm_to_vmem [thread:$0]  %s624, 1024, %s626, %s614, 64, 64, 4
        $region84: #{tpu_custom_call.1} parent=75 // pred_fallthru
          _
        // Predicated region
        $region85: #{tpu_custom_call.1} parent=75 // pred_check
          %p632 = pneg %p121
        $region86: #{tpu_custom_call.1} parent=75 // pred_check_branch
          %634 = sbr.rel (%p632) target = $region88
        $region87: #{tpu_custom_call.1} parent=75 // pred_region
          %s635 = sand.u32 %s37, 1
          %s636 = scalar_lea.sflag [#allocation8], %s635
          %s637 = sand.u32 %s111, 1
          %s638 = smul.addr %s637, 8
          %s639 = scalar_lea.vmem [#allocation9], %s638
          %s641 = ssub.s32 128, 128
          %642 = vsyncadd %s636, %s641
          %s643 = smul.addr %s44, 128
          %s644 = scalar_lea.hbm %s2, %s643
          %s646 = sshll.u32 %s639, 4
          %s647 = int_to_ptr.vmem [resolvable:$true] %s646
          %649 = dma.hbm_to_vmem [thread:$0]  %s644, 128, %s647, %s636
        $region88: #{tpu_custom_call.1} parent=75 // pred_fallthru
          _
      $region76: #{tpu_custom_call.1} parent=5 // pred_fallthru
        _
      %p650 = scmp.le.s32.totalorder 1, %s37
      %p651 = scmp.lt.s32.totalorder %s37, 3
      %p652 = pnand %p650, %p651
      %p653 = pneg %p652
      // Predicated region
      $region89: #{tpu_custom_call.1} parent=5 // pred_check
        _
      $region90: #{tpu_custom_call.1} parent=5 // pred_check_branch
        %655 = sbr.rel (%p652) target = $region92
      $region91: #{tpu_custom_call.1} parent=5 // pred_region
        %s656 = ssub.s32 %s37, 1
        %s657 = sand.u32 %s62, 1
        %s658 = scalar_lea.sflag [#allocation5], %s657
        %s659 = sand.u32 %s62, 1
        %s660 = smul.addr %s659, 8
        %s661 = scalar_lea.vmem [#allocation4], %s660
        // Predicated region
        $region93: #{tpu_custom_call.1} parent=91 // pred_check
          %p662 = pneg %p75
        $region94: #{tpu_custom_call.1} parent=91 // pred_check_branch
          %664 = sbr.rel (%p662) target = $region96
        $region95: #{tpu_custom_call.1} parent=91 // pred_region
          %665 = dma.done %s658, 128
        $region96: #{tpu_custom_call.1} parent=91 // pred_fallthru
          _
        %s666 = sand.u32 %s42, 1
        %s667 = scalar_lea.sflag [#allocation8], %s666
        %s668 = sand.u32 %s88, 1
        %s669 = smul.addr %s668, 64
        %s670 = scalar_lea.vmem [#allocation7], %s669
        // Predicated region
        $region97: #{tpu_custom_call.1} parent=91 // pred_check
          %p671 = pneg %p101
        $region98: #{tpu_custom_call.1} parent=91 // pred_check_branch
          %673 = sbr.rel (%p671) target = $region100
        $region99: #{tpu_custom_call.1} parent=91 // pred_region
          %674 = dma.done %s667, 1024
        $region100: #{tpu_custom_call.1} parent=91 // pred_fallthru
          _
        %s675 = sand.u32 %s42, 1
        %s676 = scalar_lea.sflag [#allocation8], %s675
        %s677 = sand.u32 %s114, 1
        %s678 = smul.addr %s677, 8
        %s679 = scalar_lea.vmem [#allocation9], %s678
        // Predicated region
        $region101: #{tpu_custom_call.1} parent=91 // pred_check
          %p680 = pneg %p127
        $region102: #{tpu_custom_call.1} parent=91 // pred_check_branch
          %682 = sbr.rel (%p680) target = $region104
        $region103: #{tpu_custom_call.1} parent=91 // pred_region
          %683 = dma.done %s676, 128
        $region104: #{tpu_custom_call.1} parent=91 // pred_fallthru
          _
        // Predicated region
        $region105: #{tpu_custom_call.1} parent=91 // pred_check
          %p684 = pneg %p169
        $region106: #{tpu_custom_call.1} parent=91 // pred_check_branch
          %686 = sbr.rel (%p684) target = $region108
        $region107: #{tpu_custom_call.1} parent=91 // pred_region
          %687 = dma.done [#allocation11], 1024
        $region108: #{tpu_custom_call.1} parent=91 // pred_fallthru
          _
        // Predicated region
        $region109: #{tpu_custom_call.1} parent=91 // pred_check
          %p688 = pneg %p211
        $region110: #{tpu_custom_call.1} parent=91 // pred_check_branch
          %690 = sbr.rel (%p688) target = $region112
        $region111: #{tpu_custom_call.1} parent=91 // pred_region
          %691 = dma.done [#allocation11], 1024
        $region112: #{tpu_custom_call.1} parent=91 // pred_fallthru
          _
        // Predicated region
        $region113: #{tpu_custom_call.1} parent=91 // pred_check
          %p692 = pneg %p295
        $region114: #{tpu_custom_call.1} parent=91 // pred_check_branch
          %694 = sbr.rel (%p692) target = $region116
        $region115: #{tpu_custom_call.1} parent=91 // pred_region
          %695 = dma.done [#allocation14], 1024
        $region116: #{tpu_custom_call.1} parent=91 // pred_fallthru
          _
        // Predicated region
        $region117: #{tpu_custom_call.1} parent=91 // pred_check
          %p696 = pneg %p337
        $region118: #{tpu_custom_call.1} parent=91 // pred_check_branch
          %698 = sbr.rel (%p696) target = $region120
        $region119: #{tpu_custom_call.1} parent=91 // pred_region
          %699 = dma.done [#allocation14], 1024
        $region120: #{tpu_custom_call.1} parent=91 // pred_fallthru
          _
        // Predicated region
        $region121: #{tpu_custom_call.1} parent=91 // pred_check
          %p700 = pneg %p358
        $region122: #{tpu_custom_call.1} parent=91 // pred_check_branch
          %702 = sbr.rel (%p700) target = $region124
        $region123: #{tpu_custom_call.1} parent=91 // pred_region
          %703 = dma.done [#allocation17], 16
        $region124: #{tpu_custom_call.1} parent=91 // pred_fallthru
          _
        // Predicated region
        $region125: #{tpu_custom_call.1} parent=91 // pred_check
          %p704 = pneg %p421
        $region126: #{tpu_custom_call.1} parent=91 // pred_check_branch
          %706 = sbr.rel (%p704) target = $region128
        $region127: #{tpu_custom_call.1} parent=91 // pred_region
          %707 = dma.done [#allocation17], 2048
        $region128: #{tpu_custom_call.1} parent=91 // pred_fallthru
          _
        %s708 = sand.u32 %s62, 1
        %s709 = scalar_lea.sflag [#allocation5], %s708
        %s710 = sand.u32 %s62, 1
        %s711 = smul.addr %s710, 8
        %s712 = scalar_lea.vmem [#allocation4], %s711
        %p713 = pneg %p75
        %p714 = pneg %p72
        %s715 = sand.u32 %s42, 1
        %s716 = scalar_lea.sflag [#allocation8], %s715
        %s717 = sand.u32 %s88, 1
        %s718 = smul.addr %s717, 64
        %s719 = scalar_lea.vmem [#allocation7], %s718
        %p720 = pneg %p101
        %p721 = pneg %p98
        %s722 = sand.u32 %s42, 1
        %s723 = scalar_lea.sflag [#allocation8], %s722
        %s724 = sand.u32 %s114, 1
        %s725 = smul.addr %s724, 8
        %s726 = scalar_lea.vmem [#allocation9], %s725
        %p727 = pneg %p127
        %p728 = pneg %p124
        %p729 = pneg %p148
        %p730 = pneg %p145
        %p731 = pneg %p169
        %p732 = pneg %p166
        %p733 = pneg %p190
        %p734 = pneg %p187
        %p735 = pneg %p211
        %p736 = pneg %p208
        %p737 = pneg %p232
        %p738 = pneg %p229
        %p739 = pneg %p253
        %p740 = pneg %p250
        %p741 = pneg %p274
        %p742 = pneg %p271
        %p743 = pneg %p295
        %p744 = pneg %p292
        %p745 = pneg %p316
        %p746 = pneg %p313
        %p747 = pneg %p337
        %p748 = pneg %p334
        %p749 = pneg %p358
        %p750 = pneg %p355
        %p751 = pneg %p379
        %p752 = pneg %p376
        %p753 = pneg %p400
        %p754 = pneg %p397
        %p755 = pneg %p421
        %p756 = pneg %p418
        %p757 = pneg %p442
        %p758 = pneg %p439
        %p759 = pneg %p470
        %p760 = pneg %p467
        %s761 = sand.u32 %s457, 1
        %s762 = scalar_lea.sflag [#allocation6], %s761
        %s763 = sand.u32 %s457, 1
        %s764 = smul.addr %s763, 16
        %s765 = scalar_lea.vmem [#allocation19], %s764
        %s766 = smul.u32 8, %s46
        %s767 = smul.u32 2, %s47
        %p769 = scmp.eq.s32.totalorder %s47, 0
        // Predicated region
        $region129: #{tpu_custom_call.1} parent=91 // pred_check
          %p770 = pneg %p769
        $region130: #{tpu_custom_call.1} parent=91 // pred_check_branch
          %772 = sbr.rel (%p770) target = $region132
        $region131: #{tpu_custom_call.1} parent=91 // pred_region
          %v773 = vld [vmem:[%s661] sm:$0xff]
          %v774 = vpack.c.bf16 %v773, %v773
          %v775 = vld [vmem:[%s670] sm:$0xf]
          %v776 = vld [vmem:[%s670 + $0x4] sm:$0xf]
          %v777 = vld [vmem:[%s670 + $0x8] sm:$0xf]
          %v778 = vld [vmem:[%s670 + $0xc] sm:$0xf]
          %v779 = vld [vmem:[%s670 + $0x10] sm:$0xf]
          %v780 = vld [vmem:[%s670 + $0x14] sm:$0xf]
          %v781 = vld [vmem:[%s670 + $0x18] sm:$0xf]
          %v782 = vld [vmem:[%s670 + $0x1c] sm:$0xf]
          %v783 = vld [vmem:[%s670 + $0x20] sm:$0xf]
          %v784 = vld [vmem:[%s670 + $0x24] sm:$0xf]
          %v785 = vld [vmem:[%s670 + $0x28] sm:$0xf]
          %v786 = vld [vmem:[%s670 + $0x2c] sm:$0xf]
          %v787 = vld [vmem:[%s670 + $0x30] sm:$0xf]
          %v788 = vld [vmem:[%s670 + $0x34] sm:$0xf]
          %v789 = vld [vmem:[%s670 + $0x38] sm:$0xf]
          %v790 = vld [vmem:[%s670 + $0x3c] sm:$0xf]
          %v791 = vld [vmem:[%s679] sm:$0xff]
          %v792 = vld [vmem:[#allocation10] sm:$0xf]
          %v793 = vld [vmem:[#allocation10 + $0x4] sm:$0xf]
          %v794 = vld [vmem:[#allocation10 + $0x8] sm:$0xf]
          %v795 = vld [vmem:[#allocation10 + $0xc] sm:$0xf]
          %v796 = vld [vmem:[#allocation10 + $0x10] sm:$0xf]
          %v797 = vld [vmem:[#allocation10 + $0x14] sm:$0xf]
          %v798 = vld [vmem:[#allocation10 + $0x18] sm:$0xf]
          %v799 = vld [vmem:[#allocation10 + $0x1c] sm:$0xf]
          %v800 = vld [vmem:[#allocation10 + $0x20] sm:$0xf]
          %v801 = vld [vmem:[#allocation10 + $0x24] sm:$0xf]
          %v802 = vld [vmem:[#allocation10 + $0x28] sm:$0xf]
          %v803 = vld [vmem:[#allocation10 + $0x2c] sm:$0xf]
          %v804 = vld [vmem:[#allocation10 + $0x30] sm:$0xf]
          %v805 = vld [vmem:[#allocation10 + $0x34] sm:$0xf]
          %v806 = vld [vmem:[#allocation10 + $0x38] sm:$0xf]
          %v807 = vld [vmem:[#allocation10 + $0x3c] sm:$0xf]
          %v808 = vld [vmem:[%s5] sm:$0x1]
          %v810 = vlaneseq
          %v811 = vshrl.u32 %v810, 7
          %v812 = vsub.s32 0, %v811
          %v813 = vrot.slane %v808, %v812
          %v831 = vunpack.c.l.b16 %v775
          %v832 = vunpack.c.l.b16 %v776
          %v833 = vunpack.c.l.b16 %v777
          %v834 = vunpack.c.l.b16 %v778
          %v835 = vunpack.c.l.b16 %v779
          %v836 = vunpack.c.l.b16 %v780
          %v837 = vunpack.c.l.b16 %v781
          %v838 = vunpack.c.l.b16 %v782
          %v839 = vunpack.c.l.b16 %v783
          %v840 = vunpack.c.l.b16 %v784
          %v841 = vunpack.c.l.b16 %v785
          %v842 = vunpack.c.l.b16 %v786
          %v843 = vunpack.c.l.b16 %v787
          %v844 = vunpack.c.l.b16 %v788
          %v845 = vunpack.c.l.b16 %v789
          %v846 = vunpack.c.l.b16 %v790
          %v847 = vpack.c.b16 %v832, %v831
          %v848 = vpack.c.b16 %v834, %v833
          %v849 = vpack.c.b16 %v836, %v835
          %v850 = vpack.c.b16 %v838, %v837
          %v851 = vpack.c.b16 %v840, %v839
          %v852 = vpack.c.b16 %v842, %v841
          %v853 = vpack.c.b16 %v844, %v843
          %v854 = vpack.c.b16 %v846, %v845
          %v879 = vunpack.c.l.b16 %v792
          %v880 = vunpack.c.l.b16 %v793
          %v881 = vunpack.c.l.b16 %v794
          %v882 = vunpack.c.l.b16 %v795
          %v883 = vunpack.c.l.b16 %v796
          %v884 = vunpack.c.l.b16 %v797
          %v885 = vunpack.c.l.b16 %v798
          %v886 = vunpack.c.l.b16 %v799
          %v887 = vunpack.c.l.b16 %v800
          %v888 = vunpack.c.l.b16 %v801
          %v889 = vunpack.c.l.b16 %v802
          %v890 = vunpack.c.l.b16 %v803
          %v891 = vunpack.c.l.b16 %v804
          %v892 = vunpack.c.l.b16 %v805
          %v893 = vunpack.c.l.b16 %v806
          %v894 = vunpack.c.l.b16 %v807
          %v895 = vpack.c.b16 %v880, %v879
          %v896 = vpack.c.b16 %v882, %v881
          %v897 = vpack.c.b16 %v884, %v883
          %v898 = vpack.c.b16 %v886, %v885
          %v899 = vpack.c.b16 %v888, %v887
          %v900 = vpack.c.b16 %v890, %v889
          %v901 = vpack.c.b16 %v892, %v891
          %v902 = vpack.c.b16 %v894, %v893
          %911 = vmatprep.subr.bf16.mxu0 0
          %912 = vmatpush1.bf16.msra.mxu0 %v895
          %913 = vmatprep.subr.bf16.mxu0 0
          %914 = vmatpush1.bf16.msra.mxu0 %v896
          %915 = vmatprep.subr.bf16.mxu0 0
          %916 = vmatpush1.bf16.msra.mxu0 %v897
          %917 = vmatprep.subr.bf16.mxu0 0
          %918 = vmatpush1.bf16.msra.mxu0 %v898
          %919 = vmatprep.subr.bf16.mxu0 0
          %920 = vmatpush1.bf16.msra.mxu0 %v899
          %921 = vmatprep.subr.bf16.mxu0 0
          %922 = vmatpush1.bf16.msra.mxu0 %v900
          %923 = vmatprep.subr.bf16.mxu0 0
          %924 = vmatpush1.bf16.msra.mxu0 %v901
          %925 = vmatprep.subr.bf16.mxu0 0
          %926 = vmatpush1.bf16.msra.mxu0 %v902
          %927 = vmatprep.subr.bf16.mxu0 0
          %928 = vmatpush1.bf16.msra.mxu0 0
          %929 = vmatprep.subr.bf16.mxu0 0
          %930 = vmatpush1.bf16.msra.mxu0 0
          %931 = vmatprep.subr.bf16.mxu0 0
          %932 = vmatpush1.bf16.msra.mxu0 0
          %933 = vmatprep.subr.bf16.mxu0 0
          %934 = vmatpush1.bf16.msra.mxu0 0
          %935 = vmatprep.subr.bf16.mxu0 0
          %936 = vmatpush1.bf16.msra.mxu0 0
          %937 = vmatprep.subr.bf16.mxu0 0
          %938 = vmatpush1.bf16.msra.mxu0 0
          %939 = vmatprep.subr.bf16.mxu0 0
          %940 = vmatpush1.bf16.msra.mxu0 0
          %941 = vmatprep.subr.bf16.mxu0 0
          %942 = vmatpush1.bf16.msra.mxu0 0
          %943 = vmatprep.mubr.bf16.mxu0 0
          %944 = vmatmul.mubr.bf16.gmra.mrb[0].mxu0 %v847
          %v945 = vpop.f32.mrb[0].mxu0
          %v946 = vadd.f32 %v813, %v945
          %v947 = vpop.f32.mrb[0].mxu0
          %v948 = vpop.f32.mrb[0].mxu0
          %v949 = vadd.f32 %v813, %v948
          %v950 = vpop.f32.mrb[0].mxu0
          %951 = vmatprep.mubr.bf16.mxu0 0
          %952 = vmatmul.mubr.bf16.gmra.mrb[0].mxu0 %v848
          %v953 = vpop.f32.mrb[0].mxu0
          %v954 = vadd.f32 %v813, %v953
          %v955 = vpop.f32.mrb[0].mxu0
          %v956 = vpop.f32.mrb[0].mxu0
          %v957 = vadd.f32 %v813, %v956
          %v958 = vpop.f32.mrb[0].mxu0
          %959 = vmatprep.mubr.bf16.mxu0 0
          %960 = vmatmul.mubr.bf16.gmra.mrb[0].mxu0 %v849
          %v961 = vpop.f32.mrb[0].mxu0
          %v962 = vadd.f32 %v813, %v961
          %v963 = vpop.f32.mrb[0].mxu0
          %v964 = vpop.f32.mrb[0].mxu0
          %v965 = vadd.f32 %v813, %v964
          %v966 = vpop.f32.mrb[0].mxu0
          %967 = vmatprep.mubr.bf16.mxu0 0
          %968 = vmatmul.mubr.bf16.gmra.mrb[0].mxu0 %v850
          %v969 = vpop.f32.mrb[0].mxu0
          %v970 = vadd.f32 %v813, %v969
          %v971 = vpop.f32.mrb[0].mxu0
          %v972 = vpop.f32.mrb[0].mxu0
          %v973 = vadd.f32 %v813, %v972
          %v974 = vpop.f32.mrb[0].mxu0
          %975 = vmatprep.mubr.bf16.mxu0 0
          %976 = vmatmul.mubr.bf16.gmra.mrb[0].mxu0 %v851
          %v977 = vpop.f32.mrb[0].mxu0
          %v978 = vadd.f32 %v813, %v977
          %v979 = vpop.f32.mrb[0].mxu0
          %v980 = vpop.f32.mrb[0].mxu0
          %v981 = vadd.f32 %v813, %v980
          %v982 = vpop.f32.mrb[0].mxu0
          %983 = vmatprep.mubr.bf16.mxu0 0
          %984 = vmatmul.mubr.bf16.gmra.mrb[0].mxu0 %v852
          %v985 = vpop.f32.mrb[0].mxu0
          %v986 = vadd.f32 %v813, %v985
          %v987 = vpop.f32.mrb[0].mxu0
          %v988 = vpop.f32.mrb[0].mxu0
          %v989 = vadd.f32 %v813, %v988
          %v990 = vpop.f32.mrb[0].mxu0
          %991 = vmatprep.mubr.bf16.mxu0 0
          %992 = vmatmul.mubr.bf16.gmra.mrb[0].mxu0 %v853
          %v993 = vpop.f32.mrb[0].mxu0
          %v994 = vadd.f32 %v813, %v993
          %v995 = vpop.f32.mrb[0].mxu0
          %v996 = vpop.f32.mrb[0].mxu0
          %v997 = vadd.f32 %v813, %v996
          %v998 = vpop.f32.mrb[0].mxu0
          %999 = vmatprep.mubr.bf16.mxu0 0
          %1000 = vmatmul.mubr.bf16.gmra.mrb[0].mxu0 %v854
          %v1001 = vpop.f32.mrb[0].mxu0
          %v1002 = vadd.f32 %v813, %v1001
          %v1003 = vpop.f32.mrb[0].mxu0
          %v1004 = vpop.f32.mrb[0].mxu0
          %v1005 = vadd.f32 %v813, %v1004
          %v1006 = vpop.f32.mrb[0].mxu0
          %1007 = vdwg.mxu0
          %v1008 = vmax.f32 %v946, 0.0
          %v1009 = vmax.f32 %v949, 0.0
          %v1010 = vmax.f32 %v954, 0.0
          %v1011 = vmax.f32 %v957, 0.0
          %v1012 = vmax.f32 %v962, 0.0
          %v1013 = vmax.f32 %v965, 0.0
          %v1014 = vmax.f32 %v970, 0.0
          %v1015 = vmax.f32 %v973, 0.0
          %v1016 = vmax.f32 %v978, 0.0
          %v1017 = vmax.f32 %v981, 0.0
          %v1018 = vmax.f32 %v986, 0.0
          %v1019 = vmax.f32 %v989, 0.0
          %v1020 = vmax.f32 %v994, 0.0
          %v1021 = vmax.f32 %v997, 0.0
          %v1022 = vmax.f32 %v1002, 0.0
          %v1023 = vmax.f32 %v1005, 0.0
          %v1024 = vld [vmem:[#allocation12] sm:$0xf]
          %v1025 = vld [vmem:[#allocation12 + $0x4] sm:$0xf]
          %v1026 = vld [vmem:[#allocation12 + $0x8] sm:$0xf]
          %v1027 = vld [vmem:[#allocation12 + $0xc] sm:$0xf]
          %v1028 = vld [vmem:[#allocation12 + $0x10] sm:$0xf]
          %v1029 = vld [vmem:[#allocation12 + $0x14] sm:$0xf]
          %v1030 = vld [vmem:[#allocation12 + $0x18] sm:$0xf]
          %v1031 = vld [vmem:[#allocation12 + $0x1c] sm:$0xf]
          %v1032 = vld [vmem:[#allocation12 + $0x20] sm:$0xf]
          %v1033 = vld [vmem:[#allocation12 + $0x24] sm:$0xf]
          %v1034 = vld [vmem:[#allocation12 + $0x28] sm:$0xf]
          %v1035 = vld [vmem:[#allocation12 + $0x2c] sm:$0xf]
          %v1036 = vld [vmem:[#allocation12 + $0x30] sm:$0xf]
          %v1037 = vld [vmem:[#allocation12 + $0x34] sm:$0xf]
          %v1038 = vld [vmem:[#allocation12 + $0x38] sm:$0xf]
          %v1039 = vld [vmem:[#allocation12 + $0x3c] sm:$0xf]
          %v1040 = vld [vmem:[%s7] sm:$0x1]
          %v1042 = vlaneseq
          %v1043 = vshrl.u32 %v1042, 7
          %v1044 = vsub.s32 0, %v1043
          %v1045 = vrot.slane %v1040, %v1044
          %v1063 = vunpack.c.l.b16 %v1024
          %v1064 = vunpack.c.l.b16 %v1025
          %v1065 = vunpack.c.l.b16 %v1026
          %v1066 = vunpack.c.l.b16 %v1027
          %v1067 = vunpack.c.l.b16 %v1028
          %v1068 = vunpack.c.l.b16 %v1029
          %v1069 = vunpack.c.l.b16 %v1030
          %v1070 = vunpack.c.l.b16 %v1031
          %v1071 = vunpack.c.l.b16 %v1032
          %v1072 = vunpack.c.l.b16 %v1033
          %v1073 = vunpack.c.l.b16 %v1034
          %v1074 = vunpack.c.l.b16 %v1035
          %v1075 = vunpack.c.l.b16 %v1036
          %v1076 = vunpack.c.l.b16 %v1037
          %v1077 = vunpack.c.l.b16 %v1038
          %v1078 = vunpack.c.l.b16 %v1039
          %v1079 = vpack.c.b16 %v1064, %v1063
          %v1080 = vpack.c.b16 %v1066, %v1065
          %v1081 = vpack.c.b16 %v1068, %v1067
          %v1082 = vpack.c.b16 %v1070, %v1069
          %v1083 = vpack.c.b16 %v1072, %v1071
          %v1084 = vpack.c.b16 %v1074, %v1073
          %v1085 = vpack.c.b16 %v1076, %v1075
          %v1086 = vpack.c.b16 %v1078, %v1077
          %1095 = vmatprep.subr.bf16.mxu0 0
          %1096 = vmatpush1.bf16.msra.mxu0 %v1079
          %1097 = vmatprep.subr.bf16.mxu0 0
          %1098 = vmatpush1.bf16.msra.mxu0 %v1080
          %1099 = vmatprep.subr.bf16.mxu0 0
          %1100 = vmatpush1.bf16.msra.mxu0 %v1081
          %1101 = vmatprep.subr.bf16.mxu0 0
          %1102 = vmatpush1.bf16.msra.mxu0 %v1082
          %1103 = vmatprep.subr.bf16.mxu0 0
          %1104 = vmatpush1.bf16.msra.mxu0 %v1083
          %1105 = vmatprep.subr.bf16.mxu0 0
          %1106 = vmatpush1.bf16.msra.mxu0 %v1084
          %1107 = vmatprep.subr.bf16.mxu0 0
          %1108 = vmatpush1.bf16.msra.mxu0 %v1085
          %1109 = vmatprep.subr.bf16.mxu0 0
          %1110 = vmatpush1.bf16.msra.mxu0 %v1086
          %1111 = vmatprep.subr.bf16.mxu0 0
          %1112 = vmatpush1.bf16.msra.mxu0 0
          %1113 = vmatprep.subr.bf16.mxu0 0
          %1114 = vmatpush1.bf16.msra.mxu0 0
          %1115 = vmatprep.subr.bf16.mxu0 0
          %1116 = vmatpush1.bf16.msra.mxu0 0
          %1117 = vmatprep.subr.bf16.mxu0 0
          %1118 = vmatpush1.bf16.msra.mxu0 0
          %1119 = vmatprep.subr.bf16.mxu0 0
          %1120 = vmatpush1.bf16.msra.mxu0 0
          %1121 = vmatprep.subr.bf16.mxu0 0
          %1122 = vmatpush1.bf16.msra.mxu0 0
          %1123 = vmatprep.subr.bf16.mxu0 0
          %1124 = vmatpush1.bf16.msra.mxu0 0
          %1125 = vmatprep.subr.bf16.mxu0 0
          %1126 = vmatpush1.bf16.msra.mxu0 0
          %1127 = vmatprep.mubr.bf16.mxu0 0
          %1128 = vmatmul.mubr.bf16.gmra.mrb[0].mxu0 %v774
          %v1129 = vpop.f32.mrb[0].mxu0
          %v1130 = vadd.f32 %v1045, %v1129
          %v1131 = vpop.f32.mrb[0].mxu0
          %v1132 = vpop.f32.mrb[0].mxu0
          %v1133 = vpop.f32.mrb[0].mxu0
          %1134 = vdwg.mxu0
          %v1135 = vmax.f32 %v1130, 0.0
          %v1136 = vld [vmem:[%s8] sm:$0x1]
          %v1138 = vlaneseq
          %v1139 = vshrl.u32 %v1138, 7
          %v1140 = vsub.s32 0, %v1139
          %v1141 = vrot.slane %v1136, %v1140
          %v1143 = vmul.f32 %v1135, %v1141
          %v1145 = vcombine.high %v1143, %v1143
          %v1147 = vunpack.c.l.s4 1966171168
          %v1148 = vunpack.c.0.s8 %v1147
          %v1149 = vlaneseq
          %v1150 = vshrl.u32 %v1149, 7
          %v1151 = vsub.s32 %v1148, %v1150
          %v1152 = vrot.slane %v1143, %v1151
          %v1154 = vunpack.c.l.s4 1966171168
          %v1155 = vunpack.c.0.s8 %v1154
          %v1156 = vlaneseq
          %v1157 = vshrl.u32 %v1156, 7
          %v1158 = vsub.s32 %v1155, %v1157
          %v1159 = vrot.slane %v1145, %v1158
          %v1160 = vcombine.high %v1152, %v1152
          %v1161 = vcombine.high %v1159, %v1159
          %v1163 = vunpack.c.l.s4 1966171168
          %v1164 = vunpack.c.0.s8 %v1163
          %v1165 = vlaneseq
          %v1166 = vshrl.u32 %v1165, 7
          %v1167 = vsub.s32 %v1164, %v1166
          %v1168 = vrot.slane %v1152, %v1167
          %v1170 = vunpack.c.l.s4 1966171168
          %v1171 = vunpack.c.0.s8 %v1170
          %v1172 = vlaneseq
          %v1173 = vshrl.u32 %v1172, 7
          %v1174 = vsub.s32 %v1171, %v1173
          %v1175 = vrot.slane %v1159, %v1174
          %v1177 = vunpack.c.l.s4 1966171168
          %v1178 = vunpack.c.0.s8 %v1177
          %v1179 = vlaneseq
          %v1180 = vshrl.u32 %v1179, 7
          %v1181 = vsub.s32 %v1178, %v1180
          %v1182 = vrot.slane %v1160, %v1181
          %v1184 = vunpack.c.l.s4 1966171168
          %v1185 = vunpack.c.0.s8 %v1184
          %v1186 = vlaneseq
          %v1187 = vshrl.u32 %v1186, 7
          %v1188 = vsub.s32 %v1185, %v1187
          %v1189 = vrot.slane %v1161, %v1188
          %v1190 = vcombine.high %v1168, %v1168
          %v1191 = vcombine.high %v1175, %v1175
          %v1192 = vcombine.high %v1182, %v1182
          %v1193 = vcombine.high %v1189, %v1189
          %v1194 = vlaneseq
          %v1195 = vshrl.u32 %v1194, 7
          %v1196 = vsub.s32 0, %v1195
          %v1197 = vrot.slane %v1168, %v1196
          %v1198 = vlaneseq
          %v1199 = vshrl.u32 %v1198, 7
          %v1200 = vsub.s32 0, %v1199
          %v1201 = vrot.slane %v1182, %v1200
          %v1202 = vlaneseq
          %v1203 = vshrl.u32 %v1202, 7
          %v1204 = vsub.s32 0, %v1203
          %v1205 = vrot.slane %v1190, %v1204
          %v1206 = vlaneseq
          %v1207 = vshrl.u32 %v1206, 7
          %v1208 = vsub.s32 0, %v1207
          %v1209 = vrot.slane %v1192, %v1208
          %v1210 = vlaneseq
          %v1211 = vshrl.u32 %v1210, 7
          %v1212 = vsub.s32 0, %v1211
          %v1213 = vrot.slane %v1175, %v1212
          %v1214 = vlaneseq
          %v1215 = vshrl.u32 %v1214, 7
          %v1216 = vsub.s32 0, %v1215
          %v1217 = vrot.slane %v1189, %v1216
          %v1218 = vlaneseq
          %v1219 = vshrl.u32 %v1218, 7
          %v1220 = vsub.s32 0, %v1219
          %v1221 = vrot.slane %v1191, %v1220
          %v1222 = vlaneseq
          %v1223 = vshrl.u32 %v1222, 7
          %v1224 = vsub.s32 0, %v1223
          %v1225 = vrot.slane %v1193, %v1224
          %v1234 = vmul.f32 %v1008, %v1197
          %v1235 = vmul.f32 %v1009, %v1197
          %v1236 = vmul.f32 %v1010, %v1201
          %v1237 = vmul.f32 %v1011, %v1201
          %v1238 = vmul.f32 %v1012, %v1205
          %v1239 = vmul.f32 %v1013, %v1205
          %v1240 = vmul.f32 %v1014, %v1209
          %v1241 = vmul.f32 %v1015, %v1209
          %v1242 = vmul.f32 %v1016, %v1213
          %v1243 = vmul.f32 %v1017, %v1213
          %v1244 = vmul.f32 %v1018, %v1217
          %v1245 = vmul.f32 %v1019, %v1217
          %v1246 = vmul.f32 %v1020, %v1221
          %v1247 = vmul.f32 %v1021, %v1221
          %v1248 = vmul.f32 %v1022, %v1225
          %v1249 = vmul.f32 %v1023, %v1225
          %1250 = vadd.xlane.f32.xlu0 %v1234
          %v1251 = vpop.xlane.xlu0 %1250
          %1252 = vadd.xlane.f32.xlu0 %v1235
          %v1253 = vpop.xlane.xlu0 %1252
          %1254 = vadd.xlane.f32.xlu0 %v1236
          %v1255 = vpop.xlane.xlu0 %1254
          %1256 = vadd.xlane.f32.xlu0 %v1237
          %v1257 = vpop.xlane.xlu0 %1256
          %1258 = vadd.xlane.f32.xlu0 %v1238
          %v1259 = vpop.xlane.xlu0 %1258
          %1260 = vadd.xlane.f32.xlu0 %v1239
          %v1261 = vpop.xlane.xlu0 %1260
          %1262 = vadd.xlane.f32.xlu0 %v1240
          %v1263 = vpop.xlane.xlu0 %1262
          %1264 = vadd.xlane.f32.xlu0 %v1241
          %v1265 = vpop.xlane.xlu0 %1264
          %1266 = vadd.xlane.f32.xlu0 %v1242
          %v1267 = vpop.xlane.xlu0 %1266
          %1268 = vadd.xlane.f32.xlu0 %v1243
          %v1269 = vpop.xlane.xlu0 %1268
          %1270 = vadd.xlane.f32.xlu0 %v1244
          %v1271 = vpop.xlane.xlu0 %1270
          %1272 = vadd.xlane.f32.xlu0 %v1245
          %v1273 = vpop.xlane.xlu0 %1272
          %1274 = vadd.xlane.f32.xlu0 %v1246
          %v1275 = vpop.xlane.xlu0 %1274
          %1276 = vadd.xlane.f32.xlu0 %v1247
          %v1277 = vpop.xlane.xlu0 %1276
          %1278 = vadd.xlane.f32.xlu0 %v1248
          %v1279 = vpop.xlane.xlu0 %1278
          %1280 = vadd.xlane.f32.xlu0 %v1249
          %v1281 = vpop.xlane.xlu0 %1280
          %s1282 = sld [smem:[#allocation3]]
          %v1283 = vstv %s1282
          %v1284 = vadd.f32 %v1251, %v1283
          %v1285 = vadd.f32 %v1253, %v1283
          %v1286 = vadd.f32 %v1255, %v1283
          %v1287 = vadd.f32 %v1257, %v1283
          %v1288 = vadd.f32 %v1259, %v1283
          %v1289 = vadd.f32 %v1261, %v1283
          %v1290 = vadd.f32 %v1263, %v1283
          %v1291 = vadd.f32 %v1265, %v1283
          %v1292 = vadd.f32 %v1267, %v1283
          %v1293 = vadd.f32 %v1269, %v1283
          %v1294 = vadd.f32 %v1271, %v1283
          %v1295 = vadd.f32 %v1273, %v1283
          %v1296 = vadd.f32 %v1275, %v1283
          %v1297 = vadd.f32 %v1277, %v1283
          %v1298 = vadd.f32 %v1279, %v1283
          %v1299 = vadd.f32 %v1281, %v1283
          %v1300 = vlaneseq
          %v1301 = vshrl.u32 %v1300, 7
          %v1302 = vsub.s32 0, %v1301
          %v1303 = vrot.slane %v791, %v1302
          %1305 = vbcast.lane.b32.xlu0 %v1303, 256
          %v1306 = vpop.permute.xlu0 %1305
          %s1308 = sor.u32 256, 8
          %1309 = vbcast.lane.b32.xlu0 %v1303, %s1308
          %v1310 = vpop.permute.xlu0 %1309
          %v1311 = vlaneseq
          %v1312 = vshrl.u32 %v1311, 7
          %v1313 = vsub.s32 1, %v1312
          %v1314 = vrot.slane %v791, %v1313
          %1316 = vbcast.lane.b32.xlu0 %v1314, 256
          %v1317 = vpop.permute.xlu0 %1316
          %s1319 = sor.u32 256, 8
          %1320 = vbcast.lane.b32.xlu0 %v1314, %s1319
          %v1321 = vpop.permute.xlu0 %1320
          %v1322 = vlaneseq
          %v1323 = vshrl.u32 %v1322, 7
          %v1324 = vsub.s32 2, %v1323
          %v1325 = vrot.slane %v791, %v1324
          %1327 = vbcast.lane.b32.xlu0 %v1325, 256
          %v1328 = vpop.permute.xlu0 %1327
          %s1330 = sor.u32 256, 8
          %1331 = vbcast.lane.b32.xlu0 %v1325, %s1330
          %v1332 = vpop.permute.xlu0 %1331
          %v1333 = vlaneseq
          %v1334 = vshrl.u32 %v1333, 7
          %v1335 = vsub.s32 3, %v1334
          %v1336 = vrot.slane %v791, %v1335
          %1338 = vbcast.lane.b32.xlu0 %v1336, 256
          %v1339 = vpop.permute.xlu0 %1338
          %s1341 = sor.u32 256, 8
          %1342 = vbcast.lane.b32.xlu0 %v1336, %s1341
          %v1343 = vpop.permute.xlu0 %1342
          %v1344 = vlaneseq
          %v1345 = vshrl.u32 %v1344, 7
          %v1346 = vsub.s32 4, %v1345
          %v1347 = vrot.slane %v791, %v1346
          %1349 = vbcast.lane.b32.xlu0 %v1347, 256
          %v1350 = vpop.permute.xlu0 %1349
          %s1352 = sor.u32 256, 8
          %1353 = vbcast.lane.b32.xlu0 %v1347, %s1352
          %v1354 = vpop.permute.xlu0 %1353
          %v1355 = vlaneseq
          %v1356 = vshrl.u32 %v1355, 7
          %v1357 = vsub.s32 5, %v1356
          %v1358 = vrot.slane %v791, %v1357
          %1360 = vbcast.lane.b32.xlu0 %v1358, 256
          %v1361 = vpop.permute.xlu0 %1360
          %s1363 = sor.u32 256, 8
          %1364 = vbcast.lane.b32.xlu0 %v1358, %s1363
          %v1365 = vpop.permute.xlu0 %1364
          %v1366 = vlaneseq
          %v1367 = vshrl.u32 %v1366, 7
          %v1368 = vsub.s32 6, %v1367
          %v1369 = vrot.slane %v791, %v1368
          %1371 = vbcast.lane.b32.xlu0 %v1369, 256
          %v1372 = vpop.permute.xlu0 %1371
          %s1374 = sor.u32 256, 8
          %1375 = vbcast.lane.b32.xlu0 %v1369, %s1374
          %v1376 = vpop.permute.xlu0 %1375
          %v1377 = vlaneseq
          %v1378 = vshrl.u32 %v1377, 7
          %v1379 = vsub.s32 7, %v1378
          %v1380 = vrot.slane %v791, %v1379
          %1382 = vbcast.lane.b32.xlu0 %v1380, 256
          %v1383 = vpop.permute.xlu0 %1382
          %s1385 = sor.u32 256, 8
          %1386 = vbcast.lane.b32.xlu0 %v1380, %s1385
          %v1387 = vpop.permute.xlu0 %1386
          %v1388 = vmul.f32 %v1284, %v1306
          %v1389 = vmul.f32 %v1285, %v1310
          %v1390 = vmul.f32 %v1286, %v1317
          %v1391 = vmul.f32 %v1287, %v1321
          %v1392 = vmul.f32 %v1288, %v1328
          %v1393 = vmul.f32 %v1289, %v1332
          %v1394 = vmul.f32 %v1290, %v1339
          %v1395 = vmul.f32 %v1291, %v1343
          %v1396 = vmul.f32 %v1292, %v1350
          %v1397 = vmul.f32 %v1293, %v1354
          %v1398 = vmul.f32 %v1294, %v1361
          %v1399 = vmul.f32 %v1295, %v1365
          %v1400 = vmul.f32 %v1296, %v1372
          %v1401 = vmul.f32 %v1297, %v1376
          %v1402 = vmul.f32 %v1298, %v1383
          %v1403 = vmul.f32 %v1299, %v1387
          %v1404 = vld [vmem:[%s3] sm:$0xff]
          %v1405 = vld [vmem:[%s3 + $0x8] sm:$0xff]
          %v1406 = vadd.f32 %v1388, %v1404
          %v1407 = vadd.f32 %v1389, %v1405
          %v1408 = vadd.f32 %v1390, %v1404
          %v1409 = vadd.f32 %v1391, %v1405
          %v1410 = vadd.f32 %v1392, %v1404
          %v1411 = vadd.f32 %v1393, %v1405
          %v1412 = vadd.f32 %v1394, %v1404
          %v1413 = vadd.f32 %v1395, %v1405
          %v1414 = vadd.f32 %v1396, %v1404
          %v1415 = vadd.f32 %v1397, %v1405
          %v1416 = vadd.f32 %v1398, %v1404
          %v1417 = vadd.f32 %v1399, %v1405
          %v1418 = vadd.f32 %v1400, %v1404
          %v1419 = vadd.f32 %v1401, %v1405
          %v1420 = vadd.f32 %v1402, %v1404
          %v1421 = vadd.f32 %v1403, %v1405
          %vm1422 = vcmask 7168
          %v1423 = vsel %vm1422, %v1406, -inf
          %v1424 = vsel %vm1422, %v1407, -inf
          %v1425 = vmax.f32 %v1423, %v1424
          %v1426 = vrot.slane %v1425, 4
          %v1427 = vmax.f32 %v1425, %v1426
          %v1428 = vrot.slane %v1427, 2
          %v1429 = vmax.f32 %v1427, %v1428
          %v1430 = vrot.slane %v1429, 1
          %v1431 = vmax.f32 %v1429, %v1430
          %v1432 = vsel %vm1422, %v1408, -inf
          %v1433 = vsel %vm1422, %v1409, -inf
          %v1434 = vmax.f32 %v1432, %v1433
          %v1435 = vrot.slane %v1434, 4
          %v1436 = vmax.f32 %v1434, %v1435
          %v1437 = vrot.slane %v1436, 2
          %v1438 = vmax.f32 %v1436, %v1437
          %v1439 = vrot.slane %v1438, 1
          %v1440 = vmax.f32 %v1438, %v1439
          %v1441 = vsel %vm1422, %v1410, -inf
          %v1442 = vsel %vm1422, %v1411, -inf
          %v1443 = vmax.f32 %v1441, %v1442
          %v1444 = vrot.slane %v1443, 4
          %v1445 = vmax.f32 %v1443, %v1444
          %v1446 = vrot.slane %v1445, 2
          %v1447 = vmax.f32 %v1445, %v1446
          %v1448 = vrot.slane %v1447, 1
          %v1449 = vmax.f32 %v1447, %v1448
          %v1450 = vsel %vm1422, %v1412, -inf
          %v1451 = vsel %vm1422, %v1413, -inf
          %v1452 = vmax.f32 %v1450, %v1451
          %v1453 = vrot.slane %v1452, 4
          %v1454 = vmax.f32 %v1452, %v1453
          %v1455 = vrot.slane %v1454, 2
          %v1456 = vmax.f32 %v1454, %v1455
          %v1457 = vrot.slane %v1456, 1
          %v1458 = vmax.f32 %v1456, %v1457
          %v1459 = vsel %vm1422, %v1414, -inf
          %v1460 = vsel %vm1422, %v1415, -inf
          %v1461 = vmax.f32 %v1459, %v1460
          %v1462 = vrot.slane %v1461, 4
          %v1463 = vmax.f32 %v1461, %v1462
          %v1464 = vrot.slane %v1463, 2
          %v1465 = vmax.f32 %v1463, %v1464
          %v1466 = vrot.slane %v1465, 1
          %v1467 = vmax.f32 %v1465, %v1466
          %v1468 = vsel %vm1422, %v1416, -inf
          %v1469 = vsel %vm1422, %v1417, -inf
          %v1470 = vmax.f32 %v1468, %v1469
          %v1471 = vrot.slane %v1470, 4
          %v1472 = vmax.f32 %v1470, %v1471
          %v1473 = vrot.slane %v1472, 2
          %v1474 = vmax.f32 %v1472, %v1473
          %v1475 = vrot.slane %v1474, 1
          %v1476 = vmax.f32 %v1474, %v1475
          %v1477 = vsel %vm1422, %v1418, -inf
          %v1478 = vsel %vm1422, %v1419, -inf
          %v1479 = vmax.f32 %v1477, %v1478
          %v1480 = vrot.slane %v1479, 4
          %v1481 = vmax.f32 %v1479, %v1480
          %v1482 = vrot.slane %v1481, 2
          %v1483 = vmax.f32 %v1481, %v1482
          %v1484 = vrot.slane %v1483, 1
          %v1485 = vmax.f32 %v1483, %v1484
          %v1486 = vsel %vm1422, %v1420, -inf
          %v1487 = vsel %vm1422, %v1421, -inf
          %v1488 = vmax.f32 %v1486, %v1487
          %v1489 = vrot.slane %v1488, 4
          %v1490 = vmax.f32 %v1488, %v1489
          %v1491 = vrot.slane %v1490, 2
          %v1492 = vmax.f32 %v1490, %v1491
          %v1493 = vrot.slane %v1492, 1
          %v1494 = vmax.f32 %v1492, %v1493
          %v1495 = vsub.f32 %v1406, %v1431
          %v1496 = vsub.f32 %v1407, %v1431
          %v1497 = vsub.f32 %v1408, %v1440
          %v1498 = vsub.f32 %v1409, %v1440
          %v1499 = vsub.f32 %v1410, %v1449
          %v1500 = vsub.f32 %v1411, %v1449
          %v1501 = vsub.f32 %v1412, %v1458
          %v1502 = vsub.f32 %v1413, %v1458
          %v1503 = vsub.f32 %v1414, %v1467
          %v1504 = vsub.f32 %v1415, %v1467
          %v1505 = vsub.f32 %v1416, %v1476
          %v1506 = vsub.f32 %v1417, %v1476
          %v1507 = vsub.f32 %v1418, %v1485
          %v1508 = vsub.f32 %v1419, %v1485
          %v1509 = vsub.f32 %v1420, %v1494
          %v1510 = vsub.f32 %v1421, %v1494
          %v1511 = vmul.f32 %v1495, 1.442695
          %v1512 = vpow.pop %v1511
          %v1513 = vmul.f32 %v1496, 1.442695
          %v1514 = vpow.pop %v1513
          %v1515 = vmul.f32 %v1497, 1.442695
          %v1516 = vpow.pop %v1515
          %v1517 = vmul.f32 %v1498, 1.442695
          %v1518 = vpow.pop %v1517
          %v1519 = vmul.f32 %v1499, 1.442695
          %v1520 = vpow.pop %v1519
          %v1521 = vmul.f32 %v1500, 1.442695
          %v1522 = vpow.pop %v1521
          %v1523 = vmul.f32 %v1501, 1.442695
          %v1524 = vpow.pop %v1523
          %v1525 = vmul.f32 %v1502, 1.442695
          %v1526 = vpow.pop %v1525
          %v1527 = vmul.f32 %v1503, 1.442695
          %v1528 = vpow.pop %v1527
          %v1529 = vmul.f32 %v1504, 1.442695
          %v1530 = vpow.pop %v1529
          %v1531 = vmul.f32 %v1505, 1.442695
          %v1532 = vpow.pop %v1531
          %v1533 = vmul.f32 %v1506, 1.442695
          %v1534 = vpow.pop %v1533
          %v1535 = vmul.f32 %v1507, 1.442695
          %v1536 = vpow.pop %v1535
          %v1537 = vmul.f32 %v1508, 1.442695
          %v1538 = vpow.pop %v1537
          %v1539 = vmul.f32 %v1509, 1.442695
          %v1540 = vpow.pop %v1539
          %v1541 = vmul.f32 %v1510, 1.442695
          %v1542 = vpow.pop %v1541
          %v1543 = vsel %vm1422, %v1512, 0.0
          %v1544 = vsel %vm1422, %v1514, 0.0
          %v1545 = vadd.f32 %v1543, %v1544
          %v1546 = vrot.slane %v1545, 4
          %v1547 = vadd.f32 %v1545, %v1546
          %v1548 = vrot.slane %v1547, 2
          %v1549 = vadd.f32 %v1547, %v1548
          %v1550 = vrot.slane %v1549, 1
          %v1551 = vadd.f32 %v1549, %v1550
          %v1552 = vsel %vm1422, %v1516, 0.0
          %v1553 = vsel %vm1422, %v1518, 0.0
          %v1554 = vadd.f32 %v1552, %v1553
          %v1555 = vrot.slane %v1554, 4
          %v1556 = vadd.f32 %v1554, %v1555
          %v1557 = vrot.slane %v1556, 2
          %v1558 = vadd.f32 %v1556, %v1557
          %v1559 = vrot.slane %v1558, 1
          %v1560 = vadd.f32 %v1558, %v1559
          %v1561 = vsel %vm1422, %v1520, 0.0
          %v1562 = vsel %vm1422, %v1522, 0.0
          %v1563 = vadd.f32 %v1561, %v1562
          %v1564 = vrot.slane %v1563, 4
          %v1565 = vadd.f32 %v1563, %v1564
          %v1566 = vrot.slane %v1565, 2
          %v1567 = vadd.f32 %v1565, %v1566
          %v1568 = vrot.slane %v1567, 1
          %v1569 = vadd.f32 %v1567, %v1568
          %v1570 = vsel %vm1422, %v1524, 0.0
          %v1571 = vsel %vm1422, %v1526, 0.0
          %v1572 = vadd.f32 %v1570, %v1571
          %v1573 = vrot.slane %v1572, 4
          %v1574 = vadd.f32 %v1572, %v1573
          %v1575 = vrot.slane %v1574, 2
          %v1576 = vadd.f32 %v1574, %v1575
          %v1577 = vrot.slane %v1576, 1
          %v1578 = vadd.f32 %v1576, %v1577
          %v1579 = vsel %vm1422, %v1528, 0.0
          %v1580 = vsel %vm1422, %v1530, 0.0
          %v1581 = vadd.f32 %v1579, %v1580
          %v1582 = vrot.slane %v1581, 4
          %v1583 = vadd.f32 %v1581, %v1582
          %v1584 = vrot.slane %v1583, 2
          %v1585 = vadd.f32 %v1583, %v1584
          %v1586 = vrot.slane %v1585, 1
          %v1587 = vadd.f32 %v1585, %v1586
          %v1588 = vsel %vm1422, %v1532, 0.0
          %v1589 = vsel %vm1422, %v1534, 0.0
          %v1590 = vadd.f32 %v1588, %v1589
          %v1591 = vrot.slane %v1590, 4
          %v1592 = vadd.f32 %v1590, %v1591
          %v1593 = vrot.slane %v1592, 2
          %v1594 = vadd.f32 %v1592, %v1593
          %v1595 = vrot.slane %v1594, 1
          %v1596 = vadd.f32 %v1594, %v1595
          %v1597 = vsel %vm1422, %v1536, 0.0
          %v1598 = vsel %vm1422, %v1538, 0.0
          %v1599 = vadd.f32 %v1597, %v1598
          %v1600 = vrot.slane %v1599, 4
          %v1601 = vadd.f32 %v1599, %v1600
          %v1602 = vrot.slane %v1601, 2
          %v1603 = vadd.f32 %v1601, %v1602
          %v1604 = vrot.slane %v1603, 1
          %v1605 = vadd.f32 %v1603, %v1604
          %v1606 = vsel %vm1422, %v1540, 0.0
          %v1607 = vsel %vm1422, %v1542, 0.0
          %v1608 = vadd.f32 %v1606, %v1607
          %v1609 = vrot.slane %v1608, 4
          %v1610 = vadd.f32 %v1608, %v1609
          %v1611 = vrot.slane %v1610, 2
          %v1612 = vadd.f32 %v1610, %v1611
          %v1613 = vrot.slane %v1612, 1
          %v1614 = vadd.f32 %v1612, %v1613
          %v1615 = vrcp.pop %v1551
          %v1616 = vrcp.pop %v1560
          %v1617 = vrcp.pop %v1569
          %v1618 = vrcp.pop %v1578
          %v1619 = vrcp.pop %v1587
          %v1620 = vrcp.pop %v1596
          %v1621 = vrcp.pop %v1605
          %v1622 = vrcp.pop %v1614
          %v1623 = vmul.f32 %v1512, %v1615
          %v1624 = vmul.f32 %v1514, %v1615
          %v1625 = vmul.f32 %v1516, %v1616
          %v1626 = vmul.f32 %v1518, %v1616
          %v1627 = vmul.f32 %v1520, %v1617
          %v1628 = vmul.f32 %v1522, %v1617
          %v1629 = vmul.f32 %v1524, %v1618
          %v1630 = vmul.f32 %v1526, %v1618
          %v1631 = vmul.f32 %v1528, %v1619
          %v1632 = vmul.f32 %v1530, %v1619
          %v1633 = vmul.f32 %v1532, %v1620
          %v1634 = vmul.f32 %v1534, %v1620
          %v1635 = vmul.f32 %v1536, %v1621
          %v1636 = vmul.f32 %v1538, %v1621
          %v1637 = vmul.f32 %v1540, %v1622
          %v1638 = vmul.f32 %v1542, %v1622
          %v1639 = vpack.c.bf16 %v1624, %v1623
          %v1640 = vpack.c.bf16 %v1626, %v1625
          %v1641 = vpack.c.bf16 %v1628, %v1627
          %v1642 = vpack.c.bf16 %v1630, %v1629
          %v1643 = vpack.c.bf16 %v1632, %v1631
          %v1644 = vpack.c.bf16 %v1634, %v1633
          %v1645 = vpack.c.bf16 %v1636, %v1635
          %v1646 = vpack.c.bf16 %v1638, %v1637
          %1647 = vxpose.xlu0.c.b16.start [1/8] %v1639, 128
          %1648 = vxpose.xlu0.c.b16.cont [2/8] 0, 128
          %1649 = vxpose.xlu0.c.b16.cont [3/8] 0, 128
          %1650 = vxpose.xlu0.c.b16.cont [4/8] 0, 128
          %1651 = vxpose.xlu0.c.b16.cont [5/8] 0, 128
          %1652 = vxpose.xlu0.c.b16.cont [6/8] 0, 128
          %1653 = vxpose.xlu0.c.b16.cont [7/8] 0, 128
          %1654 = vxpose.xlu0.c.b16.end [8/8] 0, 128
          %v1655 = vpop.trf.xlu0
          %v1656 = vpop.trf.xlu0
          %v1657 = vpop.trf.xlu0
          %v1658 = vpop.trf.xlu0
          %v1659 = vpop.trf.xlu0
          %v1660 = vpop.trf.xlu0
          %v1661 = vpop.trf.xlu0
          %v1662 = vpop.trf.xlu0
          %vm1663 = vcmask 130048
          %v1665 = vsel %vm1663, %v1655, 0
          %1667 = vmatprep.subr.bf16.mxu0 0
          %1668 = vmatpush1.bf16.msra.mxu0 %v847
          %1669 = vmatprep.subr.bf16.mxu0 0
          %1670 = vmatpush1.bf16.msra.mxu0 0
          %1671 = vmatprep.subr.bf16.mxu0 0
          %1672 = vmatpush1.bf16.msra.mxu0 0
          %1673 = vmatprep.subr.bf16.mxu0 0
          %1674 = vmatpush1.bf16.msra.mxu0 0
          %1675 = vmatprep.subr.bf16.mxu0 0
          %1676 = vmatpush1.bf16.msra.mxu0 0
          %1677 = vmatprep.subr.bf16.mxu0 0
          %1678 = vmatpush1.bf16.msra.mxu0 0
          %1679 = vmatprep.subr.bf16.mxu0 0
          %1680 = vmatpush1.bf16.msra.mxu0 0
          %1681 = vmatprep.subr.bf16.mxu0 0
          %1682 = vmatpush1.bf16.msra.mxu0 0
          %1683 = vmatprep.subr.bf16.mxu0 0
          %1684 = vmatpush1.bf16.msra.mxu0 0
          %1685 = vmatprep.subr.bf16.mxu0 0
          %1686 = vmatpush1.bf16.msra.mxu0 0
          %1687 = vmatprep.subr.bf16.mxu0 0
          %1688 = vmatpush1.bf16.msra.mxu0 0
          %1689 = vmatprep.subr.bf16.mxu0 0
          %1690 = vmatpush1.bf16.msra.mxu0 0
          %1691 = vmatprep.subr.bf16.mxu0 0
          %1692 = vmatpush1.bf16.msra.mxu0 0
          %1693 = vmatprep.subr.bf16.mxu0 0
          %1694 = vmatpush1.bf16.msra.mxu0 0
          %1695 = vmatprep.subr.bf16.mxu0 0
          %1696 = vmatpush1.bf16.msra.mxu0 0
          %1697 = vmatprep.subr.bf16.mxu0 0
          %1698 = vmatpush1.bf16.msra.mxu0 0
          %1699 = vmatprep.mubr.bf16.mxu0 0
          %1700 = vmatmul.mubr.bf16.gmra.mrb[0].mxu0 %v1665
          %v1701 = vpop.f32.mrb[0].mxu0
          %v1702 = vadd.f32 0.0, %v1701
          %v1703 = vpop.f32.mrb[0].mxu0
          %v1704 = vpop.f32.mrb[0].mxu0
          %v1705 = vpop.f32.mrb[0].mxu0
          %1706 = vdwg.mxu0
          %1707 = vxpose.xlu0.c.b16.start [1/8] %v1640, 128
          %1708 = vxpose.xlu0.c.b16.cont [2/8] 0, 128
          %1709 = vxpose.xlu0.c.b16.cont [3/8] 0, 128
          %1710 = vxpose.xlu0.c.b16.cont [4/8] 0, 128
          %1711 = vxpose.xlu0.c.b16.cont [5/8] 0, 128
          %1712 = vxpose.xlu0.c.b16.cont [6/8] 0, 128
          %1713 = vxpose.xlu0.c.b16.cont [7/8] 0, 128
          %1714 = vxpose.xlu0.c.b16.end [8/8] 0, 128
          %v1715 = vpop.trf.xlu0
          %v1716 = vpop.trf.xlu0
          %v1717 = vpop.trf.xlu0
          %v1718 = vpop.trf.xlu0
          %v1719 = vpop.trf.xlu0
          %v1720 = vpop.trf.xlu0
          %v1721 = vpop.trf.xlu0
          %v1722 = vpop.trf.xlu0
          %v1724 = vsel %vm1663, %v1715, 0
          %1726 = vmatprep.subr.bf16.mxu0 0
          %1727 = vmatpush1.bf16.msra.mxu0 %v848
          %1728 = vmatprep.subr.bf16.mxu0 0
          %1729 = vmatpush1.bf16.msra.mxu0 0
          %1730 = vmatprep.subr.bf16.mxu0 0
          %1731 = vmatpush1.bf16.msra.mxu0 0
          %1732 = vmatprep.subr.bf16.mxu0 0
          %1733 = vmatpush1.bf16.msra.mxu0 0
          %1734 = vmatprep.subr.bf16.mxu0 0
          %1735 = vmatpush1.bf16.msra.mxu0 0
          %1736 = vmatprep.subr.bf16.mxu0 0
          %1737 = vmatpush1.bf16.msra.mxu0 0
          %1738 = vmatprep.subr.bf16.mxu0 0
          %1739 = vmatpush1.bf16.msra.mxu0 0
          %1740 = vmatprep.subr.bf16.mxu0 0
          %1741 = vmatpush1.bf16.msra.mxu0 0
          %1742 = vmatprep.subr.bf16.mxu0 0
          %1743 = vmatpush1.bf16.msra.mxu0 0
          %1744 = vmatprep.subr.bf16.mxu0 0
          %1745 = vmatpush1.bf16.msra.mxu0 0
          %1746 = vmatprep.subr.bf16.mxu0 0
          %1747 = vmatpush1.bf16.msra.mxu0 0
          %1748 = vmatprep.subr.bf16.mxu0 0
          %1749 = vmatpush1.bf16.msra.mxu0 0
          %1750 = vmatprep.subr.bf16.mxu0 0
          %1751 = vmatpush1.bf16.msra.mxu0 0
          %1752 = vmatprep.subr.bf16.mxu0 0
          %1753 = vmatpush1.bf16.msra.mxu0 0
          %1754 = vmatprep.subr.bf16.mxu0 0
          %1755 = vmatpush1.bf16.msra.mxu0 0
          %1756 = vmatprep.subr.bf16.mxu0 0
          %1757 = vmatpush1.bf16.msra.mxu0 0
          %1758 = vmatprep.mubr.bf16.mxu0 0
          %1759 = vmatmul.mubr.bf16.gmra.mrb[0].mxu0 %v1724
          %v1760 = vpop.f32.mrb[0].mxu0
          %v1761 = vadd.f32 0.0, %v1760
          %v1762 = vpop.f32.mrb[0].mxu0
          %v1763 = vpop.f32.mrb[0].mxu0
          %v1764 = vpop.f32.mrb[0].mxu0
          %1765 = vdwg.mxu0
          %1766 = vxpose.xlu0.c.b16.start [1/8] %v1641, 128
          %1767 = vxpose.xlu0.c.b16.cont [2/8] 0, 128
          %1768 = vxpose.xlu0.c.b16.cont [3/8] 0, 128
          %1769 = vxpose.xlu0.c.b16.cont [4/8] 0, 128
          %1770 = vxpose.xlu0.c.b16.cont [5/8] 0, 128
          %1771 = vxpose.xlu0.c.b16.cont [6/8] 0, 128
          %1772 = vxpose.xlu0.c.b16.cont [7/8] 0, 128
          %1773 = vxpose.xlu0.c.b16.end [8/8] 0, 128
          %v1774 = vpop.trf.xlu0
          %v1775 = vpop.trf.xlu0
          %v1776 = vpop.trf.xlu0
          %v1777 = vpop.trf.xlu0
          %v1778 = vpop.trf.xlu0
          %v1779 = vpop.trf.xlu0
          %v1780 = vpop.trf.xlu0
          %v1781 = vpop.trf.xlu0
          %v1783 = vsel %vm1663, %v1774, 0
          %1785 = vmatprep.subr.bf16.mxu0 0
          %1786 = vmatpush1.bf16.msra.mxu0 %v849
          %1787 = vmatprep.subr.bf16.mxu0 0
          %1788 = vmatpush1.bf16.msra.mxu0 0
          %1789 = vmatprep.subr.bf16.mxu0 0
          %1790 = vmatpush1.bf16.msra.mxu0 0
          %1791 = vmatprep.subr.bf16.mxu0 0
          %1792 = vmatpush1.bf16.msra.mxu0 0
          %1793 = vmatprep.subr.bf16.mxu0 0
          %1794 = vmatpush1.bf16.msra.mxu0 0
          %1795 = vmatprep.subr.bf16.mxu0 0
          %1796 = vmatpush1.bf16.msra.mxu0 0
          %1797 = vmatprep.subr.bf16.mxu0 0
          %1798 = vmatpush1.bf16.msra.mxu0 0
          %1799 = vmatprep.subr.bf16.mxu0 0
          %1800 = vmatpush1.bf16.msra.mxu0 0
          %1801 = vmatprep.subr.bf16.mxu0 0
          %1802 = vmatpush1.bf16.msra.mxu0 0
          %1803 = vmatprep.subr.bf16.mxu0 0
          %1804 = vmatpush1.bf16.msra.mxu0 0
          %1805 = vmatprep.subr.bf16.mxu0 0
          %1806 = vmatpush1.bf16.msra.mxu0 0
          %1807 = vmatprep.subr.bf16.mxu0 0
          %1808 = vmatpush1.bf16.msra.mxu0 0
          %1809 = vmatprep.subr.bf16.mxu0 0
          %1810 = vmatpush1.bf16.msra.mxu0 0
          %1811 = vmatprep.subr.bf16.mxu0 0
          %1812 = vmatpush1.bf16.msra.mxu0 0
          %1813 = vmatprep.subr.bf16.mxu0 0
          %1814 = vmatpush1.bf16.msra.mxu0 0
          %1815 = vmatprep.subr.bf16.mxu0 0
          %1816 = vmatpush1.bf16.msra.mxu0 0
          %1817 = vmatprep.mubr.bf16.mxu0 0
          %1818 = vmatmul.mubr.bf16.gmra.mrb[0].mxu0 %v1783
          %v1819 = vpop.f32.mrb[0].mxu0
          %v1820 = vadd.f32 0.0, %v1819
          %v1821 = vpop.f32.mrb[0].mxu0
          %v1822 = vpop.f32.mrb[0].mxu0
          %v1823 = vpop.f32.mrb[0].mxu0
          %1824 = vdwg.mxu0
          %1825 = vxpose.xlu0.c.b16.start [1/8] %v1642, 128
          %1826 = vxpose.xlu0.c.b16.cont [2/8] 0, 128
          %1827 = vxpose.xlu0.c.b16.cont [3/8] 0, 128
          %1828 = vxpose.xlu0.c.b16.cont [4/8] 0, 128
          %1829 = vxpose.xlu0.c.b16.cont [5/8] 0, 128
          %1830 = vxpose.xlu0.c.b16.cont [6/8] 0, 128
          %1831 = vxpose.xlu0.c.b16.cont [7/8] 0, 128
          %1832 = vxpose.xlu0.c.b16.end [8/8] 0, 128
          %v1833 = vpop.trf.xlu0
          %v1834 = vpop.trf.xlu0
          %v1835 = vpop.trf.xlu0
          %v1836 = vpop.trf.xlu0
          %v1837 = vpop.trf.xlu0
          %v1838 = vpop.trf.xlu0
          %v1839 = vpop.trf.xlu0
          %v1840 = vpop.trf.xlu0
          %v1842 = vsel %vm1663, %v1833, 0
          %1844 = vmatprep.subr.bf16.mxu0 0
          %1845 = vmatpush1.bf16.msra.mxu0 %v850
          %1846 = vmatprep.subr.bf16.mxu0 0
          %1847 = vmatpush1.bf16.msra.mxu0 0
          %1848 = vmatprep.subr.bf16.mxu0 0
          %1849 = vmatpush1.bf16.msra.mxu0 0
          %1850 = vmatprep.subr.bf16.mxu0 0
          %1851 = vmatpush1.bf16.msra.mxu0 0
          %1852 = vmatprep.subr.bf16.mxu0 0
          %1853 = vmatpush1.bf16.msra.mxu0 0
          %1854 = vmatprep.subr.bf16.mxu0 0
          %1855 = vmatpush1.bf16.msra.mxu0 0
          %1856 = vmatprep.subr.bf16.mxu0 0
          %1857 = vmatpush1.bf16.msra.mxu0 0
          %1858 = vmatprep.subr.bf16.mxu0 0
          %1859 = vmatpush1.bf16.msra.mxu0 0
          %1860 = vmatprep.subr.bf16.mxu0 0
          %1861 = vmatpush1.bf16.msra.mxu0 0
          %1862 = vmatprep.subr.bf16.mxu0 0
          %1863 = vmatpush1.bf16.msra.mxu0 0
          %1864 = vmatprep.subr.bf16.mxu0 0
          %1865 = vmatpush1.bf16.msra.mxu0 0
          %1866 = vmatprep.subr.bf16.mxu0 0
          %1867 = vmatpush1.bf16.msra.mxu0 0
          %1868 = vmatprep.subr.bf16.mxu0 0
          %1869 = vmatpush1.bf16.msra.mxu0 0
          %1870 = vmatprep.subr.bf16.mxu0 0
          %1871 = vmatpush1.bf16.msra.mxu0 0
          %1872 = vmatprep.subr.bf16.mxu0 0
          %1873 = vmatpush1.bf16.msra.mxu0 0
          %1874 = vmatprep.subr.bf16.mxu0 0
          %1875 = vmatpush1.bf16.msra.mxu0 0
          %1876 = vmatprep.mubr.bf16.mxu0 0
          %1877 = vmatmul.mubr.bf16.gmra.mrb[0].mxu0 %v1842
          %v1878 = vpop.f32.mrb[0].mxu0
          %v1879 = vadd.f32 0.0, %v1878
          %v1880 = vpop.f32.mrb[0].mxu0
          %v1881 = vpop.f32.mrb[0].mxu0
          %v1882 = vpop.f32.mrb[0].mxu0
          %1883 = vdwg.mxu0
          %1884 = vxpose.xlu0.c.b16.start [1/8] %v1643, 128
          %1885 = vxpose.xlu0.c.b16.cont [2/8] 0, 128
          %1886 = vxpose.xlu0.c.b16.cont [3/8] 0, 128
          %1887 = vxpose.xlu0.c.b16.cont [4/8] 0, 128
          %1888 = vxpose.xlu0.c.b16.cont [5/8] 0, 128
          %1889 = vxpose.xlu0.c.b16.cont [6/8] 0, 128
          %1890 = vxpose.xlu0.c.b16.cont [7/8] 0, 128
          %1891 = vxpose.xlu0.c.b16.end [8/8] 0, 128
          %v1892 = vpop.trf.xlu0
          %v1893 = vpop.trf.xlu0
          %v1894 = vpop.trf.xlu0
          %v1895 = vpop.trf.xlu0
          %v1896 = vpop.trf.xlu0
          %v1897 = vpop.trf.xlu0
          %v1898 = vpop.trf.xlu0
          %v1899 = vpop.trf.xlu0
          %v1901 = vsel %vm1663, %v1892, 0
          %1903 = vmatprep.subr.bf16.mxu0 0
          %1904 = vmatpush1.bf16.msra.mxu0 %v851
          %1905 = vmatprep.subr.bf16.mxu0 0
          %1906 = vmatpush1.bf16.msra.mxu0 0
          %1907 = vmatprep.subr.bf16.mxu0 0
          %1908 = vmatpush1.bf16.msra.mxu0 0
          %1909 = vmatprep.subr.bf16.mxu0 0
          %1910 = vmatpush1.bf16.msra.mxu0 0
          %1911 = vmatprep.subr.bf16.mxu0 0
          %1912 = vmatpush1.bf16.msra.mxu0 0
          %1913 = vmatprep.subr.bf16.mxu0 0
          %1914 = vmatpush1.bf16.msra.mxu0 0
          %1915 = vmatprep.subr.bf16.mxu0 0
          %1916 = vmatpush1.bf16.msra.mxu0 0
          %1917 = vmatprep.subr.bf16.mxu0 0
          %1918 = vmatpush1.bf16.msra.mxu0 0
          %1919 = vmatprep.subr.bf16.mxu0 0
          %1920 = vmatpush1.bf16.msra.mxu0 0
          %1921 = vmatprep.subr.bf16.mxu0 0
          %1922 = vmatpush1.bf16.msra.mxu0 0
          %1923 = vmatprep.subr.bf16.mxu0 0
          %1924 = vmatpush1.bf16.msra.mxu0 0
          %1925 = vmatprep.subr.bf16.mxu0 0
          %1926 = vmatpush1.bf16.msra.mxu0 0
          %1927 = vmatprep.subr.bf16.mxu0 0
          %1928 = vmatpush1.bf16.msra.mxu0 0
          %1929 = vmatprep.subr.bf16.mxu0 0
          %1930 = vmatpush1.bf16.msra.mxu0 0
          %1931 = vmatprep.subr.bf16.mxu0 0
          %1932 = vmatpush1.bf16.msra.mxu0 0
          %1933 = vmatprep.subr.bf16.mxu0 0
          %1934 = vmatpush1.bf16.msra.mxu0 0
          %1935 = vmatprep.mubr.bf16.mxu0 0
          %1936 = vmatmul.mubr.bf16.gmra.mrb[0].mxu0 %v1901
          %v1937 = vpop.f32.mrb[0].mxu0
          %v1938 = vadd.f32 0.0, %v1937
          %v1939 = vpop.f32.mrb[0].mxu0
          %v1940 = vpop.f32.mrb[0].mxu0
          %v1941 = vpop.f32.mrb[0].mxu0
          %1942 = vdwg.mxu0
          %1943 = vxpose.xlu0.c.b16.start [1/8] %v1644, 128
          %1944 = vxpose.xlu0.c.b16.cont [2/8] 0, 128
          %1945 = vxpose.xlu0.c.b16.cont [3/8] 0, 128
          %1946 = vxpose.xlu0.c.b16.cont [4/8] 0, 128
          %1947 = vxpose.xlu0.c.b16.cont [5/8] 0, 128
          %1948 = vxpose.xlu0.c.b16.cont [6/8] 0, 128
          %1949 = vxpose.xlu0.c.b16.cont [7/8] 0, 128
          %1950 = vxpose.xlu0.c.b16.end [8/8] 0, 128
          %v1951 = vpop.trf.xlu0
          %v1952 = vpop.trf.xlu0
          %v1953 = vpop.trf.xlu0
          %v1954 = vpop.trf.xlu0
          %v1955 = vpop.trf.xlu0
          %v1956 = vpop.trf.xlu0
          %v1957 = vpop.trf.xlu0
          %v1958 = vpop.trf.xlu0
          %v1960 = vsel %vm1663, %v1951, 0
          %1962 = vmatprep.subr.bf16.mxu0 0
          %1963 = vmatpush1.bf16.msra.mxu0 %v852
          %1964 = vmatprep.subr.bf16.mxu0 0
          %1965 = vmatpush1.bf16.msra.mxu0 0
          %1966 = vmatprep.subr.bf16.mxu0 0
          %1967 = vmatpush1.bf16.msra.mxu0 0
          %1968 = vmatprep.subr.bf16.mxu0 0
          %1969 = vmatpush1.bf16.msra.mxu0 0
          %1970 = vmatprep.subr.bf16.mxu0 0
          %1971 = vmatpush1.bf16.msra.mxu0 0
          %1972 = vmatprep.subr.bf16.mxu0 0
          %1973 = vmatpush1.bf16.msra.mxu0 0
          %1974 = vmatprep.subr.bf16.mxu0 0
          %1975 = vmatpush1.bf16.msra.mxu0 0
          %1976 = vmatprep.subr.bf16.mxu0 0
          %1977 = vmatpush1.bf16.msra.mxu0 0
          %1978 = vmatprep.subr.bf16.mxu0 0
          %1979 = vmatpush1.bf16.msra.mxu0 0
          %1980 = vmatprep.subr.bf16.mxu0 0
          %1981 = vmatpush1.bf16.msra.mxu0 0
          %1982 = vmatprep.subr.bf16.mxu0 0
          %1983 = vmatpush1.bf16.msra.mxu0 0
          %1984 = vmatprep.subr.bf16.mxu0 0
          %1985 = vmatpush1.bf16.msra.mxu0 0
          %1986 = vmatprep.subr.bf16.mxu0 0
          %1987 = vmatpush1.bf16.msra.mxu0 0
          %1988 = vmatprep.subr.bf16.mxu0 0
          %1989 = vmatpush1.bf16.msra.mxu0 0
          %1990 = vmatprep.subr.bf16.mxu0 0
          %1991 = vmatpush1.bf16.msra.mxu0 0
          %1992 = vmatprep.subr.bf16.mxu0 0
          %1993 = vmatpush1.bf16.msra.mxu0 0
          %1994 = vmatprep.mubr.bf16.mxu0 0
          %1995 = vmatmul.mubr.bf16.gmra.mrb[0].mxu0 %v1960
          %v1996 = vpop.f32.mrb[0].mxu0
          %v1997 = vadd.f32 0.0, %v1996
          %v1998 = vpop.f32.mrb[0].mxu0
          %v1999 = vpop.f32.mrb[0].mxu0
          %v2000 = vpop.f32.mrb[0].mxu0
          %2001 = vdwg.mxu0
          %2002 = vxpose.xlu0.c.b16.start [1/8] %v1645, 128
          %2003 = vxpose.xlu0.c.b16.cont [2/8] 0, 128
          %2004 = vxpose.xlu0.c.b16.cont [3/8] 0, 128
          %2005 = vxpose.xlu0.c.b16.cont [4/8] 0, 128
          %2006 = vxpose.xlu0.c.b16.cont [5/8] 0, 128
          %2007 = vxpose.xlu0.c.b16.cont [6/8] 0, 128
          %2008 = vxpose.xlu0.c.b16.cont [7/8] 0, 128
          %2009 = vxpose.xlu0.c.b16.end [8/8] 0, 128
          %v2010 = vpop.trf.xlu0
          %v2011 = vpop.trf.xlu0
          %v2012 = vpop.trf.xlu0
          %v2013 = vpop.trf.xlu0
          %v2014 = vpop.trf.xlu0
          %v2015 = vpop.trf.xlu0
          %v2016 = vpop.trf.xlu0
          %v2017 = vpop.trf.xlu0
          %v2019 = vsel %vm1663, %v2010, 0
          %2021 = vmatprep.subr.bf16.mxu0 0
          %2022 = vmatpush1.bf16.msra.mxu0 %v853
          %2023 = vmatprep.subr.bf16.mxu0 0
          %2024 = vmatpush1.bf16.msra.mxu0 0
          %2025 = vmatprep.subr.bf16.mxu0 0
          %2026 = vmatpush1.bf16.msra.mxu0 0
          %2027 = vmatprep.subr.bf16.mxu0 0
          %2028 = vmatpush1.bf16.msra.mxu0 0
          %2029 = vmatprep.subr.bf16.mxu0 0
          %2030 = vmatpush1.bf16.msra.mxu0 0
          %2031 = vmatprep.subr.bf16.mxu0 0
          %2032 = vmatpush1.bf16.msra.mxu0 0
          %2033 = vmatprep.subr.bf16.mxu0 0
          %2034 = vmatpush1.bf16.msra.mxu0 0
          %2035 = vmatprep.subr.bf16.mxu0 0
          %2036 = vmatpush1.bf16.msra.mxu0 0
          %2037 = vmatprep.subr.bf16.mxu0 0
          %2038 = vmatpush1.bf16.msra.mxu0 0
          %2039 = vmatprep.subr.bf16.mxu0 0
          %2040 = vmatpush1.bf16.msra.mxu0 0
          %2041 = vmatprep.subr.bf16.mxu0 0
          %2042 = vmatpush1.bf16.msra.mxu0 0
          %2043 = vmatprep.subr.bf16.mxu0 0
          %2044 = vmatpush1.bf16.msra.mxu0 0
          %2045 = vmatprep.subr.bf16.mxu0 0
          %2046 = vmatpush1.bf16.msra.mxu0 0
          %2047 = vmatprep.subr.bf16.mxu0 0
          %2048 = vmatpush1.bf16.msra.mxu0 0
          %2049 = vmatprep.subr.bf16.mxu0 0
          %2050 = vmatpush1.bf16.msra.mxu0 0
          %2051 = vmatprep.subr.bf16.mxu0 0
          %2052 = vmatpush1.bf16.msra.mxu0 0
          %2053 = vmatprep.mubr.bf16.mxu0 0
          %2054 = vmatmul.mubr.bf16.gmra.mrb[0].mxu0 %v2019
          %v2055 = vpop.f32.mrb[0].mxu0
          %v2056 = vadd.f32 0.0, %v2055
          %v2057 = vpop.f32.mrb[0].mxu0
          %v2058 = vpop.f32.mrb[0].mxu0
          %v2059 = vpop.f32.mrb[0].mxu0
          %2060 = vdwg.mxu0
          %2061 = vxpose.xlu0.c.b16.start [1/8] %v1646, 128
          %2062 = vxpose.xlu0.c.b16.cont [2/8] 0, 128
          %2063 = vxpose.xlu0.c.b16.cont [3/8] 0, 128
          %2064 = vxpose.xlu0.c.b16.cont [4/8] 0, 128
          %2065 = vxpose.xlu0.c.b16.cont [5/8] 0, 128
          %2066 = vxpose.xlu0.c.b16.cont [6/8] 0, 128
          %2067 = vxpose.xlu0.c.b16.cont [7/8] 0, 128
          %2068 = vxpose.xlu0.c.b16.end [8/8] 0, 128
          %v2069 = vpop.trf.xlu0
          %v2070 = vpop.trf.xlu0
          %v2071 = vpop.trf.xlu0
          %v2072 = vpop.trf.xlu0
          %v2073 = vpop.trf.xlu0
          %v2074 = vpop.trf.xlu0
          %v2075 = vpop.trf.xlu0
          %v2076 = vpop.trf.xlu0
          %v2078 = vsel %vm1663, %v2069, 0
          %2080 = vmatprep.subr.bf16.mxu0 0
          %2081 = vmatpush1.bf16.msra.mxu0 %v854
          %2082 = vmatprep.subr.bf16.mxu0 0
          %2083 = vmatpush1.bf16.msra.mxu0 0
          %2084 = vmatprep.subr.bf16.mxu0 0
          %2085 = vmatpush1.bf16.msra.mxu0 0
          %2086 = vmatprep.subr.bf16.mxu0 0
          %2087 = vmatpush1.bf16.msra.mxu0 0
          %2088 = vmatprep.subr.bf16.mxu0 0
          %2089 = vmatpush1.bf16.msra.mxu0 0
          %2090 = vmatprep.subr.bf16.mxu0 0
          %2091 = vmatpush1.bf16.msra.mxu0 0
          %2092 = vmatprep.subr.bf16.mxu0 0
          %2093 = vmatpush1.bf16.msra.mxu0 0
          %2094 = vmatprep.subr.bf16.mxu0 0
          %2095 = vmatpush1.bf16.msra.mxu0 0
          %2096 = vmatprep.subr.bf16.mxu0 0
          %2097 = vmatpush1.bf16.msra.mxu0 0
          %2098 = vmatprep.subr.bf16.mxu0 0
          %2099 = vmatpush1.bf16.msra.mxu0 0
          %2100 = vmatprep.subr.bf16.mxu0 0
          %2101 = vmatpush1.bf16.msra.mxu0 0
          %2102 = vmatprep.subr.bf16.mxu0 0
          %2103 = vmatpush1.bf16.msra.mxu0 0
          %2104 = vmatprep.subr.bf16.mxu0 0
          %2105 = vmatpush1.bf16.msra.mxu0 0
          %2106 = vmatprep.subr.bf16.mxu0 0
          %2107 = vmatpush1.bf16.msra.mxu0 0
          %2108 = vmatprep.subr.bf16.mxu0 0
          %2109 = vmatpush1.bf16.msra.mxu0 0
          %2110 = vmatprep.subr.bf16.mxu0 0
          %2111 = vmatpush1.bf16.msra.mxu0 0
          %2112 = vmatprep.mubr.bf16.mxu0 0
          %2113 = vmatmul.mubr.bf16.gmra.mrb[0].mxu0 %v2078
          %v2114 = vpop.f32.mrb[0].mxu0
          %v2115 = vadd.f32 0.0, %v2114
          %v2116 = vpop.f32.mrb[0].mxu0
          %v2117 = vpop.f32.mrb[0].mxu0
          %v2118 = vpop.f32.mrb[0].mxu0
          %2119 = vdwg.mxu0
          %v2120 = vld [vmem:[#allocation13] sm:$0xf]
          %v2121 = vld [vmem:[#allocation13 + $0x4] sm:$0xf]
          %v2122 = vld [vmem:[#allocation13 + $0x8] sm:$0xf]
          %v2123 = vld [vmem:[#allocation13 + $0xc] sm:$0xf]
          %v2124 = vld [vmem:[#allocation13 + $0x10] sm:$0xf]
          %v2125 = vld [vmem:[#allocation13 + $0x14] sm:$0xf]
          %v2126 = vld [vmem:[#allocation13 + $0x18] sm:$0xf]
          %v2127 = vld [vmem:[#allocation13 + $0x1c] sm:$0xf]
          %v2128 = vld [vmem:[#allocation13 + $0x20] sm:$0xf]
          %v2129 = vld [vmem:[#allocation13 + $0x24] sm:$0xf]
          %v2130 = vld [vmem:[#allocation13 + $0x28] sm:$0xf]
          %v2131 = vld [vmem:[#allocation13 + $0x2c] sm:$0xf]
          %v2132 = vld [vmem:[#allocation13 + $0x30] sm:$0xf]
          %v2133 = vld [vmem:[#allocation13 + $0x34] sm:$0xf]
          %v2134 = vld [vmem:[#allocation13 + $0x38] sm:$0xf]
          %v2135 = vld [vmem:[#allocation13 + $0x3c] sm:$0xf]
          %v2136 = vld [vmem:[%s11] sm:$0x1]
          %v2138 = vlaneseq
          %v2139 = vshrl.u32 %v2138, 7
          %v2140 = vsub.s32 0, %v2139
          %v2141 = vrot.slane %v2136, %v2140
          %v2159 = vunpack.c.l.b16 %v2120
          %v2160 = vunpack.c.l.b16 %v2121
          %v2161 = vunpack.c.l.b16 %v2122
          %v2162 = vunpack.c.l.b16 %v2123
          %v2163 = vunpack.c.l.b16 %v2124
          %v2164 = vunpack.c.l.b16 %v2125
          %v2165 = vunpack.c.l.b16 %v2126
          %v2166 = vunpack.c.l.b16 %v2127
          %v2167 = vunpack.c.l.b16 %v2128
          %v2168 = vunpack.c.l.b16 %v2129
          %v2169 = vunpack.c.l.b16 %v2130
          %v2170 = vunpack.c.l.b16 %v2131
          %v2171 = vunpack.c.l.b16 %v2132
          %v2172 = vunpack.c.l.b16 %v2133
          %v2173 = vunpack.c.l.b16 %v2134
          %v2174 = vunpack.c.l.b16 %v2135
          %v2175 = vpack.c.b16 %v2160, %v2159
          %v2176 = vpack.c.b16 %v2162, %v2161
          %v2177 = vpack.c.b16 %v2164, %v2163
          %v2178 = vpack.c.b16 %v2166, %v2165
          %v2179 = vpack.c.b16 %v2168, %v2167
          %v2180 = vpack.c.b16 %v2170, %v2169
          %v2181 = vpack.c.b16 %v2172, %v2171
          %v2182 = vpack.c.b16 %v2174, %v2173
          %2191 = vmatprep.subr.bf16.mxu0 0
          %2192 = vmatpush1.bf16.msra.mxu0 %v2175
          %2193 = vmatprep.subr.bf16.mxu0 0
          %2194 = vmatpush1.bf16.msra.mxu0 %v2176
          %2195 = vmatprep.subr.bf16.mxu0 0
          %2196 = vmatpush1.bf16.msra.mxu0 %v2177
          %2197 = vmatprep.subr.bf16.mxu0 0
          %2198 = vmatpush1.bf16.msra.mxu0 %v2178
          %2199 = vmatprep.subr.bf16.mxu0 0
          %2200 = vmatpush1.bf16.msra.mxu0 %v2179
          %2201 = vmatprep.subr.bf16.mxu0 0
          %2202 = vmatpush1.bf16.msra.mxu0 %v2180
          %2203 = vmatprep.subr.bf16.mxu0 0
          %2204 = vmatpush1.bf16.msra.mxu0 %v2181
          %2205 = vmatprep.subr.bf16.mxu0 0
          %2206 = vmatpush1.bf16.msra.mxu0 %v2182
          %2207 = vmatprep.subr.bf16.mxu0 0
          %2208 = vmatpush1.bf16.msra.mxu0 0
          %2209 = vmatprep.subr.bf16.mxu0 0
          %2210 = vmatpush1.bf16.msra.mxu0 0
          %2211 = vmatprep.subr.bf16.mxu0 0
          %2212 = vmatpush1.bf16.msra.mxu0 0
          %2213 = vmatprep.subr.bf16.mxu0 0
          %2214 = vmatpush1.bf16.msra.mxu0 0
          %2215 = vmatprep.subr.bf16.mxu0 0
          %2216 = vmatpush1.bf16.msra.mxu0 0
          %2217 = vmatprep.subr.bf16.mxu0 0
          %2218 = vmatpush1.bf16.msra.mxu0 0
          %2219 = vmatprep.subr.bf16.mxu0 0
          %2220 = vmatpush1.bf16.msra.mxu0 0
          %2221 = vmatprep.subr.bf16.mxu0 0
          %2222 = vmatpush1.bf16.msra.mxu0 0
          %2223 = vmatprep.mubr.bf16.mxu0 0
          %2224 = vmatmul.mubr.bf16.gmra.mrb[0].mxu0 %v774
          %v2225 = vpop.f32.mrb[0].mxu0
          %v2226 = vadd.f32 %v2141, %v2225
          %v2227 = vpop.f32.mrb[0].mxu0
          %v2228 = vpop.f32.mrb[0].mxu0
          %v2229 = vpop.f32.mrb[0].mxu0
          %2230 = vdwg.mxu0
          %v2231 = vmax.f32 %v2226, 0.0
          %v2232 = vpack.c.bf16 %v1702, %v1702
          %v2233 = vpack.c.bf16 %v1761, %v1761
          %v2234 = vpack.c.bf16 %v1820, %v1820
          %v2235 = vpack.c.bf16 %v1879, %v1879
          %v2236 = vpack.c.bf16 %v1938, %v1938
          %v2237 = vpack.c.bf16 %v1997, %v1997
          %v2238 = vpack.c.bf16 %v2056, %v2056
          %v2239 = vpack.c.bf16 %v2115, %v2115
          %v2240 = vld [vmem:[#allocation15] sm:$0xf]
          %v2241 = vld [vmem:[#allocation15 + $0x4] sm:$0xf]
          %v2242 = vld [vmem:[#allocation15 + $0x8] sm:$0xf]
          %v2243 = vld [vmem:[#allocation15 + $0xc] sm:$0xf]
          %v2244 = vld [vmem:[#allocation15 + $0x10] sm:$0xf]
          %v2245 = vld [vmem:[#allocation15 + $0x14] sm:$0xf]
          %v2246 = vld [vmem:[#allocation15 + $0x18] sm:$0xf]
          %v2247 = vld [vmem:[#allocation15 + $0x1c] sm:$0xf]
          %v2248 = vld [vmem:[#allocation15 + $0x20] sm:$0xf]
          %v2249 = vld [vmem:[#allocation15 + $0x24] sm:$0xf]
          %v2250 = vld [vmem:[#allocation15 + $0x28] sm:$0xf]
          %v2251 = vld [vmem:[#allocation15 + $0x2c] sm:$0xf]
          %v2252 = vld [vmem:[#allocation15 + $0x30] sm:$0xf]
          %v2253 = vld [vmem:[#allocation15 + $0x34] sm:$0xf]
          %v2254 = vld [vmem:[#allocation15 + $0x38] sm:$0xf]
          %v2255 = vld [vmem:[#allocation15 + $0x3c] sm:$0xf]
          %v2256 = vld [vmem:[#allocation16] sm:$0x1]
          %v2258 = vlaneseq
          %v2259 = vshrl.u32 %v2258, 7
          %v2260 = vsub.s32 0, %v2259
          %v2261 = vrot.slane %v2256, %v2260
          %v2271 = vunpack.c.l.b16 %v2232
          %v2272 = vunpack.c.l.b16 %v2233
          %v2273 = vunpack.c.l.b16 %v2234
          %v2274 = vunpack.c.l.b16 %v2235
          %v2275 = vunpack.c.l.b16 %v2236
          %v2276 = vunpack.c.l.b16 %v2237
          %v2277 = vunpack.c.l.b16 %v2238
          %v2278 = vunpack.c.l.b16 %v2239
          %v2279 = vrot.slane %v2272, 7
          %vm2280 = vcmask 1041409
          %v2281 = vsel %vm2280, %v2279, %v2271
          %v2282 = vrot.slane %v2273, 6
          %vm2283 = vcmask 1042434
          %v2284 = vsel %vm2283, %v2282, %v2281
          %v2285 = vrot.slane %v2274, 5
          %vm2286 = vcmask 1043459
          %v2287 = vsel %vm2286, %v2285, %v2284
          %v2288 = vrot.slane %v2275, 4
          %vm2289 = vcmask 1044484
          %v2290 = vsel %vm2289, %v2288, %v2287
          %v2291 = vrot.slane %v2276, 3
          %vm2292 = vcmask 1045509
          %v2293 = vsel %vm2292, %v2291, %v2290
          %v2294 = vrot.slane %v2277, 2
          %vm2295 = vcmask 1046534
          %v2296 = vsel %vm2295, %v2294, %v2293
          %v2297 = vrot.slane %v2278, 1
          %vm2298 = vcmask 1047559
          %v2299 = vsel %vm2298, %v2297, %v2296
          %v2300 = vpack.c.b16 %v2299, %v2299
          %v2318 = vunpack.c.l.b16 %v2240
          %v2319 = vunpack.c.l.b16 %v2241
          %v2320 = vunpack.c.l.b16 %v2242
          %v2321 = vunpack.c.l.b16 %v2243
          %v2322 = vunpack.c.l.b16 %v2244
          %v2323 = vunpack.c.l.b16 %v2245
          %v2324 = vunpack.c.l.b16 %v2246
          %v2325 = vunpack.c.l.b16 %v2247
          %v2326 = vunpack.c.l.b16 %v2248
          %v2327 = vunpack.c.l.b16 %v2249
          %v2328 = vunpack.c.l.b16 %v2250
          %v2329 = vunpack.c.l.b16 %v2251
          %v2330 = vunpack.c.l.b16 %v2252
          %v2331 = vunpack.c.l.b16 %v2253
          %v2332 = vunpack.c.l.b16 %v2254
          %v2333 = vunpack.c.l.b16 %v2255
          %v2334 = vpack.c.b16 %v2319, %v2318
          %v2335 = vpack.c.b16 %v2321, %v2320
          %v2336 = vpack.c.b16 %v2323, %v2322
          %v2337 = vpack.c.b16 %v2325, %v2324
          %v2338 = vpack.c.b16 %v2327, %v2326
          %v2339 = vpack.c.b16 %v2329, %v2328
          %v2340 = vpack.c.b16 %v2331, %v2330
          %v2341 = vpack.c.b16 %v2333, %v2332
          %2350 = vmatprep.subr.bf16.mxu0 0
          %2351 = vmatpush1.bf16.msra.mxu0 %v2334
          %2352 = vmatprep.subr.bf16.mxu0 0
          %2353 = vmatpush1.bf16.msra.mxu0 %v2335
          %2354 = vmatprep.subr.bf16.mxu0 0
          %2355 = vmatpush1.bf16.msra.mxu0 %v2336
          %2356 = vmatprep.subr.bf16.mxu0 0
          %2357 = vmatpush1.bf16.msra.mxu0 %v2337
          %2358 = vmatprep.subr.bf16.mxu0 0
          %2359 = vmatpush1.bf16.msra.mxu0 %v2338
          %2360 = vmatprep.subr.bf16.mxu0 0
          %2361 = vmatpush1.bf16.msra.mxu0 %v2339
          %2362 = vmatprep.subr.bf16.mxu0 0
          %2363 = vmatpush1.bf16.msra.mxu0 %v2340
          %2364 = vmatprep.subr.bf16.mxu0 0
          %2365 = vmatpush1.bf16.msra.mxu0 %v2341
          %2366 = vmatprep.subr.bf16.mxu0 0
          %2367 = vmatpush1.bf16.msra.mxu0 0
          %2368 = vmatprep.subr.bf16.mxu0 0
          %2369 = vmatpush1.bf16.msra.mxu0 0
          %2370 = vmatprep.subr.bf16.mxu0 0
          %2371 = vmatpush1.bf16.msra.mxu0 0
          %2372 = vmatprep.subr.bf16.mxu0 0
          %2373 = vmatpush1.bf16.msra.mxu0 0
          %2374 = vmatprep.subr.bf16.mxu0 0
          %2375 = vmatpush1.bf16.msra.mxu0 0
          %2376 = vmatprep.subr.bf16.mxu0 0
          %2377 = vmatpush1.bf16.msra.mxu0 0
          %2378 = vmatprep.subr.bf16.mxu0 0
          %2379 = vmatpush1.bf16.msra.mxu0 0
          %2380 = vmatprep.subr.bf16.mxu0 0
          %2381 = vmatpush1.bf16.msra.mxu0 0
          %2382 = vmatprep.mubr.bf16.mxu0 0
          %2383 = vmatmul.mubr.bf16.gmra.mrb[0].mxu0 %v2300
          %v2384 = vpop.f32.mrb[0].mxu0
          %v2385 = vadd.f32 %v2261, %v2384
          %v2386 = vpop.f32.mrb[0].mxu0
          %v2387 = vpop.f32.mrb[0].mxu0
          %v2388 = vpop.f32.mrb[0].mxu0
          %2389 = vdwg.mxu0
          %v2390 = vmax.f32 %v2385, 0.0
          %v2391 = vmul.f32 %v2231, %v2390
          %v2392 = vpack.c.bf16 %v2391, %v2391
          %v2393 = vld [vmem:[%s14] sm:$0xf]
          %v2394 = vld [vmem:[%s14 + $0x4] sm:$0xf]
          %v2395 = vld [vmem:[%s14 + $0x8] sm:$0xf]
          %v2396 = vld [vmem:[%s14 + $0xc] sm:$0xf]
          %v2397 = vld [vmem:[%s14 + $0x10] sm:$0xf]
          %v2398 = vld [vmem:[%s14 + $0x14] sm:$0xf]
          %v2399 = vld [vmem:[%s14 + $0x18] sm:$0xf]
          %v2400 = vld [vmem:[%s14 + $0x1c] sm:$0xf]
          %v2401 = vld [vmem:[%s14 + $0x20] sm:$0xf]
          %v2402 = vld [vmem:[%s14 + $0x24] sm:$0xf]
          %v2403 = vld [vmem:[%s14 + $0x28] sm:$0xf]
          %v2404 = vld [vmem:[%s14 + $0x2c] sm:$0xf]
          %v2405 = vld [vmem:[%s14 + $0x30] sm:$0xf]
          %v2406 = vld [vmem:[%s14 + $0x34] sm:$0xf]
          %v2407 = vld [vmem:[%s14 + $0x38] sm:$0xf]
          %v2408 = vld [vmem:[%s14 + $0x3c] sm:$0xf]
          %v2409 = vld [vmem:[%s15] sm:$0x1]
          %v2411 = vlaneseq
          %v2412 = vshrl.u32 %v2411, 7
          %v2413 = vsub.s32 0, %v2412
          %v2414 = vrot.slane %v2409, %v2413
          %v2432 = vunpack.c.l.b16 %v2393
          %v2433 = vunpack.c.l.b16 %v2394
          %v2434 = vunpack.c.l.b16 %v2395
          %v2435 = vunpack.c.l.b16 %v2396
          %v2436 = vunpack.c.l.b16 %v2397
          %v2437 = vunpack.c.l.b16 %v2398
          %v2438 = vunpack.c.l.b16 %v2399
          %v2439 = vunpack.c.l.b16 %v2400
          %v2440 = vunpack.c.l.b16 %v2401
          %v2441 = vunpack.c.l.b16 %v2402
          %v2442 = vunpack.c.l.b16 %v2403
          %v2443 = vunpack.c.l.b16 %v2404
          %v2444 = vunpack.c.l.b16 %v2405
          %v2445 = vunpack.c.l.b16 %v2406
          %v2446 = vunpack.c.l.b16 %v2407
          %v2447 = vunpack.c.l.b16 %v2408
          %v2448 = vpack.c.b16 %v2433, %v2432
          %v2449 = vpack.c.b16 %v2435, %v2434
          %v2450 = vpack.c.b16 %v2437, %v2436
          %v2451 = vpack.c.b16 %v2439, %v2438
          %v2452 = vpack.c.b16 %v2441, %v2440
          %v2453 = vpack.c.b16 %v2443, %v2442
          %v2454 = vpack.c.b16 %v2445, %v2444
          %v2455 = vpack.c.b16 %v2447, %v2446
          %2464 = vmatprep.subr.bf16.mxu0 0
          %2465 = vmatpush1.bf16.msra.mxu0 %v2448
          %2466 = vmatprep.subr.bf16.mxu0 0
          %2467 = vmatpush1.bf16.msra.mxu0 %v2449
          %2468 = vmatprep.subr.bf16.mxu0 0
          %2469 = vmatpush1.bf16.msra.mxu0 %v2450
          %2470 = vmatprep.subr.bf16.mxu0 0
          %2471 = vmatpush1.bf16.msra.mxu0 %v2451
          %2472 = vmatprep.subr.bf16.mxu0 0
          %2473 = vmatpush1.bf16.msra.mxu0 %v2452
          %2474 = vmatprep.subr.bf16.mxu0 0
          %2475 = vmatpush1.bf16.msra.mxu0 %v2453
          %2476 = vmatprep.subr.bf16.mxu0 0
          %2477 = vmatpush1.bf16.msra.mxu0 %v2454
          %2478 = vmatprep.subr.bf16.mxu0 0
          %2479 = vmatpush1.bf16.msra.mxu0 %v2455
          %2480 = vmatprep.subr.bf16.mxu0 0
          %2481 = vmatpush1.bf16.msra.mxu0 0
          %2482 = vmatprep.subr.bf16.mxu0 0
          %2483 = vmatpush1.bf16.msra.mxu0 0
          %2484 = vmatprep.subr.bf16.mxu0 0
          %2485 = vmatpush1.bf16.msra.mxu0 0
          %2486 = vmatprep.subr.bf16.mxu0 0
          %2487 = vmatpush1.bf16.msra.mxu0 0
          %2488 = vmatprep.subr.bf16.mxu0 0
          %2489 = vmatpush1.bf16.msra.mxu0 0
          %2490 = vmatprep.subr.bf16.mxu0 0
          %2491 = vmatpush1.bf16.msra.mxu0 0
          %2492 = vmatprep.subr.bf16.mxu0 0
          %2493 = vmatpush1.bf16.msra.mxu0 0
          %2494 = vmatprep.subr.bf16.mxu0 0
          %2495 = vmatpush1.bf16.msra.mxu0 0
          %2496 = vmatprep.mubr.bf16.mxu0 0
          %2497 = vmatmul.mubr.bf16.gmra.mrb[0].mxu0 %v2392
          %v2498 = vpop.f32.mrb[0].mxu0
          %v2499 = vadd.f32 %v2414, %v2498
          %v2500 = vpop.f32.mrb[0].mxu0
          %v2501 = vpop.f32.mrb[0].mxu0
          %v2502 = vpop.f32.mrb[0].mxu0
          %2503 = vdwg.mxu0
          %v2504 = vmax.f32 %v2499, 0.0
          %v2505 = vpack.c.bf16 %v2504, %v2504
          %2506 = vst [vmem:[#allocation2] sm:$0xf] %v2505
        $region132: #{tpu_custom_call.1} parent=91 // pred_fallthru
          _
        %v2507 = vld [vmem:[#allocation2] sm:$0xf]
        %v2508 = vld [vmem:[#allocation18] sm:$0xff]
        %v2509 = vld [vmem:[#allocation18 + $0x8] sm:$0xff]
        %v2510 = vld [vmem:[#allocation18 + $0x10] sm:$0xff]
        %v2511 = vld [vmem:[#allocation18 + $0x18] sm:$0xff]
        %v2512 = vld [vmem:[#allocation18 + $0x20] sm:$0xff]
        %v2513 = vld [vmem:[#allocation18 + $0x28] sm:$0xff]
        %v2514 = vld [vmem:[#allocation18 + $0x30] sm:$0xff]
        %v2515 = vld [vmem:[#allocation18 + $0x38] sm:$0xff]
        %v2516 = vld [vmem:[#allocation18 + $0x40] sm:$0xff]
        %v2517 = vld [vmem:[#allocation18 + $0x48] sm:$0xff]
        %v2518 = vld [vmem:[#allocation18 + $0x50] sm:$0xff]
        %v2519 = vld [vmem:[#allocation18 + $0x58] sm:$0xff]
        %v2520 = vld [vmem:[#allocation18 + $0x60] sm:$0xff]
        %v2521 = vld [vmem:[#allocation18 + $0x68] sm:$0xff]
        %v2522 = vld [vmem:[#allocation18 + $0x70] sm:$0xff]
        %v2523 = vld [vmem:[#allocation18 + $0x78] sm:$0xff]
        %v2524 = vld [vmem:[%s17] sm:$0x3]
        %v2526 = vlaneseq
        %v2527 = vshrl.u32 %v2526, 7
        %v2528 = vsub.s32 0, %v2527
        %v2529 = vrot.slane %v2524, %v2528
        %v2530 = vlaneseq
        %v2531 = vshrl.u32 %v2530, 7
        %v2532 = vsub.s32 1, %v2531
        %v2533 = vrot.slane %v2524, %v2532
        %v2552 = vunpack.c.l.b16 %v2508
        %v2553 = vunpack.c.h.b16 %v2508
        %v2554 = vunpack.c.l.b16 %v2509
        %v2555 = vunpack.c.h.b16 %v2509
        %v2556 = vunpack.c.l.b16 %v2510
        %v2557 = vunpack.c.h.b16 %v2510
        %v2558 = vunpack.c.l.b16 %v2511
        %v2559 = vunpack.c.h.b16 %v2511
        %v2560 = vunpack.c.l.b16 %v2512
        %v2561 = vunpack.c.h.b16 %v2512
        %v2562 = vunpack.c.l.b16 %v2513
        %v2563 = vunpack.c.h.b16 %v2513
        %v2564 = vunpack.c.l.b16 %v2514
        %v2565 = vunpack.c.h.b16 %v2514
        %v2566 = vunpack.c.l.b16 %v2515
        %v2567 = vunpack.c.h.b16 %v2515
        %v2568 = vunpack.c.l.b16 %v2516
        %v2569 = vunpack.c.h.b16 %v2516
        %v2570 = vunpack.c.l.b16 %v2517
        %v2571 = vunpack.c.h.b16 %v2517
        %v2572 = vunpack.c.l.b16 %v2518
        %v2573 = vunpack.c.h.b16 %v2518
        %v2574 = vunpack.c.l.b16 %v2519
        %v2575 = vunpack.c.h.b16 %v2519
        %v2576 = vunpack.c.l.b16 %v2520
        %v2577 = vunpack.c.h.b16 %v2520
        %v2578 = vunpack.c.l.b16 %v2521
        %v2579 = vunpack.c.h.b16 %v2521
        %v2580 = vunpack.c.l.b16 %v2522
        %v2581 = vunpack.c.h.b16 %v2522
        %v2582 = vunpack.c.l.b16 %v2523
        %v2583 = vunpack.c.h.b16 %v2523
        %v2584 = vpack.c.b16 %v2554, %v2552
        %v2585 = vpack.c.b16 %v2555, %v2553
        %v2586 = vpack.c.b16 %v2558, %v2556
        %v2587 = vpack.c.b16 %v2559, %v2557
        %v2588 = vpack.c.b16 %v2562, %v2560
        %v2589 = vpack.c.b16 %v2563, %v2561
        %v2590 = vpack.c.b16 %v2566, %v2564
        %v2591 = vpack.c.b16 %v2567, %v2565
        %v2592 = vpack.c.b16 %v2570, %v2568
        %v2593 = vpack.c.b16 %v2571, %v2569
        %v2594 = vpack.c.b16 %v2574, %v2572
        %v2595 = vpack.c.b16 %v2575, %v2573
        %v2596 = vpack.c.b16 %v2578, %v2576
        %v2597 = vpack.c.b16 %v2579, %v2577
        %v2598 = vpack.c.b16 %v2582, %v2580
        %v2599 = vpack.c.b16 %v2583, %v2581
        %2616 = vmatprep.subr.bf16.mxu0 %v2585
        %2617 = vmatpush1.bf16.msra.mxu0 %v2584
        %2618 = vmatprep.subr.bf16.mxu0 %v2587
        %2619 = vmatpush1.bf16.msra.mxu0 %v2586
        %2620 = vmatprep.subr.bf16.mxu0 %v2589
        %2621 = vmatpush1.bf16.msra.mxu0 %v2588
        %2622 = vmatprep.subr.bf16.mxu0 %v2591
        %2623 = vmatpush1.bf16.msra.mxu0 %v2590
        %2624 = vmatprep.subr.bf16.mxu0 %v2593
        %2625 = vmatpush1.bf16.msra.mxu0 %v2592
        %2626 = vmatprep.subr.bf16.mxu0 %v2595
        %2627 = vmatpush1.bf16.msra.mxu0 %v2594
        %2628 = vmatprep.subr.bf16.mxu0 %v2597
        %2629 = vmatpush1.bf16.msra.mxu0 %v2596
        %2630 = vmatprep.subr.bf16.mxu0 %v2599
        %2631 = vmatpush1.bf16.msra.mxu0 %v2598
        %2632 = vmatprep.subr.bf16.mxu0 0
        %2633 = vmatpush1.bf16.msra.mxu0 0
        %2634 = vmatprep.subr.bf16.mxu0 0
        %2635 = vmatpush1.bf16.msra.mxu0 0
        %2636 = vmatprep.subr.bf16.mxu0 0
        %2637 = vmatpush1.bf16.msra.mxu0 0
        %2638 = vmatprep.subr.bf16.mxu0 0
        %2639 = vmatpush1.bf16.msra.mxu0 0
        %2640 = vmatprep.subr.bf16.mxu0 0
        %2641 = vmatpush1.bf16.msra.mxu0 0
        %2642 = vmatprep.subr.bf16.mxu0 0
        %2643 = vmatpush1.bf16.msra.mxu0 0
        %2644 = vmatprep.subr.bf16.mxu0 0
        %2645 = vmatpush1.bf16.msra.mxu0 0
        %2646 = vmatprep.subr.bf16.mxu0 0
        %2647 = vmatpush1.bf16.msra.mxu0 0
        %2648 = vmatprep.mubr.bf16.mxu0 0
        %2649 = vmatmul.mubr.bf16.gmra.mrb[0].mxu0 %v2507
        %v2650 = vpop.f32.mrb[0].mxu0
        %v2651 = vadd.f32 %v2529, %v2650
        %v2652 = vpop.f32.mrb[0].mxu0
        %v2653 = vadd.f32 %v2533, %v2652
        %v2654 = vpop.f32.mrb[0].mxu0
        %v2655 = vpop.f32.mrb[0].mxu0
        %2656 = vdwg.mxu0
        %2657 = vst [vmem:[%s765] sm:$0xff] %v2651
        %2658 = vst [vmem:[%s765 + $0x8] sm:$0xff] %v2653
        %s2659 = sand.u32 %s457, 1
        %s2660 = scalar_lea.sflag [#allocation6], %s2659
        %s2661 = sand.u32 %s457, 1
        %s2662 = smul.addr %s2661, 16
        %s2663 = scalar_lea.vmem [#allocation19], %s2662
        // Predicated region
        $region133: #{tpu_custom_call.1} parent=91 // pred_check
          %p2664 = pneg %p467
        $region134: #{tpu_custom_call.1} parent=91 // pred_check_branch
          %2666 = sbr.rel (%p2664) target = $region136
        $region135: #{tpu_custom_call.1} parent=91 // pred_region
          %s2667 = smul.u32 2, %s47
          %s2669 = ssub.s32 256, 256
          %2670 = vsyncadd %s2660, %s2669
          %s2671 = smul.addr %s46, 2
          %s2672 = sadd.s32 %s2667, %s2671
          %s2673 = smul.addr %s2672, 128
          %s2674 = scalar_lea.hbm %s18, %s2673
          %s2676 = sshll.u32 %s2663, 4
          %s2677 = int_to_ptr.vmem [resolvable:$true] %s2676
          %2679 = dma.vmem_to_hbm [thread:$0]  %s2677, 256, %s2674, %s2660
        $region136: #{tpu_custom_call.1} parent=91 // pred_fallthru
          _
      $region92: #{tpu_custom_call.1} parent=5 // pred_fallthru
        _
      %p2680 = scmp.le.s32.totalorder 2, %s37
      // Predicated region
      $region137: #{tpu_custom_call.1} parent=5 // pred_check
        %p2681 = pneg %p2680
      $region138: #{tpu_custom_call.1} parent=5 // pred_check_branch
        %2683 = sbr.rel (%p2681) target = $region140
      $region139: #{tpu_custom_call.1} parent=5 // pred_region
        %s2684 = ssub.s32 %s37, 2
        // Predicated region
        $region141: #{tpu_custom_call.1} parent=139 // pred_check
          %p2685 = pneg %p473
        $region142: #{tpu_custom_call.1} parent=139 // pred_check_branch
          %2687 = sbr.rel (%p2685) target = $region144
        $region143: #{tpu_custom_call.1} parent=139 // pred_region
          %s2688 = sand.u32 %s458, 1
          %s2689 = scalar_lea.sflag [#allocation6], %s2688
          %s2690 = sand.u32 %s458, 1
          %s2691 = smul.addr %s2690, 16
          %s2692 = scalar_lea.vmem [#allocation19], %s2691
          %2693 = dma.done %s2689, 256
        $region144: #{tpu_custom_call.1} parent=139 // pred_fallthru
          _
      $region140: #{tpu_custom_call.1} parent=5 // pred_fallthru
        _
    $region6: #{tpu_custom_call.1} parent=1 // loop_footer
      %s41 = sadd.s32 1, %s37
    $region7: #{tpu_custom_call.1} parent=1 // loop_footer_branch
      %36 = sbr.rel target = $region3
    $region8: #{tpu_custom_call.1} parent=1 // loop_exit
      _
    %2694 = vsyncpa [#allocation5], 1
    %s2695 = scalar_lea.sflag [#allocation5], 1
    %2696 = vsyncpa %s2695, 1
    %2697 = vsyncpa [#allocation8], 1
    %s2698 = scalar_lea.sflag [#allocation8], 1
    %2699 = vsyncpa %s2698, 1
    %2700 = vsyncpa [#allocation11], 1
    %2701 = vsyncpa [#allocation14], 1
    %2702 = vsyncpa [#allocation17], 1
    %2703 = vsyncpa [#allocation6], 1
    %s2704 = scalar_lea.sflag [#allocation6], 1
    %2705 = vsyncpa %s2704, 1

</llo_original>
